<compile_context>
chip_gen: v7x
topology: tpu7x:2x2x1
jax: 0.10.0
libtpu: 0.0.40
codegen_flags: <defaults>
</compile_context>

<pallas_src>
import functools
import math

import jax
import jax.numpy as jnp
from jax.experimental import pallas as pl
from jax.experimental.pallas import tpu as pltpu


# ----------------------------- in-kernel math ------------------------------

def _layernorm(x, w, b, eps=1e-5):
    mu = jnp.mean(x, axis=-1, keepdims=True)
    xc = x - mu
    var = jnp.mean(xc * xc, axis=-1, keepdims=True)
    return xc * jax.lax.rsqrt(var + eps) * w + b


def _gelu(x):
    # exact (erf) GELU, matching torch.nn.GELU() / activation='gelu'
    return 0.5 * x * (1.0 + jax.lax.erf(x * (1.0 / math.sqrt(2.0))))


def _softmax(x):
    m = jnp.max(x, axis=-1, keepdims=True)
    e = jnp.exp(x - m)
    # EUP approx reciprocal instead of a VPU divide.
    return e * pl.reciprocal(jnp.sum(e, axis=-1, keepdims=True), approx=True)


# ------------------------------- fused kernel -------------------------------

def fused_kernel(x_ref, pos_ref,
                 ln1w, ln1b, wqkv, bqkv, wo, bo,
                 ln2w, ln2b, w1, b1, w2, b2,
                 lnfw, lnfb, wc1, bc1, lncw, lncb, wc2, bc2,
                 o_ref, x_scr, *, nhead, d_model, bt, seq):
    """One (batch_tile, layer) grid step: one pre-LN encoder layer on the
    resident (Bt*S, D) activation; pos-add at layer 0; final-LN + classifier
    head at the last layer step."""
    l = pl.program_id(1)
    H = nhead
    dh = d_model // H
    M = bt * seq
    scale = 1.0 / math.sqrt(dh)

    # ---- layer 0: load input tile once, add learned positional table ----
    @pl.when(l == 0)
    def _():
        # (Bt, S, D) + (S, D) broadcast, then flatten batch*seq into M.
        x_scr[...] = (x_ref[...] + pos_ref[...]).reshape(M, d_model)

    x = x_scr[...]                                            # (M, D) f32

    # ---- self-attention block: x = x + MHA(LN1(x)) ----
    h = _layernorm(x, ln1w[...], ln1b[...]).astype(jnp.bfloat16)
    # Fused QKV: one weight-stationary MXU pass, one DMA stream per layer.
    qkv = jnp.dot(h, wqkv[...], preferred_element_type=jnp.float32) + bqkv[...]

    def split_heads(off):
        # (M, dh) lane slices -> (H*Bt, S, dh), grouping (head, batch) so the
        # attention einsums keep a single batch axis and never mix batch rows.
        parts = [qkv[:, off + i * dh: off + (i + 1) * dh].reshape(bt, seq, dh)
                 for i in range(H)]
        return jnp.stack(parts, axis=0).reshape(H * bt, seq, dh)

    q3 = split_heads(0).astype(jnp.bfloat16)                  # (G, S, dh)
    k3 = split_heads(d_model).astype(jnp.bfloat16)
    v3 = split_heads(2 * d_model).astype(jnp.bfloat16)

    s = jnp.einsum("gqd,gkd->gqk", q3, k3,
                   preferred_element_type=jnp.float32) * scale     # (G, S, S)
    p = _softmax(s).astype(jnp.bfloat16)
    o3 = jnp.einsum("gqk,gkd->gqd", p, v3,
                    preferred_element_type=jnp.float32)            # (G, S, dh)

    # Concat heads as a value (no VMEM scratch round-trip), one K=D matmul.
    cat = jnp.concatenate(
        [o3[i * bt:(i + 1) * bt].reshape(M, dh) for i in range(H)],
        axis=-1).astype(jnp.bfloat16)                              # (M, D)
    attn = jnp.dot(cat, wo[...], preferred_element_type=jnp.float32) + bo[...]
    x = x + attn

    # ---- feed-forward block: x = x + FFN(LN2(x)) ----
    h2 = _layernorm(x, ln2w[...], ln2b[...]).astype(jnp.bfloat16)
    ff = jnp.dot(h2, w1[...], preferred_element_type=jnp.float32) + b1[...]
    ff = _gelu(ff).astype(jnp.bfloat16)
    ff = jnp.dot(ff, w2[...], preferred_element_type=jnp.float32) + b2[...]
    x = x + ff
    x_scr[...] = x                                            # stays in VMEM

    # ---- final encoder LayerNorm + classifier head on the last layer ----
    @pl.when(l == pl.num_programs(1) - 1)
    def _():
        xf = _layernorm(x, lnfw[...], lnfb[...]).astype(jnp.bfloat16)
        hc = jnp.dot(xf, wc1[...], preferred_element_type=jnp.float32) + bc1[...]
        hc = _gelu(hc)
        hc = _layernorm(hc, lncw[...], lncb[...]).astype(jnp.bfloat16)
        # Linear(D/2 -> 1) computed as (1, D/2) x (M, D/2)^T -> (1, M):
        # M lands on the lane axis, no lane-width-1 matmul/store.
        logits = jax.lax.dot_general(wc2[...], hc, (((1,), (1,)), ((), ())),
                                     preferred_element_type=jnp.float32)
        o_ref[...] = logits + bc2[...]


# ------------------------------ wrapper --------------------------------------

_LAYER_NAMES = ("ln1w", "ln1b", "wqkv", "bqkv", "wo", "bo",
                "ln2w", "ln2b", "w1", "b1", "w2", "b2")
_HEAD_NAMES = ("lnfw", "lnfb", "wc1", "bc1", "lncw", "lncb", "wc2", "bc2")


def _vmem_limit_bytes(bt, S, D, H):
    """Rough VMEM need (double-buffered bf16 layer weights + live activations),
    with 2x headroom, clamped to [32 MiB, 100 MiB]."""
    M = bt * S
    layer_w = 2 * (3 * D * D + D * D + 4 * D * D + 4 * D * D)   # bf16 bytes
    acts = 4 * M * D * 3 + 4 * M * 4 * D
    scores = (4 + 2) * bt * H * S * S
    head_w = 2 * (D * (D // 2) + (D // 2)) + 4 * 4 * D
    need = 2 * layer_w + acts + scores + head_w + (1 << 20)
    return int(min(100 * 2 ** 20, max(2 * need, 32 * 2 ** 20)))


def forward(x, params, *, nhead, batch_tile=2):
    B, S, D = x.shape
    L = int(params["wqkv"].shape[0])
    pos = params["pos_emb"][:S]                               # (S, D) f32

    Bt = min(batch_tile, B)
    nbt = -(-B // Bt)
    Bp = nbt * Bt
    if Bp != B:                                               # pad ragged batch
        x = jnp.pad(x, ((0, Bp - B), (0, 0), (0, 0)))
    M = Bt * S

    def per_layer(arr):
        tail = tuple(arr.shape[1:])
        n = len(tail)
        return pl.BlockSpec((None,) + tail,
                            lambda b, l, _n=n: (l,) + (0,) * _n)

    def const(arr):
        n = arr.ndim
        return pl.BlockSpec(arr.shape, lambda b, l, _n=n: (0,) * _n)

    layer_args = [params[n] for n in _LAYER_NAMES]
    head_args = [params[n] for n in _HEAD_NAMES]

    x_spec = pl.BlockSpec((Bt, S, D), lambda b, l: (b, 0, 0))
    out_spec = pl.BlockSpec((None, 1, M), lambda b, l: (b, 0, 0))

    in_specs = ([x_spec, const(pos)]
                + [per_layer(a) for a in layer_args]
                + [const(a) for a in head_args])

    kern = functools.partial(fused_kernel, nhead=nhead, d_model=D, bt=Bt, seq=S)
    out = pl.pallas_call(
        kern,
        out_shape=jax.ShapeDtypeStruct((nbt, 1, M), jnp.float32),
        grid=(nbt, L),
        in_specs=in_specs,
        out_specs=out_spec,
        scratch_shapes=[pltpu.VMEM((M, D), jnp.float32)],     # resident activation
        compiler_params=pltpu.CompilerParams(
            dimension_semantics=("parallel", "arbitrary"),
            vmem_limit_bytes=_vmem_limit_bytes(Bt, S, D, nhead),
        ),
    )(x, pos, *layer_args, *head_args)
    return out[:, 0, :].reshape(Bp, S)[:B]                    # (B, S)


# --------------------------- parameter init ---------------------------------

def _linear_init(key, fan_in, fan_out, w_dtype=jnp.bfloat16):
    kw, kb = jax.random.split(key)
    bound = 1.0 / math.sqrt(fan_in)
    w = jax.random.uniform(kw, (fan_in, fan_out), jnp.float32, -bound, bound)
    b = jax.random.uniform(kb, (1, fan_out), jnp.float32, -bound, bound)
    return w.astype(w_dtype), b                               # weight bf16, bias f32


def init_params(key, d_model, num_layers, max_seq_len):
    D, H2, L = d_model, d_model // 2, num_layers
    keys = iter(jax.random.split(key, 4 * num_layers + 4))

    pos_emb = jax.random.normal(next(keys), (max_seq_len, D), jnp.float32)

    acc = {n: [] for n in ("wqkv", "bqkv", "wo", "bo", "w1", "b1", "w2", "b2")}
    for _ in range(L):
        for name, (fi, fo) in (("wqkv", (D, 3 * D)), ("wo", (D, D)),
                               ("w1", (D, 4 * D)), ("w2", (4 * D, D))):
            w, b = _linear_init(next(keys), fi, fo)
            acc[name].append(w)
            acc["b" + name[1:]].append(b)

    params = {"pos_emb": pos_emb}
    for n, vs in acc.items():
        params[n] = jnp.stack(vs, axis=0)     # weights (L,fi,fo) bf16, biases (L,1,fo) f32
    params["ln1w"] = jnp.ones((L, 1, D), jnp.float32)
    params["ln1b"] = jnp.zeros((L, 1, D), jnp.float32)
    params["ln2w"] = jnp.ones((L, 1, D), jnp.float32)
    params["ln2b"] = jnp.zeros((L, 1, D), jnp.float32)

    wc1, bc1 = _linear_init(next(keys), D, H2)
    wc2_t, bc2 = _linear_init(next(keys), H2, 1)
    params.update({
        "lnfw": jnp.ones((1, D), jnp.float32), "lnfb": jnp.zeros((1, D), jnp.float32),
        "wc1": wc1, "bc1": bc1,
        "lncw": jnp.ones((1, H2), jnp.float32), "lncb": jnp.zeros((1, H2), jnp.float32),
        "wc2": wc2_t.T,                        # (1, D//2) bf16
        "bc2": bc2,                            # (1, 1) f32
    })
    return params


# --------------------------------- main --------------------------------------

if __name__ == "__main__":
    B, S, D, NHEAD, NLAYERS = 4, 8, 32, 4, 2
    MAX_SEQ_LEN = 16
    BATCH_TILE = 2          # -> 2 parallel batch tiles (keeps both v7x TCs busy)

    key = jax.random.PRNGKey(0)
    kx, kp = jax.random.split(key)
    x = jax.random.normal(kx, (B, S, D), dtype=jnp.float32)
    params = init_params(kp, D, NLAYERS, MAX_SEQ_LEN)

    fwd = jax.jit(functools.partial(forward, nhead=NHEAD, batch_tile=BATCH_TILE))
    out = jax.block_until_ready(fwd(x, params))

    assert out.shape == (B, S), out.shape
    assert out.dtype == jnp.float32
    assert bool(jnp.all(jnp.isfinite(out)))
    print("KERNEL_OK")
</pallas_src>

<mosaic_0001>
module attributes {stable_mosaic.version = 11 : i64} {
  func.func @fused_kernel(%arg0: i32, %arg1: i32, %arg2: memref<2x8x32xf32, #tpu.memory_space<vmem>>, %arg3: memref<8x32xf32, #tpu.memory_space<vmem>>, %arg4: memref<1x1x32xf32, #tpu.memory_space<vmem>>, %arg5: memref<1x1x32xf32, #tpu.memory_space<vmem>>, %arg6: memref<1x32x96xbf16, #tpu.memory_space<vmem>>, %arg7: memref<1x1x96xf32, #tpu.memory_space<vmem>>, %arg8: memref<1x32x32xbf16, #tpu.memory_space<vmem>>, %arg9: memref<1x1x32xf32, #tpu.memory_space<vmem>>, %arg10: memref<1x1x32xf32, #tpu.memory_space<vmem>>, %arg11: memref<1x1x32xf32, #tpu.memory_space<vmem>>, %arg12: memref<1x32x128xbf16, #tpu.memory_space<vmem>>, %arg13: memref<1x1x128xf32, #tpu.memory_space<vmem>>, %arg14: memref<1x128x32xbf16, #tpu.memory_space<vmem>>, %arg15: memref<1x1x32xf32, #tpu.memory_space<vmem>>, %arg16: memref<1x32xf32, #tpu.memory_space<vmem>>, %arg17: memref<1x32xf32, #tpu.memory_space<vmem>>, %arg18: memref<32x16xbf16, #tpu.memory_space<vmem>>, %arg19: memref<1x16xf32, #tpu.memory_space<vmem>>, %arg20: memref<1x16xf32, #tpu.memory_space<vmem>>, %arg21: memref<1x16xf32, #tpu.memory_space<vmem>>, %arg22: memref<1x16xbf16, #tpu.memory_space<vmem>>, %arg23: memref<1x1xf32, #tpu.memory_space<vmem>>, %arg24: memref<1x1x16xf32, #tpu.memory_space<vmem>>, %arg25: memref<16x32xf32, #tpu.memory_space<vmem>>) attributes {dimension_semantics = [#tpu.dimension_semantics<parallel>, #tpu.dimension_semantics<arbitrary>], iteration_bounds = array<i64: 2, 2>, scalar_prefetch = 0 : i64, scratch_operands = 1 : i64, tpu.core_type = #tpu.core_type<tc>, window_params = [{transform_indices = @transform_0, window_bounds = array<i64: 2, 8, 32>}, {pipeline_mode = #tpu.pipeline_mode<synchronous>, transform_indices = @transform_1, window_bounds = array<i64: 8, 32>}, {transform_indices = @transform_2, window_bounds = array<i64: 1, 1, 32>}, {transform_indices = @transform_3, window_bounds = array<i64: 1, 1, 32>}, {transform_indices = @transform_4, window_bounds = array<i64: 1, 32, 96>}, {transform_indices = @transform_5, window_bounds = array<i64: 1, 1, 96>}, {transform_indices = @transform_6, window_bounds = array<i64: 1, 32, 32>}, {transform_indices = @transform_7, window_bounds = array<i64: 1, 1, 32>}, {transform_indices = @transform_8, window_bounds = array<i64: 1, 1, 32>}, {transform_indices = @transform_9, window_bounds = array<i64: 1, 1, 32>}, {transform_indices = @transform_10, window_bounds = array<i64: 1, 32, 128>}, {transform_indices = @transform_11, window_bounds = array<i64: 1, 1, 128>}, {transform_indices = @transform_12, window_bounds = array<i64: 1, 128, 32>}, {transform_indices = @transform_13, window_bounds = array<i64: 1, 1, 32>}, {pipeline_mode = #tpu.pipeline_mode<synchronous>, transform_indices = @transform_14, window_bounds = array<i64: 1, 32>}, {pipeline_mode = #tpu.pipeline_mode<synchronous>, transform_indices = @transform_15, window_bounds = array<i64: 1, 32>}, {pipeline_mode = #tpu.pipeline_mode<synchronous>, transform_indices = @transform_16, window_bounds = array<i64: 32, 16>}, {pipeline_mode = #tpu.pipeline_mode<synchronous>, transform_indices = @transform_17, window_bounds = array<i64: 1, 16>}, {pipeline_mode = #tpu.pipeline_mode<synchronous>, transform_indices = @transform_18, window_bounds = array<i64: 1, 16>}, {pipeline_mode = #tpu.pipeline_mode<synchronous>, transform_indices = @transform_19, window_bounds = array<i64: 1, 16>}, {pipeline_mode = #tpu.pipeline_mode<synchronous>, transform_indices = @transform_20, window_bounds = array<i64: 1, 16>}, {pipeline_mode = #tpu.pipeline_mode<synchronous>, transform_indices = @transform_21, window_bounds = array<i64: 1, 1>}, {transform_indices = @transform_22, window_bounds = array<i64: 1, 1, 16>}]} {
    %c0_i32 = arith.constant 0 : i32
    %0 = arith.cmpi eq, %arg1, %c0_i32 : i32
    %1 = arith.extui %0 : i1 to i32
    %c0_i32_0 = arith.constant 0 : i32
    %2 = arith.cmpi ne, %1, %c0_i32_0 : i32
    scf.if %2 {
      %c0_62 = arith.constant 0 : index
      %c0_63 = arith.constant 0 : index
      %c0_64 = arith.constant 0 : index
      %167 = vector.load %arg2[%c0_62, %c0_63, %c0_64] : memref<2x8x32xf32, #tpu.memory_space<vmem>>, vector<2x8x32xf32>
      %c0_65 = arith.constant 0 : index
      %c0_66 = arith.constant 0 : index
      %168 = vector.load %arg3[%c0_65, %c0_66] : memref<8x32xf32, #tpu.memory_space<vmem>>, vector<8x32xf32>
      %169 = vector.shape_cast %168 : vector<8x32xf32> to vector<1x8x32xf32>
      %170 = vector.broadcast %169 : vector<1x8x32xf32> to vector<2x8x32xf32>
      %171 = arith.addf %167, %170 : vector<2x8x32xf32>
      %172 = vector.shape_cast %171 : vector<2x8x32xf32> to vector<16x32xf32>
      %c0_67 = arith.constant 0 : index
      %c0_68 = arith.constant 0 : index
      %173 = vector.load %arg25[%c0_67, %c0_68] : memref<16x32xf32, #tpu.memory_space<vmem>>, vector<16x32xf32>
      tpu.vector_store %arg25[%c0_67, %c0_68], %172 {strides = array<i32>} : memref<16x32xf32, #tpu.memory_space<vmem>>, vector<16x32xf32>,
    } else {
    }
    %c0 = arith.constant 0 : index
    %c0_1 = arith.constant 0 : index
    %3 = vector.load %arg25[%c0, %c0_1] : memref<16x32xf32, #tpu.memory_space<vmem>>, vector<16x32xf32>
    %c0_2 = arith.constant 0 : index
    %c0_3 = arith.constant 0 : index
    %c0_4 = arith.constant 0 : index
    %4 = vector.load %arg4[%c0_2, %c0_3, %c0_4] : memref<1x1x32xf32, #tpu.memory_space<vmem>>, vector<1x1x32xf32>
    %5 = vector.shape_cast %4 : vector<1x1x32xf32> to vector<1x32xf32>
    %c0_5 = arith.constant 0 : index
    %c0_6 = arith.constant 0 : index
    %c0_7 = arith.constant 0 : index
    %6 = vector.load %arg5[%c0_5, %c0_6, %c0_7] : memref<1x1x32xf32, #tpu.memory_space<vmem>>, vector<1x1x32xf32>
    %7 = vector.shape_cast %6 : vector<1x1x32xf32> to vector<1x32xf32>
    %cst = arith.constant dense<0.000000e+00> : vector<16xf32>
    %8 = vector.multi_reduction <add>, %3, %cst [1] : vector<16x32xf32> to vector<16xf32>
    %9 = vector.shape_cast %8 : vector<16xf32> to vector<16x1xf32>
    %cst_8 = arith.constant 3.200000e+01 : f32
    %10 = vector.broadcast %cst_8 : f32 to vector<16x1xf32>
    %11 = arith.divf %9, %10 : vector<16x1xf32>
    %12 = vector.broadcast %11 : vector<16x1xf32> to vector<16x32xf32>
    %13 = arith.subf %3, %12 : vector<16x32xf32>
    %14 = arith.mulf %13, %13 : vector<16x32xf32>
    %cst_9 = arith.constant dense<0.000000e+00> : vector<16xf32>
    %15 = vector.multi_reduction <add>, %14, %cst_9 [1] : vector<16x32xf32> to vector<16xf32>
    %16 = vector.shape_cast %15 : vector<16xf32> to vector<16x1xf32>
    %cst_10 = arith.constant 3.200000e+01 : f32
    %17 = vector.broadcast %cst_10 : f32 to vector<16x1xf32>
    %18 = arith.divf %16, %17 : vector<16x1xf32>
    %cst_11 = arith.constant 9.99999974E-6 : f32
    %19 = vector.broadcast %cst_11 : f32 to vector<16x1xf32>
    %20 = arith.addf %18, %19 : vector<16x1xf32>
    %21 = math.rsqrt %20 : vector<16x1xf32>
    %22 = vector.broadcast %21 : vector<16x1xf32> to vector<16x32xf32>
    %23 = arith.mulf %13, %22 : vector<16x32xf32>
    %24 = vector.broadcast %5 : vector<1x32xf32> to vector<16x32xf32>
    %25 = arith.mulf %23, %24 : vector<16x32xf32>
    %26 = vector.broadcast %7 : vector<1x32xf32> to vector<16x32xf32>
    %27 = arith.addf %25, %26 : vector<16x32xf32>
    %28 = arith.truncf %27 : vector<16x32xf32> to vector<16x32xbf16>
    %c0_12 = arith.constant 0 : index
    %c0_13 = arith.constant 0 : index
    %c0_14 = arith.constant 0 : index
    %29 = vector.load %arg6[%c0_12, %c0_13, %c0_14] : memref<1x32x96xbf16, #tpu.memory_space<vmem>>, vector<1x32x96xbf16>
    %30 = vector.shape_cast %29 : vector<1x32x96xbf16> to vector<32x96xbf16>
    %cst_15 = arith.constant dense<0.000000e+00> : vector<16x96xf32>
    %31 = tpu.matmul %28, %30, %cst_15 {dimension_numbers = #tpu.dot_dimension_numbers<[1], [0], [0], [1], [0, 0, 1, 1], [], []>} : vector<16x32xbf16>, vector<32x96xbf16>, vector<16x96xf32> -> vector<16x96xf32>
    %c0_16 = arith.constant 0 : index
    %c0_17 = arith.constant 0 : index
    %c0_18 = arith.constant 0 : index
    %32 = vector.load %arg7[%c0_16, %c0_17, %c0_18] : memref<1x1x96xf32, #tpu.memory_space<vmem>>, vector<1x1x96xf32>
    %33 = vector.shape_cast %32 : vector<1x1x96xf32> to vector<1x96xf32>
    %34 = vector.broadcast %33 : vector<1x96xf32> to vector<16x96xf32>
    %35 = arith.addf %31, %34 : vector<16x96xf32>
    %36 = vector.extract_strided_slice %35 {offsets = [0, 0], sizes = [16, 8], strides = [1, 1]} : vector<16x96xf32> to vector<16x8xf32>
    %37 = vector.shape_cast %36 : vector<16x8xf32> to vector<2x8x8xf32>
    %38 = vector.extract_strided_slice %35 {offsets = [0, 8], sizes = [16, 8], strides = [1, 1]} : vector<16x96xf32> to vector<16x8xf32>
    %39 = vector.shape_cast %38 : vector<16x8xf32> to vector<2x8x8xf32>
    %40 = vector.extract_strided_slice %35 {offsets = [0, 16], sizes = [16, 8], strides = [1, 1]} : vector<16x96xf32> to vector<16x8xf32>
    %41 = vector.shape_cast %40 : vector<16x8xf32> to vector<2x8x8xf32>
    %42 = vector.extract_strided_slice %35 {offsets = [0, 24], sizes = [16, 8], strides = [1, 1]} : vector<16x96xf32> to vector<16x8xf32>
    %43 = vector.shape_cast %42 : vector<16x8xf32> to vector<2x8x8xf32>
    %44 = vector.shape_cast %37 : vector<2x8x8xf32> to vector<1x2x8x8xf32>
    %45 = vector.shape_cast %39 : vector<2x8x8xf32> to vector<1x2x8x8xf32>
    %46 = vector.shape_cast %41 : vector<2x8x8xf32> to vector<1x2x8x8xf32>
    %47 = vector.shape_cast %43 : vector<2x8x8xf32> to vector<1x2x8x8xf32>
    %48 = tpu.concatenate %44, %45, %46, %47 in 0 : vector<1x2x8x8xf32>, vector<1x2x8x8xf32>, vector<1x2x8x8xf32>, vector<1x2x8x8xf32> -> vector<4x2x8x8xf32>
    %49 = vector.shape_cast %48 : vector<4x2x8x8xf32> to vector<8x8x8xf32>
    %50 = arith.truncf %49 : vector<8x8x8xf32> to vector<8x8x8xbf16>
    %51 = vector.extract_strided_slice %35 {offsets = [0, 32], sizes = [16, 8], strides = [1, 1]} : vector<16x96xf32> to vector<16x8xf32>
    %52 = vector.shape_cast %51 : vector<16x8xf32> to vector<2x8x8xf32>
    %53 = vector.extract_strided_slice %35 {offsets = [0, 40], sizes = [16, 8], strides = [1, 1]} : vector<16x96xf32> to vector<16x8xf32>
    %54 = vector.shape_cast %53 : vector<16x8xf32> to vector<2x8x8xf32>
    %55 = vector.extract_strided_slice %35 {offsets = [0, 48], sizes = [16, 8], strides = [1, 1]} : vector<16x96xf32> to vector<16x8xf32>
    %56 = vector.shape_cast %55 : vector<16x8xf32> to vector<2x8x8xf32>
    %57 = vector.extract_strided_slice %35 {offsets = [0, 56], sizes = [16, 8], strides = [1, 1]} : vector<16x96xf32> to vector<16x8xf32>
    %58 = vector.shape_cast %57 : vector<16x8xf32> to vector<2x8x8xf32>
    %59 = vector.shape_cast %52 : vector<2x8x8xf32> to vector<1x2x8x8xf32>
    %60 = vector.shape_cast %54 : vector<2x8x8xf32> to vector<1x2x8x8xf32>
    %61 = vector.shape_cast %56 : vector<2x8x8xf32> to vector<1x2x8x8xf32>
    %62 = vector.shape_cast %58 : vector<2x8x8xf32> to vector<1x2x8x8xf32>
    %63 = tpu.concatenate %59, %60, %61, %62 in 0 : vector<1x2x8x8xf32>, vector<1x2x8x8xf32>, vector<1x2x8x8xf32>, vector<1x2x8x8xf32> -> vector<4x2x8x8xf32>
    %64 = vector.shape_cast %63 : vector<4x2x8x8xf32> to vector<8x8x8xf32>
    %65 = arith.truncf %64 : vector<8x8x8xf32> to vector<8x8x8xbf16>
    %66 = vector.extract_strided_slice %35 {offsets = [0, 64], sizes = [16, 8], strides = [1, 1]} : vector<16x96xf32> to vector<16x8xf32>
    %67 = vector.shape_cast %66 : vector<16x8xf32> to vector<2x8x8xf32>
    %68 = vector.extract_strided_slice %35 {offsets = [0, 72], sizes = [16, 8], strides = [1, 1]} : vector<16x96xf32> to vector<16x8xf32>
    %69 = vector.shape_cast %68 : vector<16x8xf32> to vector<2x8x8xf32>
    %70 = vector.extract_strided_slice %35 {offsets = [0, 80], sizes = [16, 8], strides = [1, 1]} : vector<16x96xf32> to vector<16x8xf32>
    %71 = vector.shape_cast %70 : vector<16x8xf32> to vector<2x8x8xf32>
    %72 = vector.extract_strided_slice %35 {offsets = [0, 88], sizes = [16, 8], strides = [1, 1]} : vector<16x96xf32> to vector<16x8xf32>
    %73 = vector.shape_cast %72 : vector<16x8xf32> to vector<2x8x8xf32>
    %74 = vector.shape_cast %67 : vector<2x8x8xf32> to vector<1x2x8x8xf32>
    %75 = vector.shape_cast %69 : vector<2x8x8xf32> to vector<1x2x8x8xf32>
    %76 = vector.shape_cast %71 : vector<2x8x8xf32> to vector<1x2x8x8xf32>
    %77 = vector.shape_cast %73 : vector<2x8x8xf32> to vector<1x2x8x8xf32>
    %78 = tpu.concatenate %74, %75, %76, %77 in 0 : vector<1x2x8x8xf32>, vector<1x2x8x8xf32>, vector<1x2x8x8xf32>, vector<1x2x8x8xf32> -> vector<4x2x8x8xf32>
    %79 = vector.shape_cast %78 : vector<4x2x8x8xf32> to vector<8x8x8xf32>
    %80 = arith.truncf %79 : vector<8x8x8xf32> to vector<8x8x8xbf16>
    "tpu.trace_start"() <{level = 10 : i32, message = "gqd,gkd->gqk"}> : () -> ()
    %cst_19 = arith.constant dense<0.000000e+00> : vector<8x8x8xf32>
    %81 = tpu.matmul %50, %65, %cst_19 {dimension_numbers = #tpu.dot_dimension_numbers<[2], [2], [1], [1], [0, 0, 0, 1, 1, 1], [0], [0]>} : vector<8x8x8xbf16>, vector<8x8x8xbf16>, vector<8x8x8xf32> -> vector<8x8x8xf32>
    "tpu.trace_stop"() : () -> ()
    %cst_20 = arith.constant 0.353553385 : f32
    %82 = vector.broadcast %cst_20 : f32 to vector<8x8x8xf32>
    %83 = arith.mulf %81, %82 : vector<8x8x8xf32>
    %cst_21 = arith.constant dense<0xFF800000> : vector<8x8xf32>
    %84 = vector.multi_reduction <maximumf>, %83, %cst_21 [2] : vector<8x8x8xf32> to vector<8x8xf32>
    %85 = vector.shape_cast %84 : vector<8x8xf32> to vector<8x8x1xf32>
    %86 = vector.broadcast %85 : vector<8x8x1xf32> to vector<8x8x8xf32>
    %87 = arith.subf %83, %86 : vector<8x8x8xf32>
    %88 = math.exp %87 : vector<8x8x8xf32>
    %cst_22 = arith.constant dense<0.000000e+00> : vector<8x8xf32>
    %89 = vector.multi_reduction <add>, %88, %cst_22 [2] : vector<8x8x8xf32> to vector<8x8xf32>
    %90 = vector.shape_cast %89 : vector<8x8xf32> to vector<8x8x1xf32>
    %91 = tpu.reciprocal %90 {approx = true} : vector<8x8x1xf32> -> vector<8x8x1xf32>
    %92 = vector.broadcast %91 : vector<8x8x1xf32> to vector<8x8x8xf32>
    %93 = arith.mulf %88, %92 : vector<8x8x8xf32>
    %94 = arith.truncf %93 : vector<8x8x8xf32> to vector<8x8x8xbf16>
    "tpu.trace_start"() <{level = 10 : i32, message = "gqk,gkd->gqd"}> : () -> ()
    %cst_23 = arith.constant dense<0.000000e+00> : vector<8x8x8xf32>
    %95 = tpu.matmul %94, %80, %cst_23 {dimension_numbers = #tpu.dot_dimension_numbers<[2], [1], [1], [2], [0, 0, 0, 1, 1, 2], [0], [0]>} : vector<8x8x8xbf16>, vector<8x8x8xbf16>, vector<8x8x8xf32> -> vector<8x8x8xf32>
    "tpu.trace_stop"() : () -> ()
    %96 = vector.extract_strided_slice %95 {offsets = [0, 0, 0], sizes = [2, 8, 8], strides = [1, 1, 1]} : vector<8x8x8xf32> to vector<2x8x8xf32>
    %97 = vector.shape_cast %96 : vector<2x8x8xf32> to vector<16x8xf32>
    %98 = vector.extract_strided_slice %95 {offsets = [2, 0, 0], sizes = [2, 8, 8], strides = [1, 1, 1]} : vector<8x8x8xf32> to vector<2x8x8xf32>
    %99 = vector.shape_cast %98 : vector<2x8x8xf32> to vector<16x8xf32>
    %100 = vector.extract_strided_slice %95 {offsets = [4, 0, 0], sizes = [2, 8, 8], strides = [1, 1, 1]} : vector<8x8x8xf32> to vector<2x8x8xf32>
    %101 = vector.shape_cast %100 : vector<2x8x8xf32> to vector<16x8xf32>
    %102 = vector.extract_strided_slice %95 {offsets = [6, 0, 0], sizes = [2, 8, 8], strides = [1, 1, 1]} : vector<8x8x8xf32> to vector<2x8x8xf32>
    %103 = vector.shape_cast %102 : vector<2x8x8xf32> to vector<16x8xf32>
    %104 = tpu.concatenate %97, %99, %101, %103 in 1 : vector<16x8xf32>, vector<16x8xf32>, vector<16x8xf32>, vector<16x8xf32> -> vector<16x32xf32>
    %105 = arith.truncf %104 : vector<16x32xf32> to vector<16x32xbf16>
    %c0_24 = arith.constant 0 : index
    %c0_25 = arith.constant 0 : index
    %c0_26 = arith.constant 0 : index
    %106 = vector.load %arg8[%c0_24, %c0_25, %c0_26] : memref<1x32x32xbf16, #tpu.memory_space<vmem>>, vector<1x32x32xbf16>
    %107 = vector.shape_cast %106 : vector<1x32x32xbf16> to vector<32x32xbf16>
    %cst_27 = arith.constant dense<0.000000e+00> : vector<16x32xf32>
    %108 = tpu.matmul %105, %107, %cst_27 {dimension_numbers = #tpu.dot_dimension_numbers<[1], [0], [0], [1], [0, 0, 1, 1], [], []>} : vector<16x32xbf16>, vector<32x32xbf16>, vector<16x32xf32> -> vector<16x32xf32>
    %c0_28 = arith.constant 0 : index
    %c0_29 = arith.constant 0 : index
    %c0_30 = arith.constant 0 : index
    %109 = vector.load %arg9[%c0_28, %c0_29, %c0_30] : memref<1x1x32xf32, #tpu.memory_space<vmem>>, vector<1x1x32xf32>
    %110 = vector.shape_cast %109 : vector<1x1x32xf32> to vector<1x32xf32>
    %111 = vector.broadcast %110 : vector<1x32xf32> to vector<16x32xf32>
    %112 = arith.addf %108, %111 : vector<16x32xf32>
    %113 = arith.addf %3, %112 : vector<16x32xf32>
    %c0_31 = arith.constant 0 : index
    %c0_32 = arith.constant 0 : index
    %c0_33 = arith.constant 0 : index
    %114 = vector.load %arg10[%c0_31, %c0_32, %c0_33] : memref<1x1x32xf32, #tpu.memory_space<vmem>>, vector<1x1x32xf32>
    %115 = vector.shape_cast %114 : vector<1x1x32xf32> to vector<1x32xf32>
    %c0_34 = arith.constant 0 : index
    %c0_35 = arith.constant 0 : index
    %c0_36 = arith.constant 0 : index
    %116 = vector.load %arg11[%c0_34, %c0_35, %c0_36] : memref<1x1x32xf32, #tpu.memory_space<vmem>>, vector<1x1x32xf32>
    %117 = vector.shape_cast %116 : vector<1x1x32xf32> to vector<1x32xf32>
    %cst_37 = arith.constant dense<0.000000e+00> : vector<16xf32>
    %118 = vector.multi_reduction <add>, %113, %cst_37 [1] : vector<16x32xf32> to vector<16xf32>
    %119 = vector.shape_cast %118 : vector<16xf32> to vector<16x1xf32>
    %cst_38 = arith.constant 3.200000e+01 : f32
    %120 = vector.broadcast %cst_38 : f32 to vector<16x1xf32>
    %121 = arith.divf %119, %120 : vector<16x1xf32>
    %122 = vector.broadcast %121 : vector<16x1xf32> to vector<16x32xf32>
    %123 = arith.subf %113, %122 : vector<16x32xf32>
    %124 = arith.mulf %123, %123 : vector<16x32xf32>
    %cst_39 = arith.constant dense<0.000000e+00> : vector<16xf32>
    %125 = vector.multi_reduction <add>, %124, %cst_39 [1] : vector<16x32xf32> to vector<16xf32>
    %126 = vector.shape_cast %125 : vector<16xf32> to vector<16x1xf32>
    %cst_40 = arith.constant 3.200000e+01 : f32
    %127 = vector.broadcast %cst_40 : f32 to vector<16x1xf32>
    %128 = arith.divf %126, %127 : vector<16x1xf32>
    %cst_41 = arith.constant 9.99999974E-6 : f32
    %129 = vector.broadcast %cst_41 : f32 to vector<16x1xf32>
    %130 = arith.addf %128, %129 : vector<16x1xf32>
    %131 = math.rsqrt %130 : vector<16x1xf32>
    %132 = vector.broadcast %131 : vector<16x1xf32> to vector<16x32xf32>
    %133 = arith.mulf %123, %132 : vector<16x32xf32>
    %134 = vector.broadcast %115 : vector<1x32xf32> to vector<16x32xf32>
    %135 = arith.mulf %133, %134 : vector<16x32xf32>
    %136 = vector.broadcast %117 : vector<1x32xf32> to vector<16x32xf32>
    %137 = arith.addf %135, %136 : vector<16x32xf32>
    %138 = arith.truncf %137 : vector<16x32xf32> to vector<16x32xbf16>
    %c0_42 = arith.constant 0 : index
    %c0_43 = arith.constant 0 : index
    %c0_44 = arith.constant 0 : index
    %139 = vector.load %arg12[%c0_42, %c0_43, %c0_44] : memref<1x32x128xbf16, #tpu.memory_space<vmem>>, vector<1x32x128xbf16>
    %140 = vector.shape_cast %139 : vector<1x32x128xbf16> to vector<32x128xbf16>
    %cst_45 = arith.constant dense<0.000000e+00> : vector<16x128xf32>
    %141 = tpu.matmul %138, %140, %cst_45 {dimension_numbers = #tpu.dot_dimension_numbers<[1], [0], [0], [1], [0, 0, 1, 1], [], []>} : vector<16x32xbf16>, vector<32x128xbf16>, vector<16x128xf32> -> vector<16x128xf32>
    %c0_46 = arith.constant 0 : index
    %c0_47 = arith.constant 0 : index
    %c0_48 = arith.constant 0 : index
    %142 = vector.load %arg13[%c0_46, %c0_47, %c0_48] : memref<1x1x128xf32, #tpu.memory_space<vmem>>, vector<1x1x128xf32>
    %143 = vector.shape_cast %142 : vector<1x1x128xf32> to vector<1x128xf32>
    %144 = vector.broadcast %143 : vector<1x128xf32> to vector<16x128xf32>
    %145 = arith.addf %141, %144 : vector<16x128xf32>
    %cst_49 = arith.constant 5.000000e-01 : f32
    %146 = vector.broadcast %cst_49 : f32 to vector<16x128xf32>
    %147 = arith.mulf %146, %145 : vector<16x128xf32>
    %cst_50 = arith.constant 0.707106769 : f32
    %148 = vector.broadcast %cst_50 : f32 to vector<16x128xf32>
    %149 = arith.mulf %145, %148 : vector<16x128xf32>
    %150 = math.erf %149 : vector<16x128xf32>
    %cst_51 = arith.constant 1.000000e+00 : f32
    %151 = vector.broadcast %cst_51 : f32 to vector<16x128xf32>
    %152 = arith.addf %151, %150 : vector<16x128xf32>
    %153 = arith.mulf %147, %152 : vector<16x128xf32>
    %154 = arith.truncf %153 : vector<16x128xf32> to vector<16x128xbf16>
    %c0_52 = arith.constant 0 : index
    %c0_53 = arith.constant 0 : index
    %c0_54 = arith.constant 0 : index
    %155 = vector.load %arg14[%c0_52, %c0_53, %c0_54] : memref<1x128x32xbf16, #tpu.memory_space<vmem>>, vector<1x128x32xbf16>
    %156 = vector.shape_cast %155 : vector<1x128x32xbf16> to vector<128x32xbf16>
    %cst_55 = arith.constant dense<0.000000e+00> : vector<16x32xf32>
    %157 = tpu.matmul %154, %156, %cst_55 {dimension_numbers = #tpu.dot_dimension_numbers<[1], [0], [0], [1], [0, 0, 1, 1], [], []>} : vector<16x128xbf16>, vector<128x32xbf16>, vector<16x32xf32> -> vector<16x32xf32>
    %c0_56 = arith.constant 0 : index
    %c0_57 = arith.constant 0 : index
    %c0_58 = arith.constant 0 : index
    %158 = vector.load %arg15[%c0_56, %c0_57, %c0_58] : memref<1x1x32xf32, #tpu.memory_space<vmem>>, vector<1x1x32xf32>
    %159 = vector.shape_cast %158 : vector<1x1x32xf32> to vector<1x32xf32>
    %160 = vector.broadcast %159 : vector<1x32xf32> to vector<16x32xf32>
    %161 = arith.addf %157, %160 : vector<16x32xf32>
    %162 = arith.addf %113, %161 : vector<16x32xf32>
    %c0_59 = arith.constant 0 : index
    %c0_60 = arith.constant 0 : index
    %163 = vector.load %arg25[%c0_59, %c0_60] : memref<16x32xf32, #tpu.memory_space<vmem>>, vector<16x32xf32>
    tpu.vector_store %arg25[%c0_59, %c0_60], %162 {strides = array<i32>} : memref<16x32xf32, #tpu.memory_space<vmem>>, vector<16x32xf32>,
    %c1_i32 = arith.constant 1 : i32
    %164 = arith.cmpi eq, %arg1, %c1_i32 : i32
    %165 = arith.extui %164 : i1 to i32
    %c0_i32_61 = arith.constant 0 : i32
    %166 = arith.cmpi ne, %165, %c0_i32_61 : i32
    scf.if %166 {
      %c0_62 = arith.constant 0 : index
      %c0_63 = arith.constant 0 : index
      %167 = vector.load %arg16[%c0_62, %c0_63] : memref<1x32xf32, #tpu.memory_space<vmem>>, vector<1x32xf32>
      %c0_64 = arith.constant 0 : index
      %c0_65 = arith.constant 0 : index
      %168 = vector.load %arg17[%c0_64, %c0_65] : memref<1x32xf32, #tpu.memory_space<vmem>>, vector<1x32xf32>
      %cst_66 = arith.constant dense<0.000000e+00> : vector<16xf32>
      %169 = vector.multi_reduction <add>, %162, %cst_66 [1] : vector<16x32xf32> to vector<16xf32>
      %170 = vector.shape_cast %169 : vector<16xf32> to vector<16x1xf32>
      %cst_67 = arith.constant 3.200000e+01 : f32
      %171 = vector.broadcast %cst_67 : f32 to vector<16x1xf32>
      %172 = arith.divf %170, %171 : vector<16x1xf32>
      %173 = vector.broadcast %172 : vector<16x1xf32> to vector<16x32xf32>
      %174 = arith.subf %162, %173 : vector<16x32xf32>
      %175 = arith.mulf %174, %174 : vector<16x32xf32>
      %cst_68 = arith.constant dense<0.000000e+00> : vector<16xf32>
      %176 = vector.multi_reduction <add>, %175, %cst_68 [1] : vector<16x32xf32> to vector<16xf32>
      %177 = vector.shape_cast %176 : vector<16xf32> to vector<16x1xf32>
      %cst_69 = arith.constant 3.200000e+01 : f32
      %178 = vector.broadcast %cst_69 : f32 to vector<16x1xf32>
      %179 = arith.divf %177, %178 : vector<16x1xf32>
      %cst_70 = arith.constant 9.99999974E-6 : f32
      %180 = vector.broadcast %cst_70 : f32 to vector<16x1xf32>
      %181 = arith.addf %179, %180 : vector<16x1xf32>
      %182 = math.rsqrt %181 : vector<16x1xf32>
      %183 = vector.broadcast %182 : vector<16x1xf32> to vector<16x32xf32>
      %184 = arith.mulf %174, %183 : vector<16x32xf32>
      %185 = vector.broadcast %167 : vector<1x32xf32> to vector<16x32xf32>
      %186 = arith.mulf %184, %185 : vector<16x32xf32>
      %187 = vector.broadcast %168 : vector<1x32xf32> to vector<16x32xf32>
      %188 = arith.addf %186, %187 : vector<16x32xf32>
      %189 = arith.truncf %188 : vector<16x32xf32> to vector<16x32xbf16>
      %c0_71 = arith.constant 0 : index
      %c0_72 = arith.constant 0 : index
      %190 = vector.load %arg18[%c0_71, %c0_72] : memref<32x16xbf16, #tpu.memory_space<vmem>>, vector<32x16xbf16>
      %cst_73 = arith.constant dense<0.000000e+00> : vector<16x16xf32>
      %191 = tpu.matmul %189, %190, %cst_73 {dimension_numbers = #tpu.dot_dimension_numbers<[1], [0], [0], [1], [0, 0, 1, 1], [], []>} : vector<16x32xbf16>, vector<32x16xbf16>, vector<16x16xf32> -> vector<16x16xf32>
      %c0_74 = arith.constant 0 : index
      %c0_75 = arith.constant 0 : index
      %192 = vector.load %arg19[%c0_74, %c0_75] : memref<1x16xf32, #tpu.memory_space<vmem>>, vector<1x16xf32>
      %193 = vector.broadcast %192 : vector<1x16xf32> to vector<16x16xf32>
      %194 = arith.addf %191, %193 : vector<16x16xf32>
      %cst_76 = arith.constant 5.000000e-01 : f32
      %195 = vector.broadcast %cst_76 : f32 to vector<16x16xf32>
      %196 = arith.mulf %195, %194 : vector<16x16xf32>
      %cst_77 = arith.constant 0.707106769 : f32
      %197 = vector.broadcast %cst_77 : f32 to vector<16x16xf32>
      %198 = arith.mulf %194, %197 : vector<16x16xf32>
      %199 = math.erf %198 : vector<16x16xf32>
      %cst_78 = arith.constant 1.000000e+00 : f32
      %200 = vector.broadcast %cst_78 : f32 to vector<16x16xf32>
      %201 = arith.addf %200, %199 : vector<16x16xf32>
      %202 = arith.mulf %196, %201 : vector<16x16xf32>
      %c0_79 = arith.constant 0 : index
      %c0_80 = arith.constant 0 : index
      %203 = vector.load %arg20[%c0_79, %c0_80] : memref<1x16xf32, #tpu.memory_space<vmem>>, vector<1x16xf32>
      %c0_81 = arith.constant 0 : index
      %c0_82 = arith.constant 0 : index
      %204 = vector.load %arg21[%c0_81, %c0_82] : memref<1x16xf32, #tpu.memory_space<vmem>>, vector<1x16xf32>
      %cst_83 = arith.constant dense<0.000000e+00> : vector<16xf32>
      %205 = vector.multi_reduction <add>, %202, %cst_83 [1] : vector<16x16xf32> to vector<16xf32>
      %206 = vector.shape_cast %205 : vector<16xf32> to vector<16x1xf32>
      %cst_84 = arith.constant 1.600000e+01 : f32
      %207 = vector.broadcast %cst_84 : f32 to vector<16x1xf32>
      %208 = arith.divf %206, %207 : vector<16x1xf32>
      %209 = vector.broadcast %208 : vector<16x1xf32> to vector<16x16xf32>
      %210 = arith.subf %202, %209 : vector<16x16xf32>
      %211 = arith.mulf %210, %210 : vector<16x16xf32>
      %cst_85 = arith.constant dense<0.000000e+00> : vector<16xf32>
      %212 = vector.multi_reduction <add>, %211, %cst_85 [1] : vector<16x16xf32> to vector<16xf32>
      %213 = vector.shape_cast %212 : vector<16xf32> to vector<16x1xf32>
      %cst_86 = arith.constant 1.600000e+01 : f32
      %214 = vector.broadcast %cst_86 : f32 to vector<16x1xf32>
      %215 = arith.divf %213, %214 : vector<16x1xf32>
      %cst_87 = arith.constant 9.99999974E-6 : f32
      %216 = vector.broadcast %cst_87 : f32 to vector<16x1xf32>
      %217 = arith.addf %215, %216 : vector<16x1xf32>
      %218 = math.rsqrt %217 : vector<16x1xf32>
      %219 = vector.broadcast %218 : vector<16x1xf32> to vector<16x16xf32>
      %220 = arith.mulf %210, %219 : vector<16x16xf32>
      %221 = vector.broadcast %203 : vector<1x16xf32> to vector<16x16xf32>
      %222 = arith.mulf %220, %221 : vector<16x16xf32>
      %223 = vector.broadcast %204 : vector<1x16xf32> to vector<16x16xf32>
      %224 = arith.addf %222, %223 : vector<16x16xf32>
      %225 = arith.truncf %224 : vector<16x16xf32> to vector<16x16xbf16>
      %c0_88 = arith.constant 0 : index
      %c0_89 = arith.constant 0 : index
      %226 = vector.load %arg22[%c0_88, %c0_89] : memref<1x16xbf16, #tpu.memory_space<vmem>>, vector<1x16xbf16>
      %cst_90 = arith.constant dense<0.000000e+00> : vector<1x16xf32>
      %227 = tpu.matmul %226, %225, %cst_90 {dimension_numbers = #tpu.dot_dimension_numbers<[1], [1], [0], [0], [0, 0, 1, 0], [], []>} : vector<1x16xbf16>, vector<16x16xbf16>, vector<1x16xf32> -> vector<1x16xf32>
      %c0_91 = arith.constant 0 : index
      %c0_92 = arith.constant 0 : index
      %228 = vector.load %arg23[%c0_91, %c0_92] : memref<1x1xf32, #tpu.memory_space<vmem>>, vector<1x1xf32>
      %229 = vector.broadcast %228 : vector<1x1xf32> to vector<1x16xf32>
      %230 = arith.addf %227, %229 : vector<1x16xf32>
      %c0_93 = arith.constant 0 : index
      %c0_94 = arith.constant 0 : index
      %c0_95 = arith.constant 0 : index
      %231 = vector.load %arg24[%c0_93, %c0_94, %c0_95] : memref<1x1x16xf32, #tpu.memory_space<vmem>>, vector<1x1x16xf32>
      %232 = vector.shape_cast %231 : vector<1x1x16xf32> to vector<1x16xf32>
      %233 = vector.shape_cast %230 : vector<1x16xf32> to vector<1x1x16xf32>
      tpu.vector_store %arg24[%c0_93, %c0_94, %c0_95], %233 {strides = array<i32>} : memref<1x1x16xf32, #tpu.memory_space<vmem>>, vector<1x1x16xf32>,
    } else {
    }
    return
  }
  func.func @transform_0(%arg0: i32, %arg1: i32) -> (i32, i32, i32) {
    %c0_i32 = arith.constant 0 : i32
    %c0_i32_0 = arith.constant 0 : i32
    %c0_i32_1 = arith.constant 0 : i32
    return %arg0, %c0_i32, %c0_i32_0 : i32, i32, i32
  }
  func.func @transform_1(%arg0: i32, %arg1: i32) -> (i32, i32) {
    %c0_i32 = arith.constant 0 : i32
    %c0_i32_0 = arith.constant 0 : i32
    %c0_i32_1 = arith.constant 0 : i32
    return %c0_i32, %c0_i32_0 : i32, i32
  }
  func.func @transform_2(%arg0: i32, %arg1: i32) -> (i32, i32, i32) {
    %c0_i32 = arith.constant 0 : i32
    %c0_i32_0 = arith.constant 0 : i32
    %c0_i32_1 = arith.constant 0 : i32
    return %arg1, %c0_i32, %c0_i32_0 : i32, i32, i32
  }
  func.func @transform_3(%arg0: i32, %arg1: i32) -> (i32, i32, i32) {
    %c0_i32 = arith.constant 0 : i32
    %c0_i32_0 = arith.constant 0 : i32
    %c0_i32_1 = arith.constant 0 : i32
    return %arg1, %c0_i32, %c0_i32_0 : i32, i32, i32
  }
  func.func @transform_4(%arg0: i32, %arg1: i32) -> (i32, i32, i32) {
    %c0_i32 = arith.constant 0 : i32
    %c0_i32_0 = arith.constant 0 : i32
    %c0_i32_1 = arith.constant 0 : i32
    return %arg1, %c0_i32, %c0_i32_0 : i32, i32, i32
  }
  func.func @transform_5(%arg0: i32, %arg1: i32) -> (i32, i32, i32) {
    %c0_i32 = arith.constant 0 : i32
    %c0_i32_0 = arith.constant 0 : i32
    %c0_i32_1 = arith.constant 0 : i32
    return %arg1, %c0_i32, %c0_i32_0 : i32, i32, i32
  }
  func.func @transform_6(%arg0: i32, %arg1: i32) -> (i32, i32, i32) {
    %c0_i32 = arith.constant 0 : i32
    %c0_i32_0 = arith.constant 0 : i32
    %c0_i32_1 = arith.constant 0 : i32
    return %arg1, %c0_i32, %c0_i32_0 : i32, i32, i32
  }
  func.func @transform_7(%arg0: i32, %arg1: i32) -> (i32, i32, i32) {
    %c0_i32 = arith.constant 0 : i32
    %c0_i32_0 = arith.constant 0 : i32
    %c0_i32_1 = arith.constant 0 : i32
    return %arg1, %c0_i32, %c0_i32_0 : i32, i32, i32
  }
  func.func @transform_8(%arg0: i32, %arg1: i32) -> (i32, i32, i32) {
    %c0_i32 = arith.constant 0 : i32
    %c0_i32_0 = arith.constant 0 : i32
    %c0_i32_1 = arith.constant 0 : i32
    return %arg1, %c0_i32, %c0_i32_0 : i32, i32, i32
  }
  func.func @transform_9(%arg0: i32, %arg1: i32) -> (i32, i32, i32) {
    %c0_i32 = arith.constant 0 : i32
    %c0_i32_0 = arith.constant 0 : i32
    %c0_i32_1 = arith.constant 0 : i32
    return %arg1, %c0_i32, %c0_i32_0 : i32, i32, i32
  }
  func.func @transform_10(%arg0: i32, %arg1: i32) -> (i32, i32, i32) {
    %c0_i32 = arith.constant 0 : i32
    %c0_i32_0 = arith.constant 0 : i32
    %c0_i32_1 = arith.constant 0 : i32
    return %arg1, %c0_i32, %c0_i32_0 : i32, i32, i32
  }
  func.func @transform_11(%arg0: i32, %arg1: i32) -> (i32, i32, i32) {
    %c0_i32 = arith.constant 0 : i32
    %c0_i32_0 = arith.constant 0 : i32
    %c0_i32_1 = arith.constant 0 : i32
    return %arg1, %c0_i32, %c0_i32_0 : i32, i32, i32
  }
  func.func @transform_12(%arg0: i32, %arg1: i32) -> (i32, i32, i32) {
    %c0_i32 = arith.constant 0 : i32
    %c0_i32_0 = arith.constant 0 : i32
    %c0_i32_1 = arith.constant 0 : i32
    return %arg1, %c0_i32, %c0_i32_0 : i32, i32, i32
  }
  func.func @transform_13(%arg0: i32, %arg1: i32) -> (i32, i32, i32) {
    %c0_i32 = arith.constant 0 : i32
    %c0_i32_0 = arith.constant 0 : i32
    %c0_i32_1 = arith.constant 0 : i32
    return %arg1, %c0_i32, %c0_i32_0 : i32, i32, i32
  }
  func.func @transform_14(%arg0: i32, %arg1: i32) -> (i32, i32) {
    %c0_i32 = arith.constant 0 : i32
    %c0_i32_0 = arith.constant 0 : i32
    %c0_i32_1 = arith.constant 0 : i32
    return %c0_i32, %c0_i32_0 : i32, i32
  }
  func.func @transform_15(%arg0: i32, %arg1: i32) -> (i32, i32) {
    %c0_i32 = arith.constant 0 : i32
    %c0_i32_0 = arith.constant 0 : i32
    %c0_i32_1 = arith.constant 0 : i32
    return %c0_i32, %c0_i32_0 : i32, i32
  }
  func.func @transform_16(%arg0: i32, %arg1: i32) -> (i32, i32) {
    %c0_i32 = arith.constant 0 : i32
    %c0_i32_0 = arith.constant 0 : i32
    %c0_i32_1 = arith.constant 0 : i32
    return %c0_i32, %c0_i32_0 : i32, i32
  }
  func.func @transform_17(%arg0: i32, %arg1: i32) -> (i32, i32) {
    %c0_i32 = arith.constant 0 : i32
    %c0_i32_0 = arith.constant 0 : i32
    %c0_i32_1 = arith.constant 0 : i32
    return %c0_i32, %c0_i32_0 : i32, i32
  }
  func.func @transform_18(%arg0: i32, %arg1: i32) -> (i32, i32) {
    %c0_i32 = arith.constant 0 : i32
    %c0_i32_0 = arith.constant 0 : i32
    %c0_i32_1 = arith.constant 0 : i32
    return %c0_i32, %c0_i32_0 : i32, i32
  }
  func.func @transform_19(%arg0: i32, %arg1: i32) -> (i32, i32) {
    %c0_i32 = arith.constant 0 : i32
    %c0_i32_0 = arith.constant 0 : i32
    %c0_i32_1 = arith.constant 0 : i32
    return %c0_i32, %c0_i32_0 : i32, i32
  }
  func.func @transform_20(%arg0: i32, %arg1: i32) -> (i32, i32) {
    %c0_i32 = arith.constant 0 : i32
    %c0_i32_0 = arith.constant 0 : i32
    %c0_i32_1 = arith.constant 0 : i32
    return %c0_i32, %c0_i32_0 : i32, i32
  }
  func.func @transform_21(%arg0: i32, %arg1: i32) -> (i32, i32) {
    %c0_i32 = arith.constant 0 : i32
    %c0_i32_0 = arith.constant 0 : i32
    %c0_i32_1 = arith.constant 0 : i32
    return %c0_i32, %c0_i32_0 : i32, i32
  }
  func.func @transform_22(%arg0: i32, %arg1: i32) -> (i32, i32, i32) {
    %c0_i32 = arith.constant 0 : i32
    %c0_i32_0 = arith.constant 0 : i32
    %c0_i32_1 = arith.constant 0 : i32
    return %arg0, %c0_i32, %c0_i32_0 : i32, i32, i32
  }
}

</mosaic_0001>

<llo_original>
// kernel: squeeze.1
$region0: #{squeeze.1}
  %s0 = inlined_call_operand.vmem [shape: f32[2,16], index: 0, kind: input, shape index: {}]
  %s1 = inlined_call_operand.hbm [shape: f32[4,8], index: 1, kind: output, shape index: {}]
  $region1: #{squeeze.1} parent=0
    #allocation0 [shape = 'u8[2048]{0}', space=vmem, size = 0x800, scoped, tag = 'operand span for operand 1']
    #allocation1 [shape = 's32[1]{0}', space=sflag, size = 0x4, scoped, tag = 'scoped memory for squeeze.1']
    #allocation2 [shape = 'u8[4096]{0}', space=vmem, size = 0x1000, scoped, tag = 'scoped mem for output reshape']
    #allocation3 [shape = 'u8[4096]{0}', space=vmem, size = 0x1000, scoped, tag = 'scoped mem for input reshape']
    %2 = vsyncpa [#allocation1], 0
    %s4 = sshllo.u32 0, 2
    %v5 = vld [vmem:[%s0] sm:%s4]
    %6 = vst [vmem:[#allocation3] sm:%s4] %v5
    %v7 = vld [vmem:[#allocation3] sm:$0x3]
    %vm8 = vcmask 64512
    %9 = vst.msk [vmem:[#allocation2] ss:$2 sm:$0x3] %vm8, %v7
    %v10 = vld [vmem:[#allocation3] sm:$0x3]
    %11 = vrot.lane.b32.xlu0 %v10, 120
    %v12 = vpop.permute.xlu0 %11
    %vm13 = vcmask 64512
    %s14 = scalar_lea.vmem [#allocation2], 1
    %15 = vst.msk [vmem:[%s14] ss:$2 sm:$0x3] %vm13, %v12
    %s17 = sshllo.u32 0, 4
    %v19 = vld [vmem:[#allocation2] sm:%s17]
    %s20 = sshllo.u32 0, 4
    %21 = vst [vmem:[#allocation0] sm:%s20] %v19
    %s23 = ssub.s32 64, 64
    %24 = vsyncadd [#allocation1], %s23
    %s26 = sshll.u32 [#allocation0], 4
    %s27 = int_to_ptr.vmem [resolvable:$true] %s26
    %29 = dma.vmem_to_hbm [thread:$0]  %s27, 64, %s1, [#allocation1]
    %30 = dma.done [#allocation1], 64
    %31 = vsyncpa [#allocation1], 1

// kernel: forward.1
$region0: #{forward.1}
  #allocation0 [shape = 'u32[]', space=smem, size = 0x4, offset = 0x4, fixed_abs, tag = 'smem constant byte address 0x4 - core index']
  #allocation1 [shape = 'u32[144,128]{1,0:T(1,128)}', space=vmem, size = 0x12000, scoped, tag = 'internal scratch']
  #allocation2 [shape = 'f32[16,32]{1,0:T(8,128)}', space=vmem, size = 0x2000, scoped, tag = 'scratch operand']
  #allocation3 [shape = 'f32[1,1]{1,0:T(1,128)S(1)}', space=vmem, size = 0x200, scoped, tag = 'scoped memory for forward.1']
  %s0 = inlined_call_operand.vmem [shape: f32[4,8,32], index: 0, kind: input, shape index: {}]
  %s1 = inlined_call_operand.vmem [shape: f32[8,32], index: 1, kind: input, shape index: {}]
  %s2 = inlined_call_operand.vmem [shape: f32[2,1,32], index: 2, kind: input, shape index: {}]
  %s3 = inlined_call_operand.vmem [shape: f32[2,1,32], index: 3, kind: input, shape index: {}]
  %s4 = inlined_call_operand.vmem [shape: bf16[2,32,96], index: 4, kind: input, shape index: {}]
  %s5 = inlined_call_operand.vmem [shape: f32[2,1,96], index: 5, kind: input, shape index: {}]
  %s6 = inlined_call_operand.vmem [shape: bf16[2,32,32], index: 6, kind: input, shape index: {}]
  %s7 = inlined_call_operand.vmem [shape: f32[2,1,32], index: 7, kind: input, shape index: {}]
  %s8 = inlined_call_operand.vmem [shape: f32[2,1,32], index: 8, kind: input, shape index: {}]
  %s9 = inlined_call_operand.vmem [shape: f32[2,1,32], index: 9, kind: input, shape index: {}]
  %s10 = inlined_call_operand.vmem [shape: bf16[2,32,128], index: 10, kind: input, shape index: {}]
  %s11 = inlined_call_operand.vmem [shape: f32[2,1,128], index: 11, kind: input, shape index: {}]
  %s12 = inlined_call_operand.vmem [shape: bf16[2,128,32], index: 12, kind: input, shape index: {}]
  %s13 = inlined_call_operand.vmem [shape: f32[2,1,32], index: 13, kind: input, shape index: {}]
  %s14 = inlined_call_operand.vmem [shape: f32[1,32], index: 14, kind: input, shape index: {}]
  %s15 = inlined_call_operand.vmem [shape: f32[1,32], index: 15, kind: input, shape index: {}]
  %s16 = inlined_call_operand.vmem [shape: bf16[32,16], index: 16, kind: input, shape index: {}]
  %s17 = inlined_call_operand.vmem [shape: f32[1,16], index: 17, kind: input, shape index: {}]
  %s18 = inlined_call_operand.vmem [shape: f32[1,16], index: 18, kind: input, shape index: {}]
  %s19 = inlined_call_operand.vmem [shape: f32[1,16], index: 19, kind: input, shape index: {}]
  %s20 = inlined_call_operand.vmem [shape: bf16[1,16], index: 20, kind: input, shape index: {}]
  %s21 = inlined_call_operand.<no memory space> [shape: f32[1,1], index: 21, kind: input, shape index: {}]
  %s22 = inlined_call_operand.vmem [shape: f32[2,1,16], index: 22, kind: output, shape index: {}]
  %s23 = sld [smem:[#allocation0]]
  $region129: #{forward.1} parent=0
    _
  %s25 = ssub.s32 1, %s23
  %s26 = scalar_select 0, %s25, %s23
  %v27 = vstv %s21
  %28 = vst [vmem:[#allocation3] sm:$0x1] %v27
  loop: start=0, step=1, limit=6
  $region2: #{forward.1} parent=0 // loop_pre_header
    _
  $region3: #{forward.1} parent=0 // loop_header
    %s30 = sphi 0, %s34
    %p31 = scmp.ge.s32.totalorder %s30, 6
    %s37 = sphi 0, %s49
    %s38 = sphi 0, %s45
    %s39 = sphi 0, %s37
    %s40 = sphi 0, %s38
    %s41 = sphi 0, %s39
    %s42 = sphi 0, %s40
    %s52 = sphi 0, %s54
    %s55 = sphi 0, %s52
    %s56 = sphi 0, %s55
    %s72 = sphi 0, %s56
    %s76 = sphi 0, %s76
    %s78 = sphi 0, %s76
    %s79 = sphi 0, %s78
    %s93 = sphi 0, %s79
    %s99 = sphi 0, %s101
    %s102 = sphi 0, %s99
    %s103 = sphi 0, %s102
    %s119 = sphi 0, %s103
    %s125 = sphi 0, %s127
    %s128 = sphi 0, %s125
    %s129 = sphi 0, %s128
    %s145 = sphi 0, %s129
    %s151 = sphi 0, %s153
    %s154 = sphi 0, %s151
    %s155 = sphi 0, %s154
    %s171 = sphi 0, %s155
    %s177 = sphi 0, %s179
    %s180 = sphi 0, %s177
    %s181 = sphi 0, %s180
    %s197 = sphi 0, %s181
    %s203 = sphi 0, %s205
    %s206 = sphi 0, %s203
    %s207 = sphi 0, %s206
    %s223 = sphi 0, %s207
    %s229 = sphi 0, %s231
    %s232 = sphi 0, %s229
    %s233 = sphi 0, %s232
    %s249 = sphi 0, %s233
    %s255 = sphi 0, %s257
    %s258 = sphi 0, %s255
    %s259 = sphi 0, %s258
    %s275 = sphi 0, %s259
    %s281 = sphi 0, %s283
    %s284 = sphi 0, %s281
    %s285 = sphi 0, %s284
    %s301 = sphi 0, %s285
    %s307 = sphi 0, %s309
    %s310 = sphi 0, %s307
    %s311 = sphi 0, %s310
    %s327 = sphi 0, %s311
    %s333 = sphi 0, %s335
    %s336 = sphi 0, %s333
    %s337 = sphi 0, %s336
    %s353 = sphi 0, %s337
    %s359 = sphi 0, %s361
    %s362 = sphi 0, %s359
    %s363 = sphi 0, %s362
    %s379 = sphi 0, %s363
    %s385 = sphi 0, %s387
    %s388 = sphi 0, %s385
    %s389 = sphi 0, %s388
    %s405 = sphi 0, %s389
    %s409 = sphi 0, %s409
    %s411 = sphi 0, %s409
    %s412 = sphi 0, %s411
    %s426 = sphi 0, %s412
    %s430 = sphi 0, %s430
    %s432 = sphi 0, %s430
    %s433 = sphi 0, %s432
    %s447 = sphi 0, %s433
    %s451 = sphi 0, %s451
    %s453 = sphi 0, %s451
    %s454 = sphi 0, %s453
    %s468 = sphi 0, %s454
    %s472 = sphi 0, %s472
    %s474 = sphi 0, %s472
    %s475 = sphi 0, %s474
    %s489 = sphi 0, %s475
    %s493 = sphi 0, %s493
    %s495 = sphi 0, %s493
    %s496 = sphi 0, %s495
    %s510 = sphi 0, %s496
    %s514 = sphi 0, %s514
    %s516 = sphi 0, %s514
    %s517 = sphi 0, %s516
    %s531 = sphi 0, %s517
    %s535 = sphi 0, %s535
    %s537 = sphi 0, %s535
    %s538 = sphi 0, %s537
    %s552 = sphi 0, %s538
    %s556 = sphi 0, %s556
    %s558 = sphi 0, %s556
    %s559 = sphi 0, %s558
    %s573 = sphi 0, %s559
    %s579 = sphi 0, %s581
    %s582 = sphi 0, %s579
    %s583 = sphi 0, %s582
    %s599 = sphi 0, %s583
  $region4: #{forward.1} parent=0 // loop_header_branch
    %33 = sbr.rel (%p31) target = $region8
  $region5: #{forward.1} parent=0 // loop_body
    %s35 = ssub.s32 %s30, 1
    %s36 = ssub.s32 %s30, 2
    %s43 = sadd.s32 1, %s38
    %p44 = scmp.ge.s32.totalorder %s43, 2
    %s45 = scalar_select %p44, 0, %s43
    %s46 = sadd.s32 1, %s37
    %s47 = scalar_select %p44, %s46, %s37
    %p48 = scmp.ge.s32.totalorder %s47, 2
    %s49 = scalar_select %p48, 0, %s47
    %s50 = ssub.s32 %s37, %s49
    %p51 = scmp.eq.s32.totalorder %s50, 0
    %s53 = sadd.s32 %s52, 1
    %s54 = scalar_select %p51, %s52, %s53
    %p57 = pneg %p51
    %p58 = scmp.eq.s32.totalorder %s30, 3
    %p59 = por %p57, %p58
    %p60 = scmp.ne.s32.totalorder %s52, %s55
    %p61 = scmp.eq.s32.totalorder %s30, 0
    %p62 = por %p60, %p61
    %p63 = scmp.ne.s32.totalorder %s52, %s55
    %p64 = scmp.eq.s32.totalorder %s35, 3
    %p65 = por %p63, %p64
    %p66 = scmp.ne.s32.totalorder %s55, %s56
    %p67 = scmp.eq.s32.totalorder %s35, 0
    %p68 = por %p66, %p67
    %p69 = scmp.ne.s32.totalorder %s55, %s56
    %p70 = scmp.eq.s32.totalorder %s36, 3
    %p71 = por %p69, %p70
    %p73 = scmp.ne.s32.totalorder %s56, %s72
    %p74 = scmp.eq.s32.totalorder %s36, 0
    %p75 = por %p73, %p74
    %s77 = sadd.s32 %s76, 1
    %p80 = scmp.eq.s32.totalorder %s30, 3
    %p81 = scmp.ne.s32.totalorder %s76, %s78
    %p82 = scmp.eq.s32.totalorder %s30, 0
    %p83 = por %p81, %p82
    %p84 = scmp.ne.s32.totalorder %s76, %s78
    %p85 = scmp.eq.s32.totalorder %s35, 3
    %p86 = por %p84, %p85
    %p87 = scmp.ne.s32.totalorder %s78, %s79
    %p88 = scmp.eq.s32.totalorder %s35, 0
    %p89 = por %p87, %p88
    %p90 = scmp.ne.s32.totalorder %s78, %s79
    %p91 = scmp.eq.s32.totalorder %s36, 3
    %p92 = por %p90, %p91
    %p94 = scmp.ne.s32.totalorder %s79, %s93
    %p95 = scmp.eq.s32.totalorder %s36, 0
    %p96 = por %p94, %p95
    %s97 = ssub.s32 %s38, %s45
    %p98 = scmp.eq.s32.totalorder %s97, 0
    %s100 = sadd.s32 %s99, 1
    %s101 = scalar_select %p98, %s99, %s100
    %p104 = pneg %p98
    %p105 = scmp.eq.s32.totalorder %s30, 3
    %p106 = por %p104, %p105
    %p107 = scmp.ne.s32.totalorder %s99, %s102
    %p108 = scmp.eq.s32.totalorder %s30, 0
    %p109 = por %p107, %p108
    %p110 = scmp.ne.s32.totalorder %s99, %s102
    %p111 = scmp.eq.s32.totalorder %s35, 3
    %p112 = por %p110, %p111
    %p113 = scmp.ne.s32.totalorder %s102, %s103
    %p114 = scmp.eq.s32.totalorder %s35, 0
    %p115 = por %p113, %p114
    %p116 = scmp.ne.s32.totalorder %s102, %s103
    %p117 = scmp.eq.s32.totalorder %s36, 3
    %p118 = por %p116, %p117
    %p120 = scmp.ne.s32.totalorder %s103, %s119
    %p121 = scmp.eq.s32.totalorder %s36, 0
    %p122 = por %p120, %p121
    %s123 = ssub.s32 %s38, %s45
    %p124 = scmp.eq.s32.totalorder %s123, 0
    %s126 = sadd.s32 %s125, 1
    %s127 = scalar_select %p124, %s125, %s126
    %p130 = pneg %p124
    %p131 = scmp.eq.s32.totalorder %s30, 3
    %p132 = por %p130, %p131
    %p133 = scmp.ne.s32.totalorder %s125, %s128
    %p134 = scmp.eq.s32.totalorder %s30, 0
    %p135 = por %p133, %p134
    %p136 = scmp.ne.s32.totalorder %s125, %s128
    %p137 = scmp.eq.s32.totalorder %s35, 3
    %p138 = por %p136, %p137
    %p139 = scmp.ne.s32.totalorder %s128, %s129
    %p140 = scmp.eq.s32.totalorder %s35, 0
    %p141 = por %p139, %p140
    %p142 = scmp.ne.s32.totalorder %s128, %s129
    %p143 = scmp.eq.s32.totalorder %s36, 3
    %p144 = por %p142, %p143
    %p146 = scmp.ne.s32.totalorder %s129, %s145
    %p147 = scmp.eq.s32.totalorder %s36, 0
    %p148 = por %p146, %p147
    %s149 = ssub.s32 %s38, %s45
    %p150 = scmp.eq.s32.totalorder %s149, 0
    %s152 = sadd.s32 %s151, 1
    %s153 = scalar_select %p150, %s151, %s152
    %p156 = pneg %p150
    %p157 = scmp.eq.s32.totalorder %s30, 3
    %p158 = por %p156, %p157
    %p159 = scmp.ne.s32.totalorder %s151, %s154
    %p160 = scmp.eq.s32.totalorder %s30, 0
    %p161 = por %p159, %p160
    %p162 = scmp.ne.s32.totalorder %s151, %s154
    %p163 = scmp.eq.s32.totalorder %s35, 3
    %p164 = por %p162, %p163
    %p165 = scmp.ne.s32.totalorder %s154, %s155
    %p166 = scmp.eq.s32.totalorder %s35, 0
    %p167 = por %p165, %p166
    %p168 = scmp.ne.s32.totalorder %s154, %s155
    %p169 = scmp.eq.s32.totalorder %s36, 3
    %p170 = por %p168, %p169
    %p172 = scmp.ne.s32.totalorder %s155, %s171
    %p173 = scmp.eq.s32.totalorder %s36, 0
    %p174 = por %p172, %p173
    %s175 = ssub.s32 %s38, %s45
    %p176 = scmp.eq.s32.totalorder %s175, 0
    %s178 = sadd.s32 %s177, 1
    %s179 = scalar_select %p176, %s177, %s178
    %p182 = pneg %p176
    %p183 = scmp.eq.s32.totalorder %s30, 3
    %p184 = por %p182, %p183
    %p185 = scmp.ne.s32.totalorder %s177, %s180
    %p186 = scmp.eq.s32.totalorder %s30, 0
    %p187 = por %p185, %p186
    %p188 = scmp.ne.s32.totalorder %s177, %s180
    %p189 = scmp.eq.s32.totalorder %s35, 3
    %p190 = por %p188, %p189
    %p191 = scmp.ne.s32.totalorder %s180, %s181
    %p192 = scmp.eq.s32.totalorder %s35, 0
    %p193 = por %p191, %p192
    %p194 = scmp.ne.s32.totalorder %s180, %s181
    %p195 = scmp.eq.s32.totalorder %s36, 3
    %p196 = por %p194, %p195
    %p198 = scmp.ne.s32.totalorder %s181, %s197
    %p199 = scmp.eq.s32.totalorder %s36, 0
    %p200 = por %p198, %p199
    %s201 = ssub.s32 %s38, %s45
    %p202 = scmp.eq.s32.totalorder %s201, 0
    %s204 = sadd.s32 %s203, 1
    %s205 = scalar_select %p202, %s203, %s204
    %p208 = pneg %p202
    %p209 = scmp.eq.s32.totalorder %s30, 3
    %p210 = por %p208, %p209
    %p211 = scmp.ne.s32.totalorder %s203, %s206
    %p212 = scmp.eq.s32.totalorder %s30, 0
    %p213 = por %p211, %p212
    %p214 = scmp.ne.s32.totalorder %s203, %s206
    %p215 = scmp.eq.s32.totalorder %s35, 3
    %p216 = por %p214, %p215
    %p217 = scmp.ne.s32.totalorder %s206, %s207
    %p218 = scmp.eq.s32.totalorder %s35, 0
    %p219 = por %p217, %p218
    %p220 = scmp.ne.s32.totalorder %s206, %s207
    %p221 = scmp.eq.s32.totalorder %s36, 3
    %p222 = por %p220, %p221
    %p224 = scmp.ne.s32.totalorder %s207, %s223
    %p225 = scmp.eq.s32.totalorder %s36, 0
    %p226 = por %p224, %p225
    %s227 = ssub.s32 %s38, %s45
    %p228 = scmp.eq.s32.totalorder %s227, 0
    %s230 = sadd.s32 %s229, 1
    %s231 = scalar_select %p228, %s229, %s230
    %p234 = pneg %p228
    %p235 = scmp.eq.s32.totalorder %s30, 3
    %p236 = por %p234, %p235
    %p237 = scmp.ne.s32.totalorder %s229, %s232
    %p238 = scmp.eq.s32.totalorder %s30, 0
    %p239 = por %p237, %p238
    %p240 = scmp.ne.s32.totalorder %s229, %s232
    %p241 = scmp.eq.s32.totalorder %s35, 3
    %p242 = por %p240, %p241
    %p243 = scmp.ne.s32.totalorder %s232, %s233
    %p244 = scmp.eq.s32.totalorder %s35, 0
    %p245 = por %p243, %p244
    %p246 = scmp.ne.s32.totalorder %s232, %s233
    %p247 = scmp.eq.s32.totalorder %s36, 3
    %p248 = por %p246, %p247
    %p250 = scmp.ne.s32.totalorder %s233, %s249
    %p251 = scmp.eq.s32.totalorder %s36, 0
    %p252 = por %p250, %p251
    %s253 = ssub.s32 %s38, %s45
    %p254 = scmp.eq.s32.totalorder %s253, 0
    %s256 = sadd.s32 %s255, 1
    %s257 = scalar_select %p254, %s255, %s256
    %p260 = pneg %p254
    %p261 = scmp.eq.s32.totalorder %s30, 3
    %p262 = por %p260, %p261
    %p263 = scmp.ne.s32.totalorder %s255, %s258
    %p264 = scmp.eq.s32.totalorder %s30, 0
    %p265 = por %p263, %p264
    %p266 = scmp.ne.s32.totalorder %s255, %s258
    %p267 = scmp.eq.s32.totalorder %s35, 3
    %p268 = por %p266, %p267
    %p269 = scmp.ne.s32.totalorder %s258, %s259
    %p270 = scmp.eq.s32.totalorder %s35, 0
    %p271 = por %p269, %p270
    %p272 = scmp.ne.s32.totalorder %s258, %s259
    %p273 = scmp.eq.s32.totalorder %s36, 3
    %p274 = por %p272, %p273
    %p276 = scmp.ne.s32.totalorder %s259, %s275
    %p277 = scmp.eq.s32.totalorder %s36, 0
    %p278 = por %p276, %p277
    %s279 = ssub.s32 %s38, %s45
    %p280 = scmp.eq.s32.totalorder %s279, 0
    %s282 = sadd.s32 %s281, 1
    %s283 = scalar_select %p280, %s281, %s282
    %p286 = pneg %p280
    %p287 = scmp.eq.s32.totalorder %s30, 3
    %p288 = por %p286, %p287
    %p289 = scmp.ne.s32.totalorder %s281, %s284
    %p290 = scmp.eq.s32.totalorder %s30, 0
    %p291 = por %p289, %p290
    %p292 = scmp.ne.s32.totalorder %s281, %s284
    %p293 = scmp.eq.s32.totalorder %s35, 3
    %p294 = por %p292, %p293
    %p295 = scmp.ne.s32.totalorder %s284, %s285
    %p296 = scmp.eq.s32.totalorder %s35, 0
    %p297 = por %p295, %p296
    %p298 = scmp.ne.s32.totalorder %s284, %s285
    %p299 = scmp.eq.s32.totalorder %s36, 3
    %p300 = por %p298, %p299
    %p302 = scmp.ne.s32.totalorder %s285, %s301
    %p303 = scmp.eq.s32.totalorder %s36, 0
    %p304 = por %p302, %p303
    %s305 = ssub.s32 %s38, %s45
    %p306 = scmp.eq.s32.totalorder %s305, 0
    %s308 = sadd.s32 %s307, 1
    %s309 = scalar_select %p306, %s307, %s308
    %p312 = pneg %p306
    %p313 = scmp.eq.s32.totalorder %s30, 3
    %p314 = por %p312, %p313
    %p315 = scmp.ne.s32.totalorder %s307, %s310
    %p316 = scmp.eq.s32.totalorder %s30, 0
    %p317 = por %p315, %p316
    %p318 = scmp.ne.s32.totalorder %s307, %s310
    %p319 = scmp.eq.s32.totalorder %s35, 3
    %p320 = por %p318, %p319
    %p321 = scmp.ne.s32.totalorder %s310, %s311
    %p322 = scmp.eq.s32.totalorder %s35, 0
    %p323 = por %p321, %p322
    %p324 = scmp.ne.s32.totalorder %s310, %s311
    %p325 = scmp.eq.s32.totalorder %s36, 3
    %p326 = por %p324, %p325
    %p328 = scmp.ne.s32.totalorder %s311, %s327
    %p329 = scmp.eq.s32.totalorder %s36, 0
    %p330 = por %p328, %p329
    %s331 = ssub.s32 %s38, %s45
    %p332 = scmp.eq.s32.totalorder %s331, 0
    %s334 = sadd.s32 %s333, 1
    %s335 = scalar_select %p332, %s333, %s334
    %p338 = pneg %p332
    %p339 = scmp.eq.s32.totalorder %s30, 3
    %p340 = por %p338, %p339
    %p341 = scmp.ne.s32.totalorder %s333, %s336
    %p342 = scmp.eq.s32.totalorder %s30, 0
    %p343 = por %p341, %p342
    %p344 = scmp.ne.s32.totalorder %s333, %s336
    %p345 = scmp.eq.s32.totalorder %s35, 3
    %p346 = por %p344, %p345
    %p347 = scmp.ne.s32.totalorder %s336, %s337
    %p348 = scmp.eq.s32.totalorder %s35, 0
    %p349 = por %p347, %p348
    %p350 = scmp.ne.s32.totalorder %s336, %s337
    %p351 = scmp.eq.s32.totalorder %s36, 3
    %p352 = por %p350, %p351
    %p354 = scmp.ne.s32.totalorder %s337, %s353
    %p355 = scmp.eq.s32.totalorder %s36, 0
    %p356 = por %p354, %p355
    %s357 = ssub.s32 %s38, %s45
    %p358 = scmp.eq.s32.totalorder %s357, 0
    %s360 = sadd.s32 %s359, 1
    %s361 = scalar_select %p358, %s359, %s360
    %p364 = pneg %p358
    %p365 = scmp.eq.s32.totalorder %s30, 3
    %p366 = por %p364, %p365
    %p367 = scmp.ne.s32.totalorder %s359, %s362
    %p368 = scmp.eq.s32.totalorder %s30, 0
    %p369 = por %p367, %p368
    %p370 = scmp.ne.s32.totalorder %s359, %s362
    %p371 = scmp.eq.s32.totalorder %s35, 3
    %p372 = por %p370, %p371
    %p373 = scmp.ne.s32.totalorder %s362, %s363
    %p374 = scmp.eq.s32.totalorder %s35, 0
    %p375 = por %p373, %p374
    %p376 = scmp.ne.s32.totalorder %s362, %s363
    %p377 = scmp.eq.s32.totalorder %s36, 3
    %p378 = por %p376, %p377
    %p380 = scmp.ne.s32.totalorder %s363, %s379
    %p381 = scmp.eq.s32.totalorder %s36, 0
    %p382 = por %p380, %p381
    %s383 = ssub.s32 %s38, %s45
    %p384 = scmp.eq.s32.totalorder %s383, 0
    %s386 = sadd.s32 %s385, 1
    %s387 = scalar_select %p384, %s385, %s386
    %p390 = pneg %p384
    %p391 = scmp.eq.s32.totalorder %s30, 3
    %p392 = por %p390, %p391
    %p393 = scmp.ne.s32.totalorder %s385, %s388
    %p394 = scmp.eq.s32.totalorder %s30, 0
    %p395 = por %p393, %p394
    %p396 = scmp.ne.s32.totalorder %s385, %s388
    %p397 = scmp.eq.s32.totalorder %s35, 3
    %p398 = por %p396, %p397
    %p399 = scmp.ne.s32.totalorder %s388, %s389
    %p400 = scmp.eq.s32.totalorder %s35, 0
    %p401 = por %p399, %p400
    %p402 = scmp.ne.s32.totalorder %s388, %s389
    %p403 = scmp.eq.s32.totalorder %s36, 3
    %p404 = por %p402, %p403
    %p406 = scmp.ne.s32.totalorder %s389, %s405
    %p407 = scmp.eq.s32.totalorder %s36, 0
    %p408 = por %p406, %p407
    %s410 = sadd.s32 %s409, 1
    %p413 = scmp.eq.s32.totalorder %s30, 3
    %p414 = scmp.ne.s32.totalorder %s409, %s411
    %p415 = scmp.eq.s32.totalorder %s30, 0
    %p416 = por %p414, %p415
    %p417 = scmp.ne.s32.totalorder %s409, %s411
    %p418 = scmp.eq.s32.totalorder %s35, 3
    %p419 = por %p417, %p418
    %p420 = scmp.ne.s32.totalorder %s411, %s412
    %p421 = scmp.eq.s32.totalorder %s35, 0
    %p422 = por %p420, %p421
    %p423 = scmp.ne.s32.totalorder %s411, %s412
    %p424 = scmp.eq.s32.totalorder %s36, 3
    %p425 = por %p423, %p424
    %p427 = scmp.ne.s32.totalorder %s412, %s426
    %p428 = scmp.eq.s32.totalorder %s36, 0
    %p429 = por %p427, %p428
    %s431 = sadd.s32 %s430, 1
    %p434 = scmp.eq.s32.totalorder %s30, 3
    %p435 = scmp.ne.s32.totalorder %s430, %s432
    %p436 = scmp.eq.s32.totalorder %s30, 0
    %p437 = por %p435, %p436
    %p438 = scmp.ne.s32.totalorder %s430, %s432
    %p439 = scmp.eq.s32.totalorder %s35, 3
    %p440 = por %p438, %p439
    %p441 = scmp.ne.s32.totalorder %s432, %s433
    %p442 = scmp.eq.s32.totalorder %s35, 0
    %p443 = por %p441, %p442
    %p444 = scmp.ne.s32.totalorder %s432, %s433
    %p445 = scmp.eq.s32.totalorder %s36, 3
    %p446 = por %p444, %p445
    %p448 = scmp.ne.s32.totalorder %s433, %s447
    %p449 = scmp.eq.s32.totalorder %s36, 0
    %p450 = por %p448, %p449
    %s452 = sadd.s32 %s451, 1
    %p455 = scmp.eq.s32.totalorder %s30, 3
    %p456 = scmp.ne.s32.totalorder %s451, %s453
    %p457 = scmp.eq.s32.totalorder %s30, 0
    %p458 = por %p456, %p457
    %p459 = scmp.ne.s32.totalorder %s451, %s453
    %p460 = scmp.eq.s32.totalorder %s35, 3
    %p461 = por %p459, %p460
    %p462 = scmp.ne.s32.totalorder %s453, %s454
    %p463 = scmp.eq.s32.totalorder %s35, 0
    %p464 = por %p462, %p463
    %p465 = scmp.ne.s32.totalorder %s453, %s454
    %p466 = scmp.eq.s32.totalorder %s36, 3
    %p467 = por %p465, %p466
    %p469 = scmp.ne.s32.totalorder %s454, %s468
    %p470 = scmp.eq.s32.totalorder %s36, 0
    %p471 = por %p469, %p470
    %s473 = sadd.s32 %s472, 1
    %p476 = scmp.eq.s32.totalorder %s30, 3
    %p477 = scmp.ne.s32.totalorder %s472, %s474
    %p478 = scmp.eq.s32.totalorder %s30, 0
    %p479 = por %p477, %p478
    %p480 = scmp.ne.s32.totalorder %s472, %s474
    %p481 = scmp.eq.s32.totalorder %s35, 3
    %p482 = por %p480, %p481
    %p483 = scmp.ne.s32.totalorder %s474, %s475
    %p484 = scmp.eq.s32.totalorder %s35, 0
    %p485 = por %p483, %p484
    %p486 = scmp.ne.s32.totalorder %s474, %s475
    %p487 = scmp.eq.s32.totalorder %s36, 3
    %p488 = por %p486, %p487
    %p490 = scmp.ne.s32.totalorder %s475, %s489
    %p491 = scmp.eq.s32.totalorder %s36, 0
    %p492 = por %p490, %p491
    %s494 = sadd.s32 %s493, 1
    %p497 = scmp.eq.s32.totalorder %s30, 3
    %p498 = scmp.ne.s32.totalorder %s493, %s495
    %p499 = scmp.eq.s32.totalorder %s30, 0
    %p500 = por %p498, %p499
    %p501 = scmp.ne.s32.totalorder %s493, %s495
    %p502 = scmp.eq.s32.totalorder %s35, 3
    %p503 = por %p501, %p502
    %p504 = scmp.ne.s32.totalorder %s495, %s496
    %p505 = scmp.eq.s32.totalorder %s35, 0
    %p506 = por %p504, %p505
    %p507 = scmp.ne.s32.totalorder %s495, %s496
    %p508 = scmp.eq.s32.totalorder %s36, 3
    %p509 = por %p507, %p508
    %p511 = scmp.ne.s32.totalorder %s496, %s510
    %p512 = scmp.eq.s32.totalorder %s36, 0
    %p513 = por %p511, %p512
    %s515 = sadd.s32 %s514, 1
    %p518 = scmp.eq.s32.totalorder %s30, 3
    %p519 = scmp.ne.s32.totalorder %s514, %s516
    %p520 = scmp.eq.s32.totalorder %s30, 0
    %p521 = por %p519, %p520
    %p522 = scmp.ne.s32.totalorder %s514, %s516
    %p523 = scmp.eq.s32.totalorder %s35, 3
    %p524 = por %p522, %p523
    %p525 = scmp.ne.s32.totalorder %s516, %s517
    %p526 = scmp.eq.s32.totalorder %s35, 0
    %p527 = por %p525, %p526
    %p528 = scmp.ne.s32.totalorder %s516, %s517
    %p529 = scmp.eq.s32.totalorder %s36, 3
    %p530 = por %p528, %p529
    %p532 = scmp.ne.s32.totalorder %s517, %s531
    %p533 = scmp.eq.s32.totalorder %s36, 0
    %p534 = por %p532, %p533
    %s536 = sadd.s32 %s535, 1
    %p539 = scmp.eq.s32.totalorder %s30, 3
    %p540 = scmp.ne.s32.totalorder %s535, %s537
    %p541 = scmp.eq.s32.totalorder %s30, 0
    %p542 = por %p540, %p541
    %p543 = scmp.ne.s32.totalorder %s535, %s537
    %p544 = scmp.eq.s32.totalorder %s35, 3
    %p545 = por %p543, %p544
    %p546 = scmp.ne.s32.totalorder %s537, %s538
    %p547 = scmp.eq.s32.totalorder %s35, 0
    %p548 = por %p546, %p547
    %p549 = scmp.ne.s32.totalorder %s537, %s538
    %p550 = scmp.eq.s32.totalorder %s36, 3
    %p551 = por %p549, %p550
    %p553 = scmp.ne.s32.totalorder %s538, %s552
    %p554 = scmp.eq.s32.totalorder %s36, 0
    %p555 = por %p553, %p554
    %s557 = sadd.s32 %s556, 1
    %p560 = scmp.eq.s32.totalorder %s30, 3
    %p561 = scmp.ne.s32.totalorder %s556, %s558
    %p562 = scmp.eq.s32.totalorder %s30, 0
    %p563 = por %p561, %p562
    %p564 = scmp.ne.s32.totalorder %s556, %s558
    %p565 = scmp.eq.s32.totalorder %s35, 3
    %p566 = por %p564, %p565
    %p567 = scmp.ne.s32.totalorder %s558, %s559
    %p568 = scmp.eq.s32.totalorder %s35, 0
    %p569 = por %p567, %p568
    %p570 = scmp.ne.s32.totalorder %s558, %s559
    %p571 = scmp.eq.s32.totalorder %s36, 3
    %p572 = por %p570, %p571
    %p574 = scmp.ne.s32.totalorder %s559, %s573
    %p575 = scmp.eq.s32.totalorder %s36, 0
    %p576 = por %p574, %p575
    %s577 = ssub.s32 %s37, %s49
    %p578 = scmp.eq.s32.totalorder %s577, 0
    %s580 = sadd.s32 %s579, 1
    %s581 = scalar_select %p578, %s579, %s580
    %p584 = pneg %p578
    %p585 = scmp.eq.s32.totalorder %s30, 3
    %p586 = por %p584, %p585
    %p587 = scmp.ne.s32.totalorder %s579, %s582
    %p588 = scmp.eq.s32.totalorder %s30, 0
    %p589 = por %p587, %p588
    %p590 = scmp.ne.s32.totalorder %s579, %s582
    %p591 = scmp.eq.s32.totalorder %s35, 3
    %p592 = por %p590, %p591
    %p593 = scmp.ne.s32.totalorder %s582, %s583
    %p594 = scmp.eq.s32.totalorder %s35, 0
    %p595 = por %p593, %p594
    %p596 = scmp.ne.s32.totalorder %s582, %s583
    %p597 = scmp.eq.s32.totalorder %s36, 3
    %p598 = por %p596, %p597
    %p600 = scmp.ne.s32.totalorder %s583, %s599
    %p601 = scmp.eq.s32.totalorder %s36, 0
    %p602 = por %p600, %p601
    %p603 = scmp.le.s32.totalorder 1, %s30
    %p604 = scmp.lt.s32.totalorder %s30, 5
    %p605 = pnand %p603, %p604
    %p606 = pneg %p605
    // Predicated region
    $region9: #{forward.1} parent=5 // pred_check
      _
    $region10: #{forward.1} parent=5 // pred_check_branch
      %608 = sbr.rel (%p605) target = $region12
    $region11: #{forward.1} parent=5 // pred_region
      %s609 = ssub.s32 %s30, 1
      // Predicated region
      $region13: #{forward.1} parent=11 // pred_check
        %p610 = pneg %p89
      $region14: #{forward.1} parent=11 // pred_check_branch
        %612 = sbr.rel (%p610) target = $region16
      $region15: #{forward.1} parent=11 // pred_region
        _
      $region16: #{forward.1} parent=11 // pred_fallthru
        _
      // Predicated region
      $region17: #{forward.1} parent=11 // pred_check
        %p613 = pneg %p422
      $region18: #{forward.1} parent=11 // pred_check_branch
        %615 = sbr.rel (%p613) target = $region20
      $region19: #{forward.1} parent=11 // pred_region
        _
      $region20: #{forward.1} parent=11 // pred_fallthru
        _
      // Predicated region
      $region21: #{forward.1} parent=11 // pred_check
        %p616 = pneg %p443
      $region22: #{forward.1} parent=11 // pred_check_branch
        %618 = sbr.rel (%p616) target = $region24
      $region23: #{forward.1} parent=11 // pred_region
        _
      $region24: #{forward.1} parent=11 // pred_fallthru
        _
      // Predicated region
      $region25: #{forward.1} parent=11 // pred_check
        %p619 = pneg %p464
      $region26: #{forward.1} parent=11 // pred_check_branch
        %621 = sbr.rel (%p619) target = $region28
      $region27: #{forward.1} parent=11 // pred_region
        _
      $region28: #{forward.1} parent=11 // pred_fallthru
        _
      // Predicated region
      $region29: #{forward.1} parent=11 // pred_check
        %p622 = pneg %p485
      $region30: #{forward.1} parent=11 // pred_check_branch
        %624 = sbr.rel (%p622) target = $region32
      $region31: #{forward.1} parent=11 // pred_region
        _
      $region32: #{forward.1} parent=11 // pred_fallthru
        _
      // Predicated region
      $region33: #{forward.1} parent=11 // pred_check
        %p625 = pneg %p506
      $region34: #{forward.1} parent=11 // pred_check_branch
        %627 = sbr.rel (%p625) target = $region36
      $region35: #{forward.1} parent=11 // pred_region
        _
      $region36: #{forward.1} parent=11 // pred_fallthru
        _
      // Predicated region
      $region37: #{forward.1} parent=11 // pred_check
        %p628 = pneg %p527
      $region38: #{forward.1} parent=11 // pred_check_branch
        %630 = sbr.rel (%p628) target = $region40
      $region39: #{forward.1} parent=11 // pred_region
        _
      $region40: #{forward.1} parent=11 // pred_fallthru
        _
      // Predicated region
      $region41: #{forward.1} parent=11 // pred_check
        %p631 = pneg %p548
      $region42: #{forward.1} parent=11 // pred_check_branch
        %633 = sbr.rel (%p631) target = $region44
      $region43: #{forward.1} parent=11 // pred_region
        _
      $region44: #{forward.1} parent=11 // pred_fallthru
        _
      // Predicated region
      $region45: #{forward.1} parent=11 // pred_check
        %p634 = pneg %p569
      $region46: #{forward.1} parent=11 // pred_check_branch
        %636 = sbr.rel (%p634) target = $region48
      $region47: #{forward.1} parent=11 // pred_region
        _
      $region48: #{forward.1} parent=11 // pred_fallthru
        _
    $region12: #{forward.1} parent=5 // pred_fallthru
      _
    %p637 = scmp.lt.s32.totalorder %s30, 4
    // Predicated region
    $region49: #{forward.1} parent=5 // pred_check
      %p638 = pneg %p637
    $region50: #{forward.1} parent=5 // pred_check_branch
      %640 = sbr.rel (%p638) target = $region52
    $region51: #{forward.1} parent=5 // pred_region
      // Predicated region
      $region53: #{forward.1} parent=51 // pred_check
        %p641 = pneg %p62
      $region54: #{forward.1} parent=51 // pred_check_branch
        %643 = sbr.rel (%p641) target = $region56
      $region55: #{forward.1} parent=51 // pred_region
        %s644 = smul.u32 2, %s37
        %p645 = scmp.lt.s32.totalorder %s644, 3
        %s646 = scalar_select %p645, %s644, 3
        %s647 = smul.addr %s646, 8
        %s648 = scalar_lea.vmem %s0, %s647
        %s649 = smul.u32 2, %s37
      $region56: #{forward.1} parent=51 // pred_fallthru
        _
      // Predicated region
      $region57: #{forward.1} parent=51 // pred_check
        %p650 = pneg %p109
      $region58: #{forward.1} parent=51 // pred_check_branch
        %652 = sbr.rel (%p650) target = $region60
      $region59: #{forward.1} parent=51 // pred_region
        %p653 = scmp.lt.s32.totalorder %s38, 1
        %s654 = scalar_select %p653, %s38, 1
        %s655 = scalar_lea.vmem %s2, %s654
      $region60: #{forward.1} parent=51 // pred_fallthru
        _
      // Predicated region
      $region61: #{forward.1} parent=51 // pred_check
        %p656 = pneg %p135
      $region62: #{forward.1} parent=51 // pred_check_branch
        %658 = sbr.rel (%p656) target = $region64
      $region63: #{forward.1} parent=51 // pred_region
        %p659 = scmp.lt.s32.totalorder %s38, 1
        %s660 = scalar_select %p659, %s38, 1
        %s661 = scalar_lea.vmem %s3, %s660
      $region64: #{forward.1} parent=51 // pred_fallthru
        _
      // Predicated region
      $region65: #{forward.1} parent=51 // pred_check
        %p662 = pneg %p161
      $region66: #{forward.1} parent=51 // pred_check_branch
        %664 = sbr.rel (%p662) target = $region68
      $region67: #{forward.1} parent=51 // pred_region
        %p665 = scmp.lt.s32.totalorder %s38, 1
        %s666 = scalar_select %p665, %s38, 1
        %s667 = smul.addr %s666, 4
        %s668 = smul.addr %s667, 4
        %s669 = scalar_lea.vmem %s4, %s668
      $region68: #{forward.1} parent=51 // pred_fallthru
        _
      // Predicated region
      $region69: #{forward.1} parent=51 // pred_check
        %p670 = pneg %p187
      $region70: #{forward.1} parent=51 // pred_check_branch
        %672 = sbr.rel (%p670) target = $region72
      $region71: #{forward.1} parent=51 // pred_region
        %p673 = scmp.lt.s32.totalorder %s38, 1
        %s674 = scalar_select %p673, %s38, 1
        %s675 = scalar_lea.vmem %s5, %s674
      $region72: #{forward.1} parent=51 // pred_fallthru
        _
      // Predicated region
      $region73: #{forward.1} parent=51 // pred_check
        %p676 = pneg %p213
      $region74: #{forward.1} parent=51 // pred_check_branch
        %678 = sbr.rel (%p676) target = $region76
      $region75: #{forward.1} parent=51 // pred_region
        %p679 = scmp.lt.s32.totalorder %s38, 1
        %s680 = scalar_select %p679, %s38, 1
        %s681 = smul.addr %s680, 4
        %s682 = smul.addr %s681, 4
        %s683 = scalar_lea.vmem %s6, %s682
      $region76: #{forward.1} parent=51 // pred_fallthru
        _
      // Predicated region
      $region77: #{forward.1} parent=51 // pred_check
        %p684 = pneg %p239
      $region78: #{forward.1} parent=51 // pred_check_branch
        %686 = sbr.rel (%p684) target = $region80
      $region79: #{forward.1} parent=51 // pred_region
        %p687 = scmp.lt.s32.totalorder %s38, 1
        %s688 = scalar_select %p687, %s38, 1
        %s689 = scalar_lea.vmem %s7, %s688
      $region80: #{forward.1} parent=51 // pred_fallthru
        _
      // Predicated region
      $region81: #{forward.1} parent=51 // pred_check
        %p690 = pneg %p265
      $region82: #{forward.1} parent=51 // pred_check_branch
        %692 = sbr.rel (%p690) target = $region84
      $region83: #{forward.1} parent=51 // pred_region
        %p693 = scmp.lt.s32.totalorder %s38, 1
        %s694 = scalar_select %p693, %s38, 1
        %s695 = scalar_lea.vmem %s8, %s694
      $region84: #{forward.1} parent=51 // pred_fallthru
        _
      // Predicated region
      $region85: #{forward.1} parent=51 // pred_check
        %p696 = pneg %p291
      $region86: #{forward.1} parent=51 // pred_check_branch
        %698 = sbr.rel (%p696) target = $region88
      $region87: #{forward.1} parent=51 // pred_region
        %p699 = scmp.lt.s32.totalorder %s38, 1
        %s700 = scalar_select %p699, %s38, 1
        %s701 = scalar_lea.vmem %s9, %s700
      $region88: #{forward.1} parent=51 // pred_fallthru
        _
      // Predicated region
      $region89: #{forward.1} parent=51 // pred_check
        %p702 = pneg %p317
      $region90: #{forward.1} parent=51 // pred_check_branch
        %704 = sbr.rel (%p702) target = $region92
      $region91: #{forward.1} parent=51 // pred_region
        %p705 = scmp.lt.s32.totalorder %s38, 1
        %s706 = scalar_select %p705, %s38, 1
        %s707 = smul.addr %s706, 4
        %s708 = smul.addr %s707, 4
        %s709 = scalar_lea.vmem %s10, %s708
      $region92: #{forward.1} parent=51 // pred_fallthru
        _
      // Predicated region
      $region93: #{forward.1} parent=51 // pred_check
        %p710 = pneg %p343
      $region94: #{forward.1} parent=51 // pred_check_branch
        %712 = sbr.rel (%p710) target = $region96
      $region95: #{forward.1} parent=51 // pred_region
        %p713 = scmp.lt.s32.totalorder %s38, 1
        %s714 = scalar_select %p713, %s38, 1
        %s715 = scalar_lea.vmem %s11, %s714
      $region96: #{forward.1} parent=51 // pred_fallthru
        _
      // Predicated region
      $region97: #{forward.1} parent=51 // pred_check
        %p716 = pneg %p369
      $region98: #{forward.1} parent=51 // pred_check_branch
        %718 = sbr.rel (%p716) target = $region100
      $region99: #{forward.1} parent=51 // pred_region
        %p719 = scmp.lt.s32.totalorder %s38, 1
        %s720 = scalar_select %p719, %s38, 1
        %s721 = smul.addr %s720, 16
        %s722 = smul.addr %s721, 4
        %s723 = scalar_lea.vmem %s12, %s722
      $region100: #{forward.1} parent=51 // pred_fallthru
        _
      // Predicated region
      $region101: #{forward.1} parent=51 // pred_check
        %p724 = pneg %p395
      $region102: #{forward.1} parent=51 // pred_check_branch
        %726 = sbr.rel (%p724) target = $region104
      $region103: #{forward.1} parent=51 // pred_region
        %p727 = scmp.lt.s32.totalorder %s38, 1
        %s728 = scalar_select %p727, %s38, 1
        %s729 = scalar_lea.vmem %s13, %s728
      $region104: #{forward.1} parent=51 // pred_fallthru
        _
    $region52: #{forward.1} parent=5 // pred_fallthru
      _
    %p730 = scmp.le.s32.totalorder 1, %s30
    %p731 = scmp.lt.s32.totalorder %s30, 5
    %p732 = pnand %p730, %p731
    %p733 = pneg %p732
    // Predicated region
    $region105: #{forward.1} parent=5 // pred_check
      _
    $region106: #{forward.1} parent=5 // pred_check_branch
      %735 = sbr.rel (%p732) target = $region108
    $region107: #{forward.1} parent=5 // pred_region
      %s736 = ssub.s32 %s30, 1
      %s737 = smul.u32 2, %s39
      %p738 = scmp.lt.s32.totalorder %s737, 3
      %s739 = scalar_select %p738, %s737, 3
      %s740 = smul.addr %s739, 8
      %s741 = scalar_lea.vmem %s0, %s740
      %p742 = pneg %p68
      %p743 = pneg %p65
      %p744 = pneg %p89
      %p745 = pneg %p86
      %p746 = scmp.lt.s32.totalorder %s40, 1
      %s747 = scalar_select %p746, %s40, 1
      %s748 = scalar_lea.vmem %s2, %s747
      %p749 = pneg %p115
      %p750 = pneg %p112
      %p751 = scmp.lt.s32.totalorder %s40, 1
      %s752 = scalar_select %p751, %s40, 1
      %s753 = scalar_lea.vmem %s3, %s752
      %p754 = pneg %p141
      %p755 = pneg %p138
      %p756 = scmp.lt.s32.totalorder %s40, 1
      %s757 = scalar_select %p756, %s40, 1
      %s758 = smul.addr %s757, 4
      %s759 = smul.addr %s758, 4
      %s760 = scalar_lea.vmem %s4, %s759
      %p761 = pneg %p167
      %p762 = pneg %p164
      %p763 = scmp.lt.s32.totalorder %s40, 1
      %s764 = scalar_select %p763, %s40, 1
      %s765 = scalar_lea.vmem %s5, %s764
      %p766 = pneg %p193
      %p767 = pneg %p190
      %p768 = scmp.lt.s32.totalorder %s40, 1
      %s769 = scalar_select %p768, %s40, 1
      %s770 = smul.addr %s769, 4
      %s771 = smul.addr %s770, 4
      %s772 = scalar_lea.vmem %s6, %s771
      %p773 = pneg %p219
      %p774 = pneg %p216
      %p775 = scmp.lt.s32.totalorder %s40, 1
      %s776 = scalar_select %p775, %s40, 1
      %s777 = scalar_lea.vmem %s7, %s776
      %p778 = pneg %p245
      %p779 = pneg %p242
      %p780 = scmp.lt.s32.totalorder %s40, 1
      %s781 = scalar_select %p780, %s40, 1
      %s782 = scalar_lea.vmem %s8, %s781
      %p783 = pneg %p271
      %p784 = pneg %p268
      %p785 = scmp.lt.s32.totalorder %s40, 1
      %s786 = scalar_select %p785, %s40, 1
      %s787 = scalar_lea.vmem %s9, %s786
      %p788 = pneg %p297
      %p789 = pneg %p294
      %p790 = scmp.lt.s32.totalorder %s40, 1
      %s791 = scalar_select %p790, %s40, 1
      %s792 = smul.addr %s791, 4
      %s793 = smul.addr %s792, 4
      %s794 = scalar_lea.vmem %s10, %s793
      %p795 = pneg %p323
      %p796 = pneg %p320
      %p797 = scmp.lt.s32.totalorder %s40, 1
      %s798 = scalar_select %p797, %s40, 1
      %s799 = scalar_lea.vmem %s11, %s798
      %p800 = pneg %p349
      %p801 = pneg %p346
      %p802 = scmp.lt.s32.totalorder %s40, 1
      %s803 = scalar_select %p802, %s40, 1
      %s804 = smul.addr %s803, 16
      %s805 = smul.addr %s804, 4
      %s806 = scalar_lea.vmem %s12, %s805
      %p807 = pneg %p375
      %p808 = pneg %p372
      %p809 = scmp.lt.s32.totalorder %s40, 1
      %s810 = scalar_select %p809, %s40, 1
      %s811 = scalar_lea.vmem %s13, %s810
      %p812 = pneg %p401
      %p813 = pneg %p398
      %p814 = pneg %p422
      %p815 = pneg %p419
      %p816 = pneg %p443
      %p817 = pneg %p440
      %p818 = pneg %p464
      %p819 = pneg %p461
      %p820 = pneg %p485
      %p821 = pneg %p482
      %p822 = pneg %p506
      %p823 = pneg %p503
      %p824 = pneg %p527
      %p825 = pneg %p524
      %p826 = pneg %p548
      %p827 = pneg %p545
      %p828 = pneg %p569
      %p829 = pneg %p566
      %p830 = pneg %p595
      %p831 = pneg %p592
      %p832 = scmp.lt.s32.totalorder %s39, 1
      %s833 = scalar_select %p832, %s39, 1
      %s834 = scalar_lea.vmem %s22, %s833
      %s835 = smul.u32 2, %s39
      %p836 = scmp.lt.s32.totalorder %s835, 3
      %s837 = scalar_select %p836, %s835, 3
      %s838 = smul.addr %s837, 8
      %s839 = scalar_lea.vmem %s0, %s838
      %s840 = smul.u32 2, %s39
      %p841 = scmp.lt.s32.totalorder %s40, 1
      %s842 = scalar_select %p841, %s40, 1
      %s843 = scalar_lea.vmem %s2, %s842
      %p844 = scmp.lt.s32.totalorder %s40, 1
      %s845 = scalar_select %p844, %s40, 1
      %s846 = scalar_lea.vmem %s3, %s845
      %p847 = scmp.lt.s32.totalorder %s40, 1
      %s848 = scalar_select %p847, %s40, 1
      %s849 = smul.addr %s848, 4
      %s850 = smul.addr %s849, 4
      %s851 = scalar_lea.vmem %s4, %s850
      %p852 = scmp.lt.s32.totalorder %s40, 1
      %s853 = scalar_select %p852, %s40, 1
      %s854 = scalar_lea.vmem %s5, %s853
      %p855 = scmp.lt.s32.totalorder %s40, 1
      %s856 = scalar_select %p855, %s40, 1
      %s857 = smul.addr %s856, 4
      %s858 = smul.addr %s857, 4
      %s859 = scalar_lea.vmem %s6, %s858
      %p860 = scmp.lt.s32.totalorder %s40, 1
      %s861 = scalar_select %p860, %s40, 1
      %s862 = scalar_lea.vmem %s7, %s861
      %p863 = scmp.lt.s32.totalorder %s40, 1
      %s864 = scalar_select %p863, %s40, 1
      %s865 = scalar_lea.vmem %s8, %s864
      %p866 = scmp.lt.s32.totalorder %s40, 1
      %s867 = scalar_select %p866, %s40, 1
      %s868 = scalar_lea.vmem %s9, %s867
      %p869 = scmp.lt.s32.totalorder %s40, 1
      %s870 = scalar_select %p869, %s40, 1
      %s871 = smul.addr %s870, 4
      %s872 = smul.addr %s871, 4
      %s873 = scalar_lea.vmem %s10, %s872
      %p874 = scmp.lt.s32.totalorder %s40, 1
      %s875 = scalar_select %p874, %s40, 1
      %s876 = scalar_lea.vmem %s11, %s875
      %p877 = scmp.lt.s32.totalorder %s40, 1
      %s878 = scalar_select %p877, %s40, 1
      %s879 = smul.addr %s878, 16
      %s880 = smul.addr %s879, 4
      %s881 = scalar_lea.vmem %s12, %s880
      %p882 = scmp.lt.s32.totalorder %s40, 1
      %s883 = scalar_select %p882, %s40, 1
      %s884 = scalar_lea.vmem %s13, %s883
      %p885 = scmp.lt.s32.totalorder %s39, 1
      %s886 = scalar_select %p885, %s39, 1
      %s887 = scalar_lea.vmem %s22, %s886
      %p889 = scmp.eq.s32.totalorder %s40, 0
      // Predicated region
      $region109: #{forward.1} parent=107 // pred_check
        %p890 = pneg %p889
      $region110: #{forward.1} parent=107 // pred_check_branch
        %892 = sbr.rel (%p890) target = $region112
      $region111: #{forward.1} parent=107 // pred_region
        %v893 = vld [vmem:[%s839] sm:$0xff]
        %v894 = vld [vmem:[%s839 + $0x8] sm:$0xff]
        %v895 = vld [vmem:[%s1] sm:$0xff]
        %v896 = vadd.f32 %v893, %v895
        %v897 = vadd.f32 %v894, %v895
        %vm898 = vcmask 261120
        %899 = vst.msk [vmem:[#allocation2] sm:$0xff] %vm898, %v896
        %900 = vst.msk [vmem:[#allocation2 + $0x8] sm:$0xff] %vm898, %v897
      $region112: #{forward.1} parent=107 // pred_fallthru
        _
      %v901 = vld [vmem:[#allocation2] sm:$0xff]
      %v902 = vld [vmem:[#allocation2 + $0x8] sm:$0xff]
      %v903 = vld [vmem:[%s843] sm:$0x1]
      %v904 = vld [vmem:[%s846] sm:$0x1]
      %vm905 = vcmask 261120
      %v906 = vsel %vm905, %v901, 0.0
      %907 = vadd.xlane.f32.xlu0 %v906
      %v908 = vpop.xlane.xlu0 %907
      %v909 = vsel %vm905, %v902, 0.0
      %910 = vadd.xlane.f32.xlu0 %v909
      %v911 = vpop.xlane.xlu0 %910
      %v912 = vrcp.pop 32.0
      %v913 = vmul.f32 %v908, %v912
      %v914 = vmul.f32 %v911, %v912
      %v915 = vsub.f32 %v901, %v913
      %v916 = vsub.f32 %v902, %v914
      %v917 = vmul.f32 %v915, %v915
      %v918 = vmul.f32 %v916, %v916
      %v919 = vsel %vm905, %v917, 0.0
      %920 = vadd.xlane.f32.xlu0 %v919
      %v921 = vpop.xlane.xlu0 %920
      %v922 = vsel %vm905, %v918, 0.0
      %923 = vadd.xlane.f32.xlu0 %v922
      %v924 = vpop.xlane.xlu0 %923
      %v925 = vmul.f32 %v921, %v912
      %v926 = vmul.f32 %v924, %v912
      %v927 = vadd.f32 %v925, 1e-05
      %v928 = vadd.f32 %v926, 1e-05
      %v929 = vrsqrt.pop %v927
      %v930 = vrsqrt.pop %v928
      %v931 = vmul.f32 %v915, %v929
      %v932 = vmul.f32 %v916, %v930
      %v934 = vlaneseq
      %v935 = vshrl.u32 %v934, 7
      %v936 = vsub.s32 0, %v935
      %v937 = vrot.slane %v903, %v936
      %v939 = vmul.f32 %v931, %v937
      %v940 = vmul.f32 %v932, %v937
      %v942 = vlaneseq
      %v943 = vshrl.u32 %v942, 7
      %v944 = vsub.s32 0, %v943
      %v945 = vrot.slane %v904, %v944
      %v947 = vadd.f32 %v939, %v945
      %v948 = vadd.f32 %v940, %v945
      %v949 = vpack.c.bf16 %v948, %v947
      %v950 = vld [vmem:[%s851] sm:$0xf]
      %v951 = vld [vmem:[%s851 + $0x4] sm:$0xf]
      %v952 = vld [vmem:[%s851 + $0x8] sm:$0xf]
      %v953 = vld [vmem:[%s851 + $0xc] sm:$0xf]
      %v954 = vld [vmem:[%s854] sm:$0x1]
      %v956 = vlaneseq
      %v957 = vshrl.u32 %v956, 7
      %v958 = vsub.s32 0, %v957
      %v959 = vrot.slane %v954, %v958
      %v965 = vunpack.c.l.b16 %v950
      %v966 = vunpack.c.l.b16 %v951
      %v967 = vunpack.c.l.b16 %v952
      %v968 = vunpack.c.l.b16 %v953
      %v969 = vpack.c.b16 %v966, %v965
      %v970 = vpack.c.b16 %v968, %v967
      %v974 = vsel %vm905, %v949, 0
      %976 = vmatprep.subr.bf16.mxu0 0
      %977 = vmatpush1.bf16.msra.mxu0 %v969
      %978 = vmatprep.subr.bf16.mxu0 0
      %979 = vmatpush1.bf16.msra.mxu0 %v970
      %980 = vmatprep.subr.bf16.mxu0 0
      %981 = vmatpush1.bf16.msra.mxu0 0
      %982 = vmatprep.subr.bf16.mxu0 0
      %983 = vmatpush1.bf16.msra.mxu0 0
      %984 = vmatprep.subr.bf16.mxu0 0
      %985 = vmatpush1.bf16.msra.mxu0 0
      %986 = vmatprep.subr.bf16.mxu0 0
      %987 = vmatpush1.bf16.msra.mxu0 0
      %988 = vmatprep.subr.bf16.mxu0 0
      %989 = vmatpush1.bf16.msra.mxu0 0
      %990 = vmatprep.subr.bf16.mxu0 0
      %991 = vmatpush1.bf16.msra.mxu0 0
      %992 = vmatprep.subr.bf16.mxu0 0
      %993 = vmatpush1.bf16.msra.mxu0 0
      %994 = vmatprep.subr.bf16.mxu0 0
      %995 = vmatpush1.bf16.msra.mxu0 0
      %996 = vmatprep.subr.bf16.mxu0 0
      %997 = vmatpush1.bf16.msra.mxu0 0
      %998 = vmatprep.subr.bf16.mxu0 0
      %999 = vmatpush1.bf16.msra.mxu0 0
      %1000 = vmatprep.subr.bf16.mxu0 0
      %1001 = vmatpush1.bf16.msra.mxu0 0
      %1002 = vmatprep.subr.bf16.mxu0 0
      %1003 = vmatpush1.bf16.msra.mxu0 0
      %1004 = vmatprep.subr.bf16.mxu0 0
      %1005 = vmatpush1.bf16.msra.mxu0 0
      %1006 = vmatprep.subr.bf16.mxu0 0
      %1007 = vmatpush1.bf16.msra.mxu0 0
      %1008 = vmatprep.mubr.bf16.mxu0 0
      %1009 = vmatmul.mubr.bf16.gmra.mrb[0].mxu0 %v974
      %v1010 = vpop.f32.mrb[0].mxu0
      %v1011 = vadd.f32 %v959, %v1010
      %v1012 = vpop.f32.mrb[0].mxu0
      %v1013 = vpop.f32.mrb[0].mxu0
      %v1014 = vadd.f32 %v959, %v1013
      %v1015 = vpop.f32.mrb[0].mxu0
      %1016 = vdwg.mxu0
      %1019 = vrot.lane.b32.xlu0 %v1011, 120
      %v1020 = vpop.permute.xlu0 %1019
      %1021 = vrot.lane.b32.xlu0 %v1014, 120
      %v1022 = vpop.permute.xlu0 %1021
      %1025 = vrot.lane.b32.xlu0 %v1011, 112
      %v1026 = vpop.permute.xlu0 %1025
      %1027 = vrot.lane.b32.xlu0 %v1014, 112
      %v1028 = vpop.permute.xlu0 %1027
      %1031 = vrot.lane.b32.xlu0 %v1011, 104
      %v1032 = vpop.permute.xlu0 %1031
      %1033 = vrot.lane.b32.xlu0 %v1014, 104
      %v1034 = vpop.permute.xlu0 %1033
      %v1037 = vpack.c.bf16 %v1011, %v1011
      %v1038 = vpack.c.bf16 %v1014, %v1014
      %v1039 = vpack.c.bf16 %v1020, %v1020
      %v1040 = vpack.c.bf16 %v1022, %v1022
      %v1041 = vpack.c.bf16 %v1026, %v1026
      %v1042 = vpack.c.bf16 %v1028, %v1028
      %v1043 = vpack.c.bf16 %v1032, %v1032
      %v1044 = vpack.c.bf16 %v1034, %v1034
      %1046 = vrot.lane.b32.xlu0 %v1037, 96
      %v1047 = vpop.permute.xlu0 %1046
      %vm1048 = vcmask 64512
      %v1050 = vsel %vm1048, %v1037, 0
      %v1053 = vsel %vm1048, %v1047, 0
      %1055 = vmatprep.subr.bf16.mxu0 0
      %1056 = vmatpush1.bf16.xpose.msra.mxu0 %v1053
      %1057 = vmatprep.subr.bf16.mxu0 0
      %1058 = vmatpush1.bf16.xpose.msra.mxu0 0
      %1059 = vmatprep.subr.bf16.mxu0 0
      %1060 = vmatpush1.bf16.xpose.msra.mxu0 0
      %1061 = vmatprep.subr.bf16.mxu0 0
      %1062 = vmatpush1.bf16.xpose.msra.mxu0 0
      %1063 = vmatprep.subr.bf16.mxu0 0
      %1064 = vmatpush1.bf16.xpose.msra.mxu0 0
      %1065 = vmatprep.subr.bf16.mxu0 0
      %1066 = vmatpush1.bf16.xpose.msra.mxu0 0
      %1067 = vmatprep.subr.bf16.mxu0 0
      %1068 = vmatpush1.bf16.xpose.msra.mxu0 0
      %1069 = vmatprep.subr.bf16.mxu0 0
      %1070 = vmatpush1.bf16.xpose.msra.mxu0 0
      %1071 = vmatprep.subr.bf16.mxu0 0
      %1072 = vmatpush1.bf16.xpose.msra.mxu0 0
      %1073 = vmatprep.subr.bf16.mxu0 0
      %1074 = vmatpush1.bf16.xpose.msra.mxu0 0
      %1075 = vmatprep.subr.bf16.mxu0 0
      %1076 = vmatpush1.bf16.xpose.msra.mxu0 0
      %1077 = vmatprep.subr.bf16.mxu0 0
      %1078 = vmatpush1.bf16.xpose.msra.mxu0 0
      %1079 = vmatprep.subr.bf16.mxu0 0
      %1080 = vmatpush1.bf16.xpose.msra.mxu0 0
      %1081 = vmatprep.subr.bf16.mxu0 0
      %1082 = vmatpush1.bf16.xpose.msra.mxu0 0
      %1083 = vmatprep.subr.bf16.mxu0 0
      %1084 = vmatpush1.bf16.xpose.msra.mxu0 0
      %1085 = vmatprep.subr.bf16.mxu0 0
      %1086 = vmatpush1.bf16.xpose.msra.mxu0 0
      %1087 = vmatprep.mubr.bf16.mxu0 0
      %1088 = vmatmul.mubr.bf16.gmra.mrb[0].mxu0 %v1050
      %v1089 = vpop.f32.mrb[0].mxu0
      %v1090 = vadd.f32 0.0, %v1089
      %v1091 = vpop.f32.mrb[0].mxu0
      %v1092 = vpop.f32.mrb[0].mxu0
      %v1093 = vpop.f32.mrb[0].mxu0
      %1094 = vdwg.mxu0
      %1096 = vrot.lane.b32.xlu0 %v1038, 96
      %v1097 = vpop.permute.xlu0 %1096
      %v1099 = vsel %vm1048, %v1038, 0
      %v1102 = vsel %vm1048, %v1097, 0
      %1104 = vmatprep.subr.bf16.mxu0 0
      %1105 = vmatpush1.bf16.xpose.msra.mxu0 %v1102
      %1106 = vmatprep.subr.bf16.mxu0 0
      %1107 = vmatpush1.bf16.xpose.msra.mxu0 0
      %1108 = vmatprep.subr.bf16.mxu0 0
      %1109 = vmatpush1.bf16.xpose.msra.mxu0 0
      %1110 = vmatprep.subr.bf16.mxu0 0
      %1111 = vmatpush1.bf16.xpose.msra.mxu0 0
      %1112 = vmatprep.subr.bf16.mxu0 0
      %1113 = vmatpush1.bf16.xpose.msra.mxu0 0
      %1114 = vmatprep.subr.bf16.mxu0 0
      %1115 = vmatpush1.bf16.xpose.msra.mxu0 0
      %1116 = vmatprep.subr.bf16.mxu0 0
      %1117 = vmatpush1.bf16.xpose.msra.mxu0 0
      %1118 = vmatprep.subr.bf16.mxu0 0
      %1119 = vmatpush1.bf16.xpose.msra.mxu0 0
      %1120 = vmatprep.subr.bf16.mxu0 0
      %1121 = vmatpush1.bf16.xpose.msra.mxu0 0
      %1122 = vmatprep.subr.bf16.mxu0 0
      %1123 = vmatpush1.bf16.xpose.msra.mxu0 0
      %1124 = vmatprep.subr.bf16.mxu0 0
      %1125 = vmatpush1.bf16.xpose.msra.mxu0 0
      %1126 = vmatprep.subr.bf16.mxu0 0
      %1127 = vmatpush1.bf16.xpose.msra.mxu0 0
      %1128 = vmatprep.subr.bf16.mxu0 0
      %1129 = vmatpush1.bf16.xpose.msra.mxu0 0
      %1130 = vmatprep.subr.bf16.mxu0 0
      %1131 = vmatpush1.bf16.xpose.msra.mxu0 0
      %1132 = vmatprep.subr.bf16.mxu0 0
      %1133 = vmatpush1.bf16.xpose.msra.mxu0 0
      %1134 = vmatprep.subr.bf16.mxu0 0
      %1135 = vmatpush1.bf16.xpose.msra.mxu0 0
      %1136 = vmatprep.mubr.bf16.mxu0 0
      %1137 = vmatmul.mubr.bf16.gmra.mrb[0].mxu0 %v1099
      %v1138 = vpop.f32.mrb[0].mxu0
      %v1139 = vadd.f32 0.0, %v1138
      %v1140 = vpop.f32.mrb[0].mxu0
      %v1141 = vpop.f32.mrb[0].mxu0
      %v1142 = vpop.f32.mrb[0].mxu0
      %1143 = vdwg.mxu0
      %1145 = vrot.lane.b32.xlu0 %v1039, 96
      %v1146 = vpop.permute.xlu0 %1145
      %v1148 = vsel %vm1048, %v1039, 0
      %v1151 = vsel %vm1048, %v1146, 0
      %1153 = vmatprep.subr.bf16.mxu0 0
      %1154 = vmatpush1.bf16.xpose.msra.mxu0 %v1151
      %1155 = vmatprep.subr.bf16.mxu0 0
      %1156 = vmatpush1.bf16.xpose.msra.mxu0 0
      %1157 = vmatprep.subr.bf16.mxu0 0
      %1158 = vmatpush1.bf16.xpose.msra.mxu0 0
      %1159 = vmatprep.subr.bf16.mxu0 0
      %1160 = vmatpush1.bf16.xpose.msra.mxu0 0
      %1161 = vmatprep.subr.bf16.mxu0 0
      %1162 = vmatpush1.bf16.xpose.msra.mxu0 0
      %1163 = vmatprep.subr.bf16.mxu0 0
      %1164 = vmatpush1.bf16.xpose.msra.mxu0 0
      %1165 = vmatprep.subr.bf16.mxu0 0
      %1166 = vmatpush1.bf16.xpose.msra.mxu0 0
      %1167 = vmatprep.subr.bf16.mxu0 0
      %1168 = vmatpush1.bf16.xpose.msra.mxu0 0
      %1169 = vmatprep.subr.bf16.mxu0 0
      %1170 = vmatpush1.bf16.xpose.msra.mxu0 0
      %1171 = vmatprep.subr.bf16.mxu0 0
      %1172 = vmatpush1.bf16.xpose.msra.mxu0 0
      %1173 = vmatprep.subr.bf16.mxu0 0
      %1174 = vmatpush1.bf16.xpose.msra.mxu0 0
      %1175 = vmatprep.subr.bf16.mxu0 0
      %1176 = vmatpush1.bf16.xpose.msra.mxu0 0
      %1177 = vmatprep.subr.bf16.mxu0 0
      %1178 = vmatpush1.bf16.xpose.msra.mxu0 0
      %1179 = vmatprep.subr.bf16.mxu0 0
      %1180 = vmatpush1.bf16.xpose.msra.mxu0 0
      %1181 = vmatprep.subr.bf16.mxu0 0
      %1182 = vmatpush1.bf16.xpose.msra.mxu0 0
      %1183 = vmatprep.subr.bf16.mxu0 0
      %1184 = vmatpush1.bf16.xpose.msra.mxu0 0
      %1185 = vmatprep.mubr.bf16.mxu0 0
      %1186 = vmatmul.mubr.bf16.gmra.mrb[0].mxu0 %v1148
      %v1187 = vpop.f32.mrb[0].mxu0
      %v1188 = vadd.f32 0.0, %v1187
      %v1189 = vpop.f32.mrb[0].mxu0
      %v1190 = vpop.f32.mrb[0].mxu0
      %v1191 = vpop.f32.mrb[0].mxu0
      %1192 = vdwg.mxu0
      %1194 = vrot.lane.b32.xlu0 %v1040, 96
      %v1195 = vpop.permute.xlu0 %1194
      %v1197 = vsel %vm1048, %v1040, 0
      %v1200 = vsel %vm1048, %v1195, 0
      %1202 = vmatprep.subr.bf16.mxu0 0
      %1203 = vmatpush1.bf16.xpose.msra.mxu0 %v1200
      %1204 = vmatprep.subr.bf16.mxu0 0
      %1205 = vmatpush1.bf16.xpose.msra.mxu0 0
      %1206 = vmatprep.subr.bf16.mxu0 0
      %1207 = vmatpush1.bf16.xpose.msra.mxu0 0
      %1208 = vmatprep.subr.bf16.mxu0 0
      %1209 = vmatpush1.bf16.xpose.msra.mxu0 0
      %1210 = vmatprep.subr.bf16.mxu0 0
      %1211 = vmatpush1.bf16.xpose.msra.mxu0 0
      %1212 = vmatprep.subr.bf16.mxu0 0
      %1213 = vmatpush1.bf16.xpose.msra.mxu0 0
      %1214 = vmatprep.subr.bf16.mxu0 0
      %1215 = vmatpush1.bf16.xpose.msra.mxu0 0
      %1216 = vmatprep.subr.bf16.mxu0 0
      %1217 = vmatpush1.bf16.xpose.msra.mxu0 0
      %1218 = vmatprep.subr.bf16.mxu0 0
      %1219 = vmatpush1.bf16.xpose.msra.mxu0 0
      %1220 = vmatprep.subr.bf16.mxu0 0
      %1221 = vmatpush1.bf16.xpose.msra.mxu0 0
      %1222 = vmatprep.subr.bf16.mxu0 0
      %1223 = vmatpush1.bf16.xpose.msra.mxu0 0
      %1224 = vmatprep.subr.bf16.mxu0 0
      %1225 = vmatpush1.bf16.xpose.msra.mxu0 0
      %1226 = vmatprep.subr.bf16.mxu0 0
      %1227 = vmatpush1.bf16.xpose.msra.mxu0 0
      %1228 = vmatprep.subr.bf16.mxu0 0
      %1229 = vmatpush1.bf16.xpose.msra.mxu0 0
      %1230 = vmatprep.subr.bf16.mxu0 0
      %1231 = vmatpush1.bf16.xpose.msra.mxu0 0
      %1232 = vmatprep.subr.bf16.mxu0 0
      %1233 = vmatpush1.bf16.xpose.msra.mxu0 0
      %1234 = vmatprep.mubr.bf16.mxu0 0
      %1235 = vmatmul.mubr.bf16.gmra.mrb[0].mxu0 %v1197
      %v1236 = vpop.f32.mrb[0].mxu0
      %v1237 = vadd.f32 0.0, %v1236
      %v1238 = vpop.f32.mrb[0].mxu0
      %v1239 = vpop.f32.mrb[0].mxu0
      %v1240 = vpop.f32.mrb[0].mxu0
      %1241 = vdwg.mxu0
      %1243 = vrot.lane.b32.xlu0 %v1041, 96
      %v1244 = vpop.permute.xlu0 %1243
      %v1246 = vsel %vm1048, %v1041, 0
      %v1249 = vsel %vm1048, %v1244, 0
      %1251 = vmatprep.subr.bf16.mxu0 0
      %1252 = vmatpush1.bf16.xpose.msra.mxu0 %v1249
      %1253 = vmatprep.subr.bf16.mxu0 0
      %1254 = vmatpush1.bf16.xpose.msra.mxu0 0
      %1255 = vmatprep.subr.bf16.mxu0 0
      %1256 = vmatpush1.bf16.xpose.msra.mxu0 0
      %1257 = vmatprep.subr.bf16.mxu0 0
      %1258 = vmatpush1.bf16.xpose.msra.mxu0 0
      %1259 = vmatprep.subr.bf16.mxu0 0
      %1260 = vmatpush1.bf16.xpose.msra.mxu0 0
      %1261 = vmatprep.subr.bf16.mxu0 0
      %1262 = vmatpush1.bf16.xpose.msra.mxu0 0
      %1263 = vmatprep.subr.bf16.mxu0 0
      %1264 = vmatpush1.bf16.xpose.msra.mxu0 0
      %1265 = vmatprep.subr.bf16.mxu0 0
      %1266 = vmatpush1.bf16.xpose.msra.mxu0 0
      %1267 = vmatprep.subr.bf16.mxu0 0
      %1268 = vmatpush1.bf16.xpose.msra.mxu0 0
      %1269 = vmatprep.subr.bf16.mxu0 0
      %1270 = vmatpush1.bf16.xpose.msra.mxu0 0
      %1271 = vmatprep.subr.bf16.mxu0 0
      %1272 = vmatpush1.bf16.xpose.msra.mxu0 0
      %1273 = vmatprep.subr.bf16.mxu0 0
      %1274 = vmatpush1.bf16.xpose.msra.mxu0 0
      %1275 = vmatprep.subr.bf16.mxu0 0
      %1276 = vmatpush1.bf16.xpose.msra.mxu0 0
      %1277 = vmatprep.subr.bf16.mxu0 0
      %1278 = vmatpush1.bf16.xpose.msra.mxu0 0
      %1279 = vmatprep.subr.bf16.mxu0 0
      %1280 = vmatpush1.bf16.xpose.msra.mxu0 0
      %1281 = vmatprep.subr.bf16.mxu0 0
      %1282 = vmatpush1.bf16.xpose.msra.mxu0 0
      %1283 = vmatprep.mubr.bf16.mxu0 0
      %1284 = vmatmul.mubr.bf16.gmra.mrb[0].mxu0 %v1246
      %v1285 = vpop.f32.mrb[0].mxu0
      %v1286 = vadd.f32 0.0, %v1285
      %v1287 = vpop.f32.mrb[0].mxu0
      %v1288 = vpop.f32.mrb[0].mxu0
      %v1289 = vpop.f32.mrb[0].mxu0
      %1290 = vdwg.mxu0
      %1292 = vrot.lane.b32.xlu0 %v1042, 96
      %v1293 = vpop.permute.xlu0 %1292
      %v1295 = vsel %vm1048, %v1042, 0
      %v1298 = vsel %vm1048, %v1293, 0
      %1300 = vmatprep.subr.bf16.mxu0 0
      %1301 = vmatpush1.bf16.xpose.msra.mxu0 %v1298
      %1302 = vmatprep.subr.bf16.mxu0 0
      %1303 = vmatpush1.bf16.xpose.msra.mxu0 0
      %1304 = vmatprep.subr.bf16.mxu0 0
      %1305 = vmatpush1.bf16.xpose.msra.mxu0 0
      %1306 = vmatprep.subr.bf16.mxu0 0
      %1307 = vmatpush1.bf16.xpose.msra.mxu0 0
      %1308 = vmatprep.subr.bf16.mxu0 0
      %1309 = vmatpush1.bf16.xpose.msra.mxu0 0
      %1310 = vmatprep.subr.bf16.mxu0 0
      %1311 = vmatpush1.bf16.xpose.msra.mxu0 0
      %1312 = vmatprep.subr.bf16.mxu0 0
      %1313 = vmatpush1.bf16.xpose.msra.mxu0 0
      %1314 = vmatprep.subr.bf16.mxu0 0
      %1315 = vmatpush1.bf16.xpose.msra.mxu0 0
      %1316 = vmatprep.subr.bf16.mxu0 0
      %1317 = vmatpush1.bf16.xpose.msra.mxu0 0
      %1318 = vmatprep.subr.bf16.mxu0 0
      %1319 = vmatpush1.bf16.xpose.msra.mxu0 0
      %1320 = vmatprep.subr.bf16.mxu0 0
      %1321 = vmatpush1.bf16.xpose.msra.mxu0 0
      %1322 = vmatprep.subr.bf16.mxu0 0
      %1323 = vmatpush1.bf16.xpose.msra.mxu0 0
      %1324 = vmatprep.subr.bf16.mxu0 0
      %1325 = vmatpush1.bf16.xpose.msra.mxu0 0
      %1326 = vmatprep.subr.bf16.mxu0 0
      %1327 = vmatpush1.bf16.xpose.msra.mxu0 0
      %1328 = vmatprep.subr.bf16.mxu0 0
      %1329 = vmatpush1.bf16.xpose.msra.mxu0 0
      %1330 = vmatprep.subr.bf16.mxu0 0
      %1331 = vmatpush1.bf16.xpose.msra.mxu0 0
      %1332 = vmatprep.mubr.bf16.mxu0 0
      %1333 = vmatmul.mubr.bf16.gmra.mrb[0].mxu0 %v1295
      %v1334 = vpop.f32.mrb[0].mxu0
      %v1335 = vadd.f32 0.0, %v1334
      %v1336 = vpop.f32.mrb[0].mxu0
      %v1337 = vpop.f32.mrb[0].mxu0
      %v1338 = vpop.f32.mrb[0].mxu0
      %1339 = vdwg.mxu0
      %1341 = vrot.lane.b32.xlu0 %v1043, 96
      %v1342 = vpop.permute.xlu0 %1341
      %v1344 = vsel %vm1048, %v1043, 0
      %v1347 = vsel %vm1048, %v1342, 0
      %1349 = vmatprep.subr.bf16.mxu0 0
      %1350 = vmatpush1.bf16.xpose.msra.mxu0 %v1347
      %1351 = vmatprep.subr.bf16.mxu0 0
      %1352 = vmatpush1.bf16.xpose.msra.mxu0 0
      %1353 = vmatprep.subr.bf16.mxu0 0
      %1354 = vmatpush1.bf16.xpose.msra.mxu0 0
      %1355 = vmatprep.subr.bf16.mxu0 0
      %1356 = vmatpush1.bf16.xpose.msra.mxu0 0
      %1357 = vmatprep.subr.bf16.mxu0 0
      %1358 = vmatpush1.bf16.xpose.msra.mxu0 0
      %1359 = vmatprep.subr.bf16.mxu0 0
      %1360 = vmatpush1.bf16.xpose.msra.mxu0 0
      %1361 = vmatprep.subr.bf16.mxu0 0
      %1362 = vmatpush1.bf16.xpose.msra.mxu0 0
      %1363 = vmatprep.subr.bf16.mxu0 0
      %1364 = vmatpush1.bf16.xpose.msra.mxu0 0
      %1365 = vmatprep.subr.bf16.mxu0 0
      %1366 = vmatpush1.bf16.xpose.msra.mxu0 0
      %1367 = vmatprep.subr.bf16.mxu0 0
      %1368 = vmatpush1.bf16.xpose.msra.mxu0 0
      %1369 = vmatprep.subr.bf16.mxu0 0
      %1370 = vmatpush1.bf16.xpose.msra.mxu0 0
      %1371 = vmatprep.subr.bf16.mxu0 0
      %1372 = vmatpush1.bf16.xpose.msra.mxu0 0
      %1373 = vmatprep.subr.bf16.mxu0 0
      %1374 = vmatpush1.bf16.xpose.msra.mxu0 0
      %1375 = vmatprep.subr.bf16.mxu0 0
      %1376 = vmatpush1.bf16.xpose.msra.mxu0 0
      %1377 = vmatprep.subr.bf16.mxu0 0
      %1378 = vmatpush1.bf16.xpose.msra.mxu0 0
      %1379 = vmatprep.subr.bf16.mxu0 0
      %1380 = vmatpush1.bf16.xpose.msra.mxu0 0
      %1381 = vmatprep.mubr.bf16.mxu0 0
      %1382 = vmatmul.mubr.bf16.gmra.mrb[0].mxu0 %v1344
      %v1383 = vpop.f32.mrb[0].mxu0
      %v1384 = vadd.f32 0.0, %v1383
      %v1385 = vpop.f32.mrb[0].mxu0
      %v1386 = vpop.f32.mrb[0].mxu0
      %v1387 = vpop.f32.mrb[0].mxu0
      %1388 = vdwg.mxu0
      %1390 = vrot.lane.b32.xlu0 %v1044, 96
      %v1391 = vpop.permute.xlu0 %1390
      %v1393 = vsel %vm1048, %v1044, 0
      %v1396 = vsel %vm1048, %v1391, 0
      %1398 = vmatprep.subr.bf16.mxu0 0
      %1399 = vmatpush1.bf16.xpose.msra.mxu0 %v1396
      %1400 = vmatprep.subr.bf16.mxu0 0
      %1401 = vmatpush1.bf16.xpose.msra.mxu0 0
      %1402 = vmatprep.subr.bf16.mxu0 0
      %1403 = vmatpush1.bf16.xpose.msra.mxu0 0
      %1404 = vmatprep.subr.bf16.mxu0 0
      %1405 = vmatpush1.bf16.xpose.msra.mxu0 0
      %1406 = vmatprep.subr.bf16.mxu0 0
      %1407 = vmatpush1.bf16.xpose.msra.mxu0 0
      %1408 = vmatprep.subr.bf16.mxu0 0
      %1409 = vmatpush1.bf16.xpose.msra.mxu0 0
      %1410 = vmatprep.subr.bf16.mxu0 0
      %1411 = vmatpush1.bf16.xpose.msra.mxu0 0
      %1412 = vmatprep.subr.bf16.mxu0 0
      %1413 = vmatpush1.bf16.xpose.msra.mxu0 0
      %1414 = vmatprep.subr.bf16.mxu0 0
      %1415 = vmatpush1.bf16.xpose.msra.mxu0 0
      %1416 = vmatprep.subr.bf16.mxu0 0
      %1417 = vmatpush1.bf16.xpose.msra.mxu0 0
      %1418 = vmatprep.subr.bf16.mxu0 0
      %1419 = vmatpush1.bf16.xpose.msra.mxu0 0
      %1420 = vmatprep.subr.bf16.mxu0 0
      %1421 = vmatpush1.bf16.xpose.msra.mxu0 0
      %1422 = vmatprep.subr.bf16.mxu0 0
      %1423 = vmatpush1.bf16.xpose.msra.mxu0 0
      %1424 = vmatprep.subr.bf16.mxu0 0
      %1425 = vmatpush1.bf16.xpose.msra.mxu0 0
      %1426 = vmatprep.subr.bf16.mxu0 0
      %1427 = vmatpush1.bf16.xpose.msra.mxu0 0
      %1428 = vmatprep.subr.bf16.mxu0 0
      %1429 = vmatpush1.bf16.xpose.msra.mxu0 0
      %1430 = vmatprep.mubr.bf16.mxu0 0
      %1431 = vmatmul.mubr.bf16.gmra.mrb[0].mxu0 %v1393
      %v1432 = vpop.f32.mrb[0].mxu0
      %v1433 = vadd.f32 0.0, %v1432
      %v1434 = vpop.f32.mrb[0].mxu0
      %v1435 = vpop.f32.mrb[0].mxu0
      %v1436 = vpop.f32.mrb[0].mxu0
      %1437 = vdwg.mxu0
      %v1438 = vmul.f32 %v1090, 0.35355338
      %v1439 = vmul.f32 %v1139, 0.35355338
      %v1440 = vmul.f32 %v1188, 0.35355338
      %v1441 = vmul.f32 %v1237, 0.35355338
      %v1442 = vmul.f32 %v1286, 0.35355338
      %v1443 = vmul.f32 %v1335, 0.35355338
      %v1444 = vmul.f32 %v1384, 0.35355338
      %v1445 = vmul.f32 %v1433, 0.35355338
      %v1446 = vsel %vm1048, %v1438, -inf
      %1447 = vmax.xlane.f32.xlu0 %v1446
      %v1448 = vpop.xlane.xlu0 %1447
      %v1449 = vsel %vm1048, %v1439, -inf
      %1450 = vmax.xlane.f32.xlu0 %v1449
      %v1451 = vpop.xlane.xlu0 %1450
      %v1452 = vsel %vm1048, %v1440, -inf
      %1453 = vmax.xlane.f32.xlu0 %v1452
      %v1454 = vpop.xlane.xlu0 %1453
      %v1455 = vsel %vm1048, %v1441, -inf
      %1456 = vmax.xlane.f32.xlu0 %v1455
      %v1457 = vpop.xlane.xlu0 %1456
      %v1458 = vsel %vm1048, %v1442, -inf
      %1459 = vmax.xlane.f32.xlu0 %v1458
      %v1460 = vpop.xlane.xlu0 %1459
      %v1461 = vsel %vm1048, %v1443, -inf
      %1462 = vmax.xlane.f32.xlu0 %v1461
      %v1463 = vpop.xlane.xlu0 %1462
      %v1464 = vsel %vm1048, %v1444, -inf
      %1465 = vmax.xlane.f32.xlu0 %v1464
      %v1466 = vpop.xlane.xlu0 %1465
      %v1467 = vsel %vm1048, %v1445, -inf
      %1468 = vmax.xlane.f32.xlu0 %v1467
      %v1469 = vpop.xlane.xlu0 %1468
      %v1470 = vsub.f32 %v1438, %v1448
      %v1471 = vsub.f32 %v1439, %v1451
      %v1472 = vsub.f32 %v1440, %v1454
      %v1473 = vsub.f32 %v1441, %v1457
      %v1474 = vsub.f32 %v1442, %v1460
      %v1475 = vsub.f32 %v1443, %v1463
      %v1476 = vsub.f32 %v1444, %v1466
      %v1477 = vsub.f32 %v1445, %v1469
      %v1478 = vmul.f32 %v1470, 1.442695
      %v1479 = vpow.pop %v1478
      %v1480 = vmul.f32 %v1471, 1.442695
      %v1481 = vpow.pop %v1480
      %v1482 = vmul.f32 %v1472, 1.442695
      %v1483 = vpow.pop %v1482
      %v1484 = vmul.f32 %v1473, 1.442695
      %v1485 = vpow.pop %v1484
      %v1486 = vmul.f32 %v1474, 1.442695
      %v1487 = vpow.pop %v1486
      %v1488 = vmul.f32 %v1475, 1.442695
      %v1489 = vpow.pop %v1488
      %v1490 = vmul.f32 %v1476, 1.442695
      %v1491 = vpow.pop %v1490
      %v1492 = vmul.f32 %v1477, 1.442695
      %v1493 = vpow.pop %v1492
      %v1494 = vsel %vm1048, %v1479, 0.0
      %1495 = vadd.xlane.f32.xlu0 %v1494
      %v1496 = vpop.xlane.xlu0 %1495
      %v1497 = vsel %vm1048, %v1481, 0.0
      %1498 = vadd.xlane.f32.xlu0 %v1497
      %v1499 = vpop.xlane.xlu0 %1498
      %v1500 = vsel %vm1048, %v1483, 0.0
      %1501 = vadd.xlane.f32.xlu0 %v1500
      %v1502 = vpop.xlane.xlu0 %1501
      %v1503 = vsel %vm1048, %v1485, 0.0
      %1504 = vadd.xlane.f32.xlu0 %v1503
      %v1505 = vpop.xlane.xlu0 %1504
      %v1506 = vsel %vm1048, %v1487, 0.0
      %1507 = vadd.xlane.f32.xlu0 %v1506
      %v1508 = vpop.xlane.xlu0 %1507
      %v1509 = vsel %vm1048, %v1489, 0.0
      %1510 = vadd.xlane.f32.xlu0 %v1509
      %v1511 = vpop.xlane.xlu0 %1510
      %v1512 = vsel %vm1048, %v1491, 0.0
      %1513 = vadd.xlane.f32.xlu0 %v1512
      %v1514 = vpop.xlane.xlu0 %1513
      %v1515 = vsel %vm1048, %v1493, 0.0
      %1516 = vadd.xlane.f32.xlu0 %v1515
      %v1517 = vpop.xlane.xlu0 %1516
      %v1518 = vrcp.pop %v1496
      %v1519 = vrcp.pop %v1499
      %v1520 = vrcp.pop %v1502
      %v1521 = vrcp.pop %v1505
      %v1522 = vrcp.pop %v1508
      %v1523 = vrcp.pop %v1511
      %v1524 = vrcp.pop %v1514
      %v1525 = vrcp.pop %v1517
      %v1526 = vmul.f32 %v1479, %v1518
      %v1527 = vmul.f32 %v1481, %v1519
      %v1528 = vmul.f32 %v1483, %v1520
      %v1529 = vmul.f32 %v1485, %v1521
      %v1530 = vmul.f32 %v1487, %v1522
      %v1531 = vmul.f32 %v1489, %v1523
      %v1532 = vmul.f32 %v1491, %v1524
      %v1533 = vmul.f32 %v1493, %v1525
      %v1534 = vpack.c.bf16 %v1526, %v1526
      %v1535 = vpack.c.bf16 %v1527, %v1527
      %v1536 = vpack.c.bf16 %v1528, %v1528
      %v1537 = vpack.c.bf16 %v1529, %v1529
      %v1538 = vpack.c.bf16 %v1530, %v1530
      %v1539 = vpack.c.bf16 %v1531, %v1531
      %v1540 = vpack.c.bf16 %v1532, %v1532
      %v1541 = vpack.c.bf16 %v1533, %v1533
      %1542 = vrot.lane.b32.xlu0 %v1037, 64
      %v1543 = vpop.permute.xlu0 %1542
      %v1545 = vsel %vm1048, %v1534, 0
      %vm1547 = vcmask 1043456
      %v1549 = vsel %vm1547, %v1543, 0
      %1551 = vmatprep.subr.bf16.mxu0 0
      %1552 = vmatpush1.bf16.msra.mxu0 %v1549
      %1553 = vmatprep.subr.bf16.mxu0 0
      %1554 = vmatpush1.bf16.msra.mxu0 0
      %1555 = vmatprep.subr.bf16.mxu0 0
      %1556 = vmatpush1.bf16.msra.mxu0 0
      %1557 = vmatprep.subr.bf16.mxu0 0
      %1558 = vmatpush1.bf16.msra.mxu0 0
      %1559 = vmatprep.subr.bf16.mxu0 0
      %1560 = vmatpush1.bf16.msra.mxu0 0
      %1561 = vmatprep.subr.bf16.mxu0 0
      %1562 = vmatpush1.bf16.msra.mxu0 0
      %1563 = vmatprep.subr.bf16.mxu0 0
      %1564 = vmatpush1.bf16.msra.mxu0 0
      %1565 = vmatprep.subr.bf16.mxu0 0
      %1566 = vmatpush1.bf16.msra.mxu0 0
      %1567 = vmatprep.subr.bf16.mxu0 0
      %1568 = vmatpush1.bf16.msra.mxu0 0
      %1569 = vmatprep.subr.bf16.mxu0 0
      %1570 = vmatpush1.bf16.msra.mxu0 0
      %1571 = vmatprep.subr.bf16.mxu0 0
      %1572 = vmatpush1.bf16.msra.mxu0 0
      %1573 = vmatprep.subr.bf16.mxu0 0
      %1574 = vmatpush1.bf16.msra.mxu0 0
      %1575 = vmatprep.subr.bf16.mxu0 0
      %1576 = vmatpush1.bf16.msra.mxu0 0
      %1577 = vmatprep.subr.bf16.mxu0 0
      %1578 = vmatpush1.bf16.msra.mxu0 0
      %1579 = vmatprep.subr.bf16.mxu0 0
      %1580 = vmatpush1.bf16.msra.mxu0 0
      %1581 = vmatprep.subr.bf16.mxu0 0
      %1582 = vmatpush1.bf16.msra.mxu0 0
      %1583 = vmatprep.mubr.bf16.mxu0 0
      %1584 = vmatmul.mubr.bf16.gmra.mrb[0].mxu0 %v1545
      %v1585 = vpop.f32.mrb[0].mxu0
      %v1586 = vadd.f32 0.0, %v1585
      %v1587 = vpop.f32.mrb[0].mxu0
      %v1588 = vpop.f32.mrb[0].mxu0
      %v1589 = vpop.f32.mrb[0].mxu0
      %1590 = vdwg.mxu0
      %1591 = vrot.lane.b32.xlu0 %v1038, 64
      %v1592 = vpop.permute.xlu0 %1591
      %v1594 = vsel %vm1048, %v1535, 0
      %v1597 = vsel %vm1547, %v1592, 0
      %1599 = vmatprep.subr.bf16.mxu0 0
      %1600 = vmatpush1.bf16.msra.mxu0 %v1597
      %1601 = vmatprep.subr.bf16.mxu0 0
      %1602 = vmatpush1.bf16.msra.mxu0 0
      %1603 = vmatprep.subr.bf16.mxu0 0
      %1604 = vmatpush1.bf16.msra.mxu0 0
      %1605 = vmatprep.subr.bf16.mxu0 0
      %1606 = vmatpush1.bf16.msra.mxu0 0
      %1607 = vmatprep.subr.bf16.mxu0 0
      %1608 = vmatpush1.bf16.msra.mxu0 0
      %1609 = vmatprep.subr.bf16.mxu0 0
      %1610 = vmatpush1.bf16.msra.mxu0 0
      %1611 = vmatprep.subr.bf16.mxu0 0
      %1612 = vmatpush1.bf16.msra.mxu0 0
      %1613 = vmatprep.subr.bf16.mxu0 0
      %1614 = vmatpush1.bf16.msra.mxu0 0
      %1615 = vmatprep.subr.bf16.mxu0 0
      %1616 = vmatpush1.bf16.msra.mxu0 0
      %1617 = vmatprep.subr.bf16.mxu0 0
      %1618 = vmatpush1.bf16.msra.mxu0 0
      %1619 = vmatprep.subr.bf16.mxu0 0
      %1620 = vmatpush1.bf16.msra.mxu0 0
      %1621 = vmatprep.subr.bf16.mxu0 0
      %1622 = vmatpush1.bf16.msra.mxu0 0
      %1623 = vmatprep.subr.bf16.mxu0 0
      %1624 = vmatpush1.bf16.msra.mxu0 0
      %1625 = vmatprep.subr.bf16.mxu0 0
      %1626 = vmatpush1.bf16.msra.mxu0 0
      %1627 = vmatprep.subr.bf16.mxu0 0
      %1628 = vmatpush1.bf16.msra.mxu0 0
      %1629 = vmatprep.subr.bf16.mxu0 0
      %1630 = vmatpush1.bf16.msra.mxu0 0
      %1631 = vmatprep.mubr.bf16.mxu0 0
      %1632 = vmatmul.mubr.bf16.gmra.mrb[0].mxu0 %v1594
      %v1633 = vpop.f32.mrb[0].mxu0
      %v1634 = vadd.f32 0.0, %v1633
      %v1635 = vpop.f32.mrb[0].mxu0
      %v1636 = vpop.f32.mrb[0].mxu0
      %v1637 = vpop.f32.mrb[0].mxu0
      %1638 = vdwg.mxu0
      %1639 = vrot.lane.b32.xlu0 %v1039, 64
      %v1640 = vpop.permute.xlu0 %1639
      %v1642 = vsel %vm1048, %v1536, 0
      %v1645 = vsel %vm1547, %v1640, 0
      %1647 = vmatprep.subr.bf16.mxu0 0
      %1648 = vmatpush1.bf16.msra.mxu0 %v1645
      %1649 = vmatprep.subr.bf16.mxu0 0
      %1650 = vmatpush1.bf16.msra.mxu0 0
      %1651 = vmatprep.subr.bf16.mxu0 0
      %1652 = vmatpush1.bf16.msra.mxu0 0
      %1653 = vmatprep.subr.bf16.mxu0 0
      %1654 = vmatpush1.bf16.msra.mxu0 0
      %1655 = vmatprep.subr.bf16.mxu0 0
      %1656 = vmatpush1.bf16.msra.mxu0 0
      %1657 = vmatprep.subr.bf16.mxu0 0
      %1658 = vmatpush1.bf16.msra.mxu0 0
      %1659 = vmatprep.subr.bf16.mxu0 0
      %1660 = vmatpush1.bf16.msra.mxu0 0
      %1661 = vmatprep.subr.bf16.mxu0 0
      %1662 = vmatpush1.bf16.msra.mxu0 0
      %1663 = vmatprep.subr.bf16.mxu0 0
      %1664 = vmatpush1.bf16.msra.mxu0 0
      %1665 = vmatprep.subr.bf16.mxu0 0
      %1666 = vmatpush1.bf16.msra.mxu0 0
      %1667 = vmatprep.subr.bf16.mxu0 0
      %1668 = vmatpush1.bf16.msra.mxu0 0
      %1669 = vmatprep.subr.bf16.mxu0 0
      %1670 = vmatpush1.bf16.msra.mxu0 0
      %1671 = vmatprep.subr.bf16.mxu0 0
      %1672 = vmatpush1.bf16.msra.mxu0 0
      %1673 = vmatprep.subr.bf16.mxu0 0
      %1674 = vmatpush1.bf16.msra.mxu0 0
      %1675 = vmatprep.subr.bf16.mxu0 0
      %1676 = vmatpush1.bf16.msra.mxu0 0
      %1677 = vmatprep.subr.bf16.mxu0 0
      %1678 = vmatpush1.bf16.msra.mxu0 0
      %1679 = vmatprep.mubr.bf16.mxu0 0
      %1680 = vmatmul.mubr.bf16.gmra.mrb[0].mxu0 %v1642
      %v1681 = vpop.f32.mrb[0].mxu0
      %v1682 = vadd.f32 0.0, %v1681
      %v1683 = vpop.f32.mrb[0].mxu0
      %v1684 = vpop.f32.mrb[0].mxu0
      %v1685 = vpop.f32.mrb[0].mxu0
      %1686 = vdwg.mxu0
      %1687 = vrot.lane.b32.xlu0 %v1040, 64
      %v1688 = vpop.permute.xlu0 %1687
      %v1690 = vsel %vm1048, %v1537, 0
      %v1693 = vsel %vm1547, %v1688, 0
      %1695 = vmatprep.subr.bf16.mxu0 0
      %1696 = vmatpush1.bf16.msra.mxu0 %v1693
      %1697 = vmatprep.subr.bf16.mxu0 0
      %1698 = vmatpush1.bf16.msra.mxu0 0
      %1699 = vmatprep.subr.bf16.mxu0 0
      %1700 = vmatpush1.bf16.msra.mxu0 0
      %1701 = vmatprep.subr.bf16.mxu0 0
      %1702 = vmatpush1.bf16.msra.mxu0 0
      %1703 = vmatprep.subr.bf16.mxu0 0
      %1704 = vmatpush1.bf16.msra.mxu0 0
      %1705 = vmatprep.subr.bf16.mxu0 0
      %1706 = vmatpush1.bf16.msra.mxu0 0
      %1707 = vmatprep.subr.bf16.mxu0 0
      %1708 = vmatpush1.bf16.msra.mxu0 0
      %1709 = vmatprep.subr.bf16.mxu0 0
      %1710 = vmatpush1.bf16.msra.mxu0 0
      %1711 = vmatprep.subr.bf16.mxu0 0
      %1712 = vmatpush1.bf16.msra.mxu0 0
      %1713 = vmatprep.subr.bf16.mxu0 0
      %1714 = vmatpush1.bf16.msra.mxu0 0
      %1715 = vmatprep.subr.bf16.mxu0 0
      %1716 = vmatpush1.bf16.msra.mxu0 0
      %1717 = vmatprep.subr.bf16.mxu0 0
      %1718 = vmatpush1.bf16.msra.mxu0 0
      %1719 = vmatprep.subr.bf16.mxu0 0
      %1720 = vmatpush1.bf16.msra.mxu0 0
      %1721 = vmatprep.subr.bf16.mxu0 0
      %1722 = vmatpush1.bf16.msra.mxu0 0
      %1723 = vmatprep.subr.bf16.mxu0 0
      %1724 = vmatpush1.bf16.msra.mxu0 0
      %1725 = vmatprep.subr.bf16.mxu0 0
      %1726 = vmatpush1.bf16.msra.mxu0 0
      %1727 = vmatprep.mubr.bf16.mxu0 0
      %1728 = vmatmul.mubr.bf16.gmra.mrb[0].mxu0 %v1690
      %v1729 = vpop.f32.mrb[0].mxu0
      %v1730 = vadd.f32 0.0, %v1729
      %v1731 = vpop.f32.mrb[0].mxu0
      %v1732 = vpop.f32.mrb[0].mxu0
      %v1733 = vpop.f32.mrb[0].mxu0
      %1734 = vdwg.mxu0
      %1735 = vrot.lane.b32.xlu0 %v1041, 64
      %v1736 = vpop.permute.xlu0 %1735
      %v1738 = vsel %vm1048, %v1538, 0
      %v1741 = vsel %vm1547, %v1736, 0
      %1743 = vmatprep.subr.bf16.mxu0 0
      %1744 = vmatpush1.bf16.msra.mxu0 %v1741
      %1745 = vmatprep.subr.bf16.mxu0 0
      %1746 = vmatpush1.bf16.msra.mxu0 0
      %1747 = vmatprep.subr.bf16.mxu0 0
      %1748 = vmatpush1.bf16.msra.mxu0 0
      %1749 = vmatprep.subr.bf16.mxu0 0
      %1750 = vmatpush1.bf16.msra.mxu0 0
      %1751 = vmatprep.subr.bf16.mxu0 0
      %1752 = vmatpush1.bf16.msra.mxu0 0
      %1753 = vmatprep.subr.bf16.mxu0 0
      %1754 = vmatpush1.bf16.msra.mxu0 0
      %1755 = vmatprep.subr.bf16.mxu0 0
      %1756 = vmatpush1.bf16.msra.mxu0 0
      %1757 = vmatprep.subr.bf16.mxu0 0
      %1758 = vmatpush1.bf16.msra.mxu0 0
      %1759 = vmatprep.subr.bf16.mxu0 0
      %1760 = vmatpush1.bf16.msra.mxu0 0
      %1761 = vmatprep.subr.bf16.mxu0 0
      %1762 = vmatpush1.bf16.msra.mxu0 0
      %1763 = vmatprep.subr.bf16.mxu0 0
      %1764 = vmatpush1.bf16.msra.mxu0 0
      %1765 = vmatprep.subr.bf16.mxu0 0
      %1766 = vmatpush1.bf16.msra.mxu0 0
      %1767 = vmatprep.subr.bf16.mxu0 0
      %1768 = vmatpush1.bf16.msra.mxu0 0
      %1769 = vmatprep.subr.bf16.mxu0 0
      %1770 = vmatpush1.bf16.msra.mxu0 0
      %1771 = vmatprep.subr.bf16.mxu0 0
      %1772 = vmatpush1.bf16.msra.mxu0 0
      %1773 = vmatprep.subr.bf16.mxu0 0
      %1774 = vmatpush1.bf16.msra.mxu0 0
      %1775 = vmatprep.mubr.bf16.mxu0 0
      %1776 = vmatmul.mubr.bf16.gmra.mrb[0].mxu0 %v1738
      %v1777 = vpop.f32.mrb[0].mxu0
      %v1778 = vadd.f32 0.0, %v1777
      %v1779 = vpop.f32.mrb[0].mxu0
      %v1780 = vpop.f32.mrb[0].mxu0
      %v1781 = vpop.f32.mrb[0].mxu0
      %1782 = vdwg.mxu0
      %1783 = vrot.lane.b32.xlu0 %v1042, 64
      %v1784 = vpop.permute.xlu0 %1783
      %v1786 = vsel %vm1048, %v1539, 0
      %v1789 = vsel %vm1547, %v1784, 0
      %1791 = vmatprep.subr.bf16.mxu0 0
      %1792 = vmatpush1.bf16.msra.mxu0 %v1789
      %1793 = vmatprep.subr.bf16.mxu0 0
      %1794 = vmatpush1.bf16.msra.mxu0 0
      %1795 = vmatprep.subr.bf16.mxu0 0
      %1796 = vmatpush1.bf16.msra.mxu0 0
      %1797 = vmatprep.subr.bf16.mxu0 0
      %1798 = vmatpush1.bf16.msra.mxu0 0
      %1799 = vmatprep.subr.bf16.mxu0 0
      %1800 = vmatpush1.bf16.msra.mxu0 0
      %1801 = vmatprep.subr.bf16.mxu0 0
      %1802 = vmatpush1.bf16.msra.mxu0 0
      %1803 = vmatprep.subr.bf16.mxu0 0
      %1804 = vmatpush1.bf16.msra.mxu0 0
      %1805 = vmatprep.subr.bf16.mxu0 0
      %1806 = vmatpush1.bf16.msra.mxu0 0
      %1807 = vmatprep.subr.bf16.mxu0 0
      %1808 = vmatpush1.bf16.msra.mxu0 0
      %1809 = vmatprep.subr.bf16.mxu0 0
      %1810 = vmatpush1.bf16.msra.mxu0 0
      %1811 = vmatprep.subr.bf16.mxu0 0
      %1812 = vmatpush1.bf16.msra.mxu0 0
      %1813 = vmatprep.subr.bf16.mxu0 0
      %1814 = vmatpush1.bf16.msra.mxu0 0
      %1815 = vmatprep.subr.bf16.mxu0 0
      %1816 = vmatpush1.bf16.msra.mxu0 0
      %1817 = vmatprep.subr.bf16.mxu0 0
      %1818 = vmatpush1.bf16.msra.mxu0 0
      %1819 = vmatprep.subr.bf16.mxu0 0
      %1820 = vmatpush1.bf16.msra.mxu0 0
      %1821 = vmatprep.subr.bf16.mxu0 0
      %1822 = vmatpush1.bf16.msra.mxu0 0
      %1823 = vmatprep.mubr.bf16.mxu0 0
      %1824 = vmatmul.mubr.bf16.gmra.mrb[0].mxu0 %v1786
      %v1825 = vpop.f32.mrb[0].mxu0
      %v1826 = vadd.f32 0.0, %v1825
      %v1827 = vpop.f32.mrb[0].mxu0
      %v1828 = vpop.f32.mrb[0].mxu0
      %v1829 = vpop.f32.mrb[0].mxu0
      %1830 = vdwg.mxu0
      %1831 = vrot.lane.b32.xlu0 %v1043, 64
      %v1832 = vpop.permute.xlu0 %1831
      %v1834 = vsel %vm1048, %v1540, 0
      %v1837 = vsel %vm1547, %v1832, 0
      %1839 = vmatprep.subr.bf16.mxu0 0
      %1840 = vmatpush1.bf16.msra.mxu0 %v1837
      %1841 = vmatprep.subr.bf16.mxu0 0
      %1842 = vmatpush1.bf16.msra.mxu0 0
      %1843 = vmatprep.subr.bf16.mxu0 0
      %1844 = vmatpush1.bf16.msra.mxu0 0
      %1845 = vmatprep.subr.bf16.mxu0 0
      %1846 = vmatpush1.bf16.msra.mxu0 0
      %1847 = vmatprep.subr.bf16.mxu0 0
      %1848 = vmatpush1.bf16.msra.mxu0 0
      %1849 = vmatprep.subr.bf16.mxu0 0
      %1850 = vmatpush1.bf16.msra.mxu0 0
      %1851 = vmatprep.subr.bf16.mxu0 0
      %1852 = vmatpush1.bf16.msra.mxu0 0
      %1853 = vmatprep.subr.bf16.mxu0 0
      %1854 = vmatpush1.bf16.msra.mxu0 0
      %1855 = vmatprep.subr.bf16.mxu0 0
      %1856 = vmatpush1.bf16.msra.mxu0 0
      %1857 = vmatprep.subr.bf16.mxu0 0
      %1858 = vmatpush1.bf16.msra.mxu0 0
      %1859 = vmatprep.subr.bf16.mxu0 0
      %1860 = vmatpush1.bf16.msra.mxu0 0
      %1861 = vmatprep.subr.bf16.mxu0 0
      %1862 = vmatpush1.bf16.msra.mxu0 0
      %1863 = vmatprep.subr.bf16.mxu0 0
      %1864 = vmatpush1.bf16.msra.mxu0 0
      %1865 = vmatprep.subr.bf16.mxu0 0
      %1866 = vmatpush1.bf16.msra.mxu0 0
      %1867 = vmatprep.subr.bf16.mxu0 0
      %1868 = vmatpush1.bf16.msra.mxu0 0
      %1869 = vmatprep.subr.bf16.mxu0 0
      %1870 = vmatpush1.bf16.msra.mxu0 0
      %1871 = vmatprep.mubr.bf16.mxu0 0
      %1872 = vmatmul.mubr.bf16.gmra.mrb[0].mxu0 %v1834
      %v1873 = vpop.f32.mrb[0].mxu0
      %v1874 = vadd.f32 0.0, %v1873
      %v1875 = vpop.f32.mrb[0].mxu0
      %v1876 = vpop.f32.mrb[0].mxu0
      %v1877 = vpop.f32.mrb[0].mxu0
      %1878 = vdwg.mxu0
      %1879 = vrot.lane.b32.xlu0 %v1044, 64
      %v1880 = vpop.permute.xlu0 %1879
      %v1882 = vsel %vm1048, %v1541, 0
      %v1885 = vsel %vm1547, %v1880, 0
      %1887 = vmatprep.subr.bf16.mxu0 0
      %1888 = vmatpush1.bf16.msra.mxu0 %v1885
      %1889 = vmatprep.subr.bf16.mxu0 0
      %1890 = vmatpush1.bf16.msra.mxu0 0
      %1891 = vmatprep.subr.bf16.mxu0 0
      %1892 = vmatpush1.bf16.msra.mxu0 0
      %1893 = vmatprep.subr.bf16.mxu0 0
      %1894 = vmatpush1.bf16.msra.mxu0 0
      %1895 = vmatprep.subr.bf16.mxu0 0
      %1896 = vmatpush1.bf16.msra.mxu0 0
      %1897 = vmatprep.subr.bf16.mxu0 0
      %1898 = vmatpush1.bf16.msra.mxu0 0
      %1899 = vmatprep.subr.bf16.mxu0 0
      %1900 = vmatpush1.bf16.msra.mxu0 0
      %1901 = vmatprep.subr.bf16.mxu0 0
      %1902 = vmatpush1.bf16.msra.mxu0 0
      %1903 = vmatprep.subr.bf16.mxu0 0
      %1904 = vmatpush1.bf16.msra.mxu0 0
      %1905 = vmatprep.subr.bf16.mxu0 0
      %1906 = vmatpush1.bf16.msra.mxu0 0
      %1907 = vmatprep.subr.bf16.mxu0 0
      %1908 = vmatpush1.bf16.msra.mxu0 0
      %1909 = vmatprep.subr.bf16.mxu0 0
      %1910 = vmatpush1.bf16.msra.mxu0 0
      %1911 = vmatprep.subr.bf16.mxu0 0
      %1912 = vmatpush1.bf16.msra.mxu0 0
      %1913 = vmatprep.subr.bf16.mxu0 0
      %1914 = vmatpush1.bf16.msra.mxu0 0
      %1915 = vmatprep.subr.bf16.mxu0 0
      %1916 = vmatpush1.bf16.msra.mxu0 0
      %1917 = vmatprep.subr.bf16.mxu0 0
      %1918 = vmatpush1.bf16.msra.mxu0 0
      %1919 = vmatprep.mubr.bf16.mxu0 0
      %1920 = vmatmul.mubr.bf16.gmra.mrb[0].mxu0 %v1882
      %v1921 = vpop.f32.mrb[0].mxu0
      %v1922 = vadd.f32 0.0, %v1921
      %v1923 = vpop.f32.mrb[0].mxu0
      %v1924 = vpop.f32.mrb[0].mxu0
      %v1925 = vpop.f32.mrb[0].mxu0
      %1926 = vdwg.mxu0
      %1929 = vrot.lane.b32.xlu0 %v1682, 8
      %v1930 = vpop.permute.xlu0 %1929
      %1931 = vrot.lane.b32.xlu0 %v1730, 8
      %v1932 = vpop.permute.xlu0 %1931
      %1937 = vrot.lane.b32.xlu0 %v1778, 16
      %v1938 = vpop.permute.xlu0 %1937
      %1939 = vrot.lane.b32.xlu0 %v1826, 16
      %v1940 = vpop.permute.xlu0 %1939
      %1945 = vrot.lane.b32.xlu0 %v1874, 24
      %v1946 = vpop.permute.xlu0 %1945
      %1947 = vrot.lane.b32.xlu0 %v1922, 24
      %v1948 = vpop.permute.xlu0 %1947
      %v1951 = vsel %vm1048, %v1586, %v1930
      %v1952 = vsel %vm1048, %v1634, %v1932
      %vm1953 = vcmask 130048
      %v1954 = vsel %vm1953, %v1951, %v1938
      %v1955 = vsel %vm1953, %v1952, %v1940
      %vm1956 = vcmask 195584
      %v1957 = vsel %vm1956, %v1954, %v1946
      %v1958 = vsel %vm1956, %v1955, %v1948
      %v1959 = vpack.c.bf16 %v1958, %v1957
      %v1960 = vld [vmem:[%s859] sm:$0xf]
      %v1961 = vld [vmem:[%s859 + $0x4] sm:$0xf]
      %v1962 = vld [vmem:[%s859 + $0x8] sm:$0xf]
      %v1963 = vld [vmem:[%s859 + $0xc] sm:$0xf]
      %v1964 = vld [vmem:[%s862] sm:$0x1]
      %v1966 = vlaneseq
      %v1967 = vshrl.u32 %v1966, 7
      %v1968 = vsub.s32 0, %v1967
      %v1969 = vrot.slane %v1964, %v1968
      %v1975 = vunpack.c.l.b16 %v1960
      %v1976 = vunpack.c.l.b16 %v1961
      %v1977 = vunpack.c.l.b16 %v1962
      %v1978 = vunpack.c.l.b16 %v1963
      %v1979 = vpack.c.b16 %v1976, %v1975
      %v1980 = vpack.c.b16 %v1978, %v1977
      %v1984 = vsel %vm905, %v1959, 0
      %1986 = vmatprep.subr.bf16.mxu0 0
      %1987 = vmatpush1.bf16.msra.mxu0 %v1979
      %1988 = vmatprep.subr.bf16.mxu0 0
      %1989 = vmatpush1.bf16.msra.mxu0 %v1980
      %1990 = vmatprep.subr.bf16.mxu0 0
      %1991 = vmatpush1.bf16.msra.mxu0 0
      %1992 = vmatprep.subr.bf16.mxu0 0
      %1993 = vmatpush1.bf16.msra.mxu0 0
      %1994 = vmatprep.subr.bf16.mxu0 0
      %1995 = vmatpush1.bf16.msra.mxu0 0
      %1996 = vmatprep.subr.bf16.mxu0 0
      %1997 = vmatpush1.bf16.msra.mxu0 0
      %1998 = vmatprep.subr.bf16.mxu0 0
      %1999 = vmatpush1.bf16.msra.mxu0 0
      %2000 = vmatprep.subr.bf16.mxu0 0
      %2001 = vmatpush1.bf16.msra.mxu0 0
      %2002 = vmatprep.subr.bf16.mxu0 0
      %2003 = vmatpush1.bf16.msra.mxu0 0
      %2004 = vmatprep.subr.bf16.mxu0 0
      %2005 = vmatpush1.bf16.msra.mxu0 0
      %2006 = vmatprep.subr.bf16.mxu0 0
      %2007 = vmatpush1.bf16.msra.mxu0 0
      %2008 = vmatprep.subr.bf16.mxu0 0
      %2009 = vmatpush1.bf16.msra.mxu0 0
      %2010 = vmatprep.subr.bf16.mxu0 0
      %2011 = vmatpush1.bf16.msra.mxu0 0
      %2012 = vmatprep.subr.bf16.mxu0 0
      %2013 = vmatpush1.bf16.msra.mxu0 0
      %2014 = vmatprep.subr.bf16.mxu0 0
      %2015 = vmatpush1.bf16.msra.mxu0 0
      %2016 = vmatprep.subr.bf16.mxu0 0
      %2017 = vmatpush1.bf16.msra.mxu0 0
      %2018 = vmatprep.mubr.bf16.mxu0 0
      %2019 = vmatmul.mubr.bf16.gmra.mrb[0].mxu0 %v1984
      %v2020 = vpop.f32.mrb[0].mxu0
      %v2021 = vadd.f32 %v1969, %v2020
      %v2022 = vpop.f32.mrb[0].mxu0
      %v2023 = vpop.f32.mrb[0].mxu0
      %v2024 = vadd.f32 %v1969, %v2023
      %v2025 = vpop.f32.mrb[0].mxu0
      %2026 = vdwg.mxu0
      %v2027 = vadd.f32 %v901, %v2021
      %v2028 = vadd.f32 %v902, %v2024
      %v2029 = vld [vmem:[%s865] sm:$0x1]
      %v2030 = vld [vmem:[%s868] sm:$0x1]
      %v2031 = vsel %vm905, %v2027, 0.0
      %2032 = vadd.xlane.f32.xlu0 %v2031
      %v2033 = vpop.xlane.xlu0 %2032
      %v2034 = vsel %vm905, %v2028, 0.0
      %2035 = vadd.xlane.f32.xlu0 %v2034
      %v2036 = vpop.xlane.xlu0 %2035
      %v2037 = vmul.f32 %v2033, %v912
      %v2038 = vmul.f32 %v2036, %v912
      %v2039 = vsub.f32 %v2027, %v2037
      %v2040 = vsub.f32 %v2028, %v2038
      %v2041 = vmul.f32 %v2039, %v2039
      %v2042 = vmul.f32 %v2040, %v2040
      %v2043 = vsel %vm905, %v2041, 0.0
      %2044 = vadd.xlane.f32.xlu0 %v2043
      %v2045 = vpop.xlane.xlu0 %2044
      %v2046 = vsel %vm905, %v2042, 0.0
      %2047 = vadd.xlane.f32.xlu0 %v2046
      %v2048 = vpop.xlane.xlu0 %2047
      %v2049 = vmul.f32 %v2045, %v912
      %v2050 = vmul.f32 %v2048, %v912
      %v2051 = vadd.f32 %v2049, 1e-05
      %v2052 = vadd.f32 %v2050, 1e-05
      %v2053 = vrsqrt.pop %v2051
      %v2054 = vrsqrt.pop %v2052
      %v2055 = vmul.f32 %v2039, %v2053
      %v2056 = vmul.f32 %v2040, %v2054
      %v2058 = vlaneseq
      %v2059 = vshrl.u32 %v2058, 7
      %v2060 = vsub.s32 0, %v2059
      %v2061 = vrot.slane %v2029, %v2060
      %v2063 = vmul.f32 %v2055, %v2061
      %v2064 = vmul.f32 %v2056, %v2061
      %v2066 = vlaneseq
      %v2067 = vshrl.u32 %v2066, 7
      %v2068 = vsub.s32 0, %v2067
      %v2069 = vrot.slane %v2030, %v2068
      %v2071 = vadd.f32 %v2063, %v2069
      %v2072 = vadd.f32 %v2064, %v2069
      %v2073 = vpack.c.bf16 %v2072, %v2071
      %v2074 = vld [vmem:[%s873] sm:$0xf]
      %v2075 = vld [vmem:[%s873 + $0x4] sm:$0xf]
      %v2076 = vld [vmem:[%s873 + $0x8] sm:$0xf]
      %v2077 = vld [vmem:[%s873 + $0xc] sm:$0xf]
      %v2078 = vld [vmem:[%s876] sm:$0x1]
      %v2080 = vlaneseq
      %v2081 = vshrl.u32 %v2080, 7
      %v2082 = vsub.s32 0, %v2081
      %v2083 = vrot.slane %v2078, %v2082
      %v2089 = vunpack.c.l.b16 %v2074
      %v2090 = vunpack.c.l.b16 %v2075
      %v2091 = vunpack.c.l.b16 %v2076
      %v2092 = vunpack.c.l.b16 %v2077
      %v2093 = vpack.c.b16 %v2090, %v2089
      %v2094 = vpack.c.b16 %v2092, %v2091
      %v2098 = vsel %vm905, %v2073, 0
      %2100 = vmatprep.subr.bf16.mxu0 0
      %2101 = vmatpush1.bf16.msra.mxu0 %v2093
      %2102 = vmatprep.subr.bf16.mxu0 0
      %2103 = vmatpush1.bf16.msra.mxu0 %v2094
      %2104 = vmatprep.subr.bf16.mxu0 0
      %2105 = vmatpush1.bf16.msra.mxu0 0
      %2106 = vmatprep.subr.bf16.mxu0 0
      %2107 = vmatpush1.bf16.msra.mxu0 0
      %2108 = vmatprep.subr.bf16.mxu0 0
      %2109 = vmatpush1.bf16.msra.mxu0 0
      %2110 = vmatprep.subr.bf16.mxu0 0
      %2111 = vmatpush1.bf16.msra.mxu0 0
      %2112 = vmatprep.subr.bf16.mxu0 0
      %2113 = vmatpush1.bf16.msra.mxu0 0
      %2114 = vmatprep.subr.bf16.mxu0 0
      %2115 = vmatpush1.bf16.msra.mxu0 0
      %2116 = vmatprep.subr.bf16.mxu0 0
      %2117 = vmatpush1.bf16.msra.mxu0 0
      %2118 = vmatprep.subr.bf16.mxu0 0
      %2119 = vmatpush1.bf16.msra.mxu0 0
      %2120 = vmatprep.subr.bf16.mxu0 0
      %2121 = vmatpush1.bf16.msra.mxu0 0
      %2122 = vmatprep.subr.bf16.mxu0 0
      %2123 = vmatpush1.bf16.msra.mxu0 0
      %2124 = vmatprep.subr.bf16.mxu0 0
      %2125 = vmatpush1.bf16.msra.mxu0 0
      %2126 = vmatprep.subr.bf16.mxu0 0
      %2127 = vmatpush1.bf16.msra.mxu0 0
      %2128 = vmatprep.subr.bf16.mxu0 0
      %2129 = vmatpush1.bf16.msra.mxu0 0
      %2130 = vmatprep.subr.bf16.mxu0 0
      %2131 = vmatpush1.bf16.msra.mxu0 0
      %2132 = vmatprep.mubr.bf16.mxu0 0
      %2133 = vmatmul.mubr.bf16.gmra.mrb[0].mxu0 %v2098
      %v2134 = vpop.f32.mrb[0].mxu0
      %v2135 = vadd.f32 %v2083, %v2134
      %v2136 = vpop.f32.mrb[0].mxu0
      %v2137 = vpop.f32.mrb[0].mxu0
      %v2138 = vadd.f32 %v2083, %v2137
      %v2139 = vpop.f32.mrb[0].mxu0
      %2140 = vdwg.mxu0
      %v2141 = vmul.f32 %v2135, 0.5
      %v2142 = vmul.f32 %v2138, 0.5
      %v2143 = vmul.f32 %v2135, 0.70710677
      %v2144 = vmul.f32 %v2138, 0.70710677
      %v2145 = verf.f32.pop %v2143
      %v2146 = verf.f32.pop %v2144
      %v2147 = vadd.f32 %v2145, 1.0
      %v2148 = vadd.f32 %v2146, 1.0
      %v2149 = vmul.f32 %v2141, %v2147
      %v2150 = vmul.f32 %v2142, %v2148
      %v2151 = vpack.c.bf16 %v2150, %v2149
      %v2152 = vld [vmem:[%s881] sm:$0xf]
      %v2153 = vld [vmem:[%s881 + $0x4] sm:$0xf]
      %v2154 = vld [vmem:[%s881 + $0x8] sm:$0xf]
      %v2155 = vld [vmem:[%s881 + $0xc] sm:$0xf]
      %v2156 = vld [vmem:[%s881 + $0x10] sm:$0xf]
      %v2157 = vld [vmem:[%s881 + $0x14] sm:$0xf]
      %v2158 = vld [vmem:[%s881 + $0x18] sm:$0xf]
      %v2159 = vld [vmem:[%s881 + $0x1c] sm:$0xf]
      %v2160 = vld [vmem:[%s881 + $0x20] sm:$0xf]
      %v2161 = vld [vmem:[%s881 + $0x24] sm:$0xf]
      %v2162 = vld [vmem:[%s881 + $0x28] sm:$0xf]
      %v2163 = vld [vmem:[%s881 + $0x2c] sm:$0xf]
      %v2164 = vld [vmem:[%s881 + $0x30] sm:$0xf]
      %v2165 = vld [vmem:[%s881 + $0x34] sm:$0xf]
      %v2166 = vld [vmem:[%s881 + $0x38] sm:$0xf]
      %v2167 = vld [vmem:[%s881 + $0x3c] sm:$0xf]
      %v2168 = vld [vmem:[%s884] sm:$0x1]
      %v2170 = vlaneseq
      %v2171 = vshrl.u32 %v2170, 7
      %v2172 = vsub.s32 0, %v2171
      %v2173 = vrot.slane %v2168, %v2172
      %v2191 = vunpack.c.l.b16 %v2152
      %v2192 = vunpack.c.l.b16 %v2153
      %v2193 = vunpack.c.l.b16 %v2154
      %v2194 = vunpack.c.l.b16 %v2155
      %v2195 = vunpack.c.l.b16 %v2156
      %v2196 = vunpack.c.l.b16 %v2157
      %v2197 = vunpack.c.l.b16 %v2158
      %v2198 = vunpack.c.l.b16 %v2159
      %v2199 = vunpack.c.l.b16 %v2160
      %v2200 = vunpack.c.l.b16 %v2161
      %v2201 = vunpack.c.l.b16 %v2162
      %v2202 = vunpack.c.l.b16 %v2163
      %v2203 = vunpack.c.l.b16 %v2164
      %v2204 = vunpack.c.l.b16 %v2165
      %v2205 = vunpack.c.l.b16 %v2166
      %v2206 = vunpack.c.l.b16 %v2167
      %v2207 = vpack.c.b16 %v2192, %v2191
      %v2208 = vpack.c.b16 %v2194, %v2193
      %v2209 = vpack.c.b16 %v2196, %v2195
      %v2210 = vpack.c.b16 %v2198, %v2197
      %v2211 = vpack.c.b16 %v2200, %v2199
      %v2212 = vpack.c.b16 %v2202, %v2201
      %v2213 = vpack.c.b16 %v2204, %v2203
      %v2214 = vpack.c.b16 %v2206, %v2205
      %2223 = vmatprep.subr.bf16.mxu0 0
      %2224 = vmatpush1.bf16.msra.mxu0 %v2207
      %2225 = vmatprep.subr.bf16.mxu0 0
      %2226 = vmatpush1.bf16.msra.mxu0 %v2208
      %2227 = vmatprep.subr.bf16.mxu0 0
      %2228 = vmatpush1.bf16.msra.mxu0 %v2209
      %2229 = vmatprep.subr.bf16.mxu0 0
      %2230 = vmatpush1.bf16.msra.mxu0 %v2210
      %2231 = vmatprep.subr.bf16.mxu0 0
      %2232 = vmatpush1.bf16.msra.mxu0 %v2211
      %2233 = vmatprep.subr.bf16.mxu0 0
      %2234 = vmatpush1.bf16.msra.mxu0 %v2212
      %2235 = vmatprep.subr.bf16.mxu0 0
      %2236 = vmatpush1.bf16.msra.mxu0 %v2213
      %2237 = vmatprep.subr.bf16.mxu0 0
      %2238 = vmatpush1.bf16.msra.mxu0 %v2214
      %2239 = vmatprep.subr.bf16.mxu0 0
      %2240 = vmatpush1.bf16.msra.mxu0 0
      %2241 = vmatprep.subr.bf16.mxu0 0
      %2242 = vmatpush1.bf16.msra.mxu0 0
      %2243 = vmatprep.subr.bf16.mxu0 0
      %2244 = vmatpush1.bf16.msra.mxu0 0
      %2245 = vmatprep.subr.bf16.mxu0 0
      %2246 = vmatpush1.bf16.msra.mxu0 0
      %2247 = vmatprep.subr.bf16.mxu0 0
      %2248 = vmatpush1.bf16.msra.mxu0 0
      %2249 = vmatprep.subr.bf16.mxu0 0
      %2250 = vmatpush1.bf16.msra.mxu0 0
      %2251 = vmatprep.subr.bf16.mxu0 0
      %2252 = vmatpush1.bf16.msra.mxu0 0
      %2253 = vmatprep.subr.bf16.mxu0 0
      %2254 = vmatpush1.bf16.msra.mxu0 0
      %2255 = vmatprep.mubr.bf16.mxu0 0
      %2256 = vmatmul.mubr.bf16.gmra.mrb[0].mxu0 %v2151
      %v2257 = vpop.f32.mrb[0].mxu0
      %v2258 = vadd.f32 %v2173, %v2257
      %v2259 = vpop.f32.mrb[0].mxu0
      %v2260 = vpop.f32.mrb[0].mxu0
      %v2261 = vadd.f32 %v2173, %v2260
      %v2262 = vpop.f32.mrb[0].mxu0
      %2263 = vdwg.mxu0
      %v2264 = vadd.f32 %v2027, %v2258
      %v2265 = vadd.f32 %v2028, %v2261
      %2266 = vst.msk [vmem:[#allocation2] sm:$0xff] %vm905, %v2264
      %2267 = vst.msk [vmem:[#allocation2 + $0x8] sm:$0xff] %vm905, %v2265
      %p2268 = scmp.eq.s32.totalorder %s40, 1
      // Predicated region
      $region113: #{forward.1} parent=107 // pred_check
        %p2269 = pneg %p2268
      $region114: #{forward.1} parent=107 // pred_check_branch
        %2271 = sbr.rel (%p2269) target = $region116
      $region115: #{forward.1} parent=107 // pred_region
        %v2272 = vld [vmem:[%s14] sm:$0x1]
        %v2273 = vld [vmem:[%s15] sm:$0x1]
        %v2274 = vsel %vm905, %v2264, 0.0
        %2275 = vadd.xlane.f32.xlu0 %v2274
        %v2276 = vpop.xlane.xlu0 %2275
        %v2277 = vsel %vm905, %v2265, 0.0
        %2278 = vadd.xlane.f32.xlu0 %v2277
        %v2279 = vpop.xlane.xlu0 %2278
        %v2280 = vmul.f32 %v2276, %v912
        %v2281 = vmul.f32 %v2279, %v912
        %v2282 = vsub.f32 %v2264, %v2280
        %v2283 = vsub.f32 %v2265, %v2281
        %v2284 = vmul.f32 %v2282, %v2282
        %v2285 = vmul.f32 %v2283, %v2283
        %v2286 = vsel %vm905, %v2284, 0.0
        %2287 = vadd.xlane.f32.xlu0 %v2286
        %v2288 = vpop.xlane.xlu0 %2287
        %v2289 = vsel %vm905, %v2285, 0.0
        %2290 = vadd.xlane.f32.xlu0 %v2289
        %v2291 = vpop.xlane.xlu0 %2290
        %v2292 = vmul.f32 %v2288, %v912
        %v2293 = vmul.f32 %v2291, %v912
        %v2294 = vadd.f32 %v2292, 1e-05
        %v2295 = vadd.f32 %v2293, 1e-05
        %v2296 = vrsqrt.pop %v2294
        %v2297 = vrsqrt.pop %v2295
        %v2298 = vmul.f32 %v2282, %v2296
        %v2299 = vmul.f32 %v2283, %v2297
        %v2301 = vlaneseq
        %v2302 = vshrl.u32 %v2301, 7
        %v2303 = vsub.s32 0, %v2302
        %v2304 = vrot.slane %v2272, %v2303
        %v2306 = vmul.f32 %v2298, %v2304
        %v2307 = vmul.f32 %v2299, %v2304
        %v2309 = vlaneseq
        %v2310 = vshrl.u32 %v2309, 7
        %v2311 = vsub.s32 0, %v2310
        %v2312 = vrot.slane %v2273, %v2311
        %v2314 = vadd.f32 %v2306, %v2312
        %v2315 = vadd.f32 %v2307, %v2312
        %v2316 = vpack.c.bf16 %v2315, %v2314
        %v2317 = vld [vmem:[%s16] sm:$0xf]
        %v2318 = vld [vmem:[%s16 + $0x4] sm:$0xf]
        %v2319 = vld [vmem:[%s16 + $0x8] sm:$0xf]
        %v2320 = vld [vmem:[%s16 + $0xc] sm:$0xf]
        %v2321 = vld [vmem:[%s17] sm:$0x1]
        %v2323 = vlaneseq
        %v2324 = vshrl.u32 %v2323, 7
        %v2325 = vsub.s32 0, %v2324
        %v2326 = vrot.slane %v2321, %v2325
        %v2332 = vunpack.c.l.b16 %v2317
        %v2333 = vunpack.c.l.b16 %v2318
        %v2334 = vunpack.c.l.b16 %v2319
        %v2335 = vunpack.c.l.b16 %v2320
        %v2336 = vpack.c.b16 %v2333, %v2332
        %v2337 = vpack.c.b16 %v2335, %v2334
        %v2341 = vsel %vm905, %v2316, 0
        %2343 = vmatprep.subr.bf16.mxu0 0
        %2344 = vmatpush1.bf16.msra.mxu0 %v2336
        %2345 = vmatprep.subr.bf16.mxu0 0
        %2346 = vmatpush1.bf16.msra.mxu0 %v2337
        %2347 = vmatprep.subr.bf16.mxu0 0
        %2348 = vmatpush1.bf16.msra.mxu0 0
        %2349 = vmatprep.subr.bf16.mxu0 0
        %2350 = vmatpush1.bf16.msra.mxu0 0
        %2351 = vmatprep.subr.bf16.mxu0 0
        %2352 = vmatpush1.bf16.msra.mxu0 0
        %2353 = vmatprep.subr.bf16.mxu0 0
        %2354 = vmatpush1.bf16.msra.mxu0 0
        %2355 = vmatprep.subr.bf16.mxu0 0
        %2356 = vmatpush1.bf16.msra.mxu0 0
        %2357 = vmatprep.subr.bf16.mxu0 0
        %2358 = vmatpush1.bf16.msra.mxu0 0
        %2359 = vmatprep.subr.bf16.mxu0 0
        %2360 = vmatpush1.bf16.msra.mxu0 0
        %2361 = vmatprep.subr.bf16.mxu0 0
        %2362 = vmatpush1.bf16.msra.mxu0 0
        %2363 = vmatprep.subr.bf16.mxu0 0
        %2364 = vmatpush1.bf16.msra.mxu0 0
        %2365 = vmatprep.subr.bf16.mxu0 0
        %2366 = vmatpush1.bf16.msra.mxu0 0
        %2367 = vmatprep.subr.bf16.mxu0 0
        %2368 = vmatpush1.bf16.msra.mxu0 0
        %2369 = vmatprep.subr.bf16.mxu0 0
        %2370 = vmatpush1.bf16.msra.mxu0 0
        %2371 = vmatprep.subr.bf16.mxu0 0
        %2372 = vmatpush1.bf16.msra.mxu0 0
        %2373 = vmatprep.subr.bf16.mxu0 0
        %2374 = vmatpush1.bf16.msra.mxu0 0
        %2375 = vmatprep.mubr.bf16.mxu0 0
        %2376 = vmatmul.mubr.bf16.gmra.mrb[0].mxu0 %v2341
        %v2377 = vpop.f32.mrb[0].mxu0
        %v2378 = vadd.f32 %v2326, %v2377
        %v2379 = vpop.f32.mrb[0].mxu0
        %v2380 = vpop.f32.mrb[0].mxu0
        %v2381 = vadd.f32 %v2326, %v2380
        %v2382 = vpop.f32.mrb[0].mxu0
        %2383 = vdwg.mxu0
        %v2384 = vmul.f32 %v2378, 0.5
        %v2385 = vmul.f32 %v2381, 0.5
        %v2386 = vmul.f32 %v2378, 0.70710677
        %v2387 = vmul.f32 %v2381, 0.70710677
        %v2388 = verf.f32.pop %v2386
        %v2389 = verf.f32.pop %v2387
        %v2390 = vadd.f32 %v2388, 1.0
        %v2391 = vadd.f32 %v2389, 1.0
        %v2392 = vmul.f32 %v2384, %v2390
        %v2393 = vmul.f32 %v2385, %v2391
        %v2394 = vld [vmem:[%s18] sm:$0x1]
        %v2395 = vld [vmem:[%s19] sm:$0x1]
        %v2396 = vsel %vm1953, %v2392, 0.0
        %2397 = vadd.xlane.f32.xlu0 %v2396
        %v2398 = vpop.xlane.xlu0 %2397
        %v2399 = vsel %vm1953, %v2393, 0.0
        %2400 = vadd.xlane.f32.xlu0 %v2399
        %v2401 = vpop.xlane.xlu0 %2400
        %v2402 = vrcp.pop 16.0
        %v2403 = vmul.f32 %v2398, %v2402
        %v2404 = vmul.f32 %v2401, %v2402
        %v2405 = vsub.f32 %v2392, %v2403
        %v2406 = vsub.f32 %v2393, %v2404
        %v2407 = vmul.f32 %v2405, %v2405
        %v2408 = vmul.f32 %v2406, %v2406
        %v2409 = vsel %vm1953, %v2407, 0.0
        %2410 = vadd.xlane.f32.xlu0 %v2409
        %v2411 = vpop.xlane.xlu0 %2410
        %v2412 = vsel %vm1953, %v2408, 0.0
        %2413 = vadd.xlane.f32.xlu0 %v2412
        %v2414 = vpop.xlane.xlu0 %2413
        %v2415 = vmul.f32 %v2411, %v2402
        %v2416 = vmul.f32 %v2414, %v2402
        %v2417 = vadd.f32 %v2415, 1e-05
        %v2418 = vadd.f32 %v2416, 1e-05
        %v2419 = vrsqrt.pop %v2417
        %v2420 = vrsqrt.pop %v2418
        %v2421 = vmul.f32 %v2405, %v2419
        %v2422 = vmul.f32 %v2406, %v2420
        %v2424 = vlaneseq
        %v2425 = vshrl.u32 %v2424, 7
        %v2426 = vsub.s32 0, %v2425
        %v2427 = vrot.slane %v2394, %v2426
        %v2429 = vmul.f32 %v2421, %v2427
        %v2430 = vmul.f32 %v2422, %v2427
        %v2432 = vlaneseq
        %v2433 = vshrl.u32 %v2432, 7
        %v2434 = vsub.s32 0, %v2433
        %v2435 = vrot.slane %v2395, %v2434
        %v2437 = vadd.f32 %v2429, %v2435
        %v2438 = vadd.f32 %v2430, %v2435
        %v2439 = vpack.c.bf16 %v2438, %v2437
        %v2440 = vld [vmem:[%s20] sm:$0x1]
        %v2441 = vld [vmem:[#allocation3] sm:$0x1]
        %2443 = vset.pattern.permute.xlu0 0
        %2444 = vperm.xlu0 %2443, %v2441
        %v2445 = vpop.permute.xlu0 %2444
        %v2447 = vlaneseq
        %v2448 = vshrl.u32 %v2447, 7
        %v2449 = vsub.s32 0, %v2448
        %v2450 = vrot.slane %v2445, %v2449
        %v2452 = vsel %vm1953, %v2440, 0
        %v2455 = vsel %vm1953, %v2439, 0
        %2457 = vmatprep.subr.bf16.mxu0 0
        %2458 = vmatpush1.bf16.xpose.msra.mxu0 %v2455
        %2459 = vmatprep.subr.bf16.mxu0 0
        %2460 = vmatpush1.bf16.xpose.msra.mxu0 0
        %2461 = vmatprep.subr.bf16.mxu0 0
        %2462 = vmatpush1.bf16.xpose.msra.mxu0 0
        %2463 = vmatprep.subr.bf16.mxu0 0
        %2464 = vmatpush1.bf16.xpose.msra.mxu0 0
        %2465 = vmatprep.subr.bf16.mxu0 0
        %2466 = vmatpush1.bf16.xpose.msra.mxu0 0
        %2467 = vmatprep.subr.bf16.mxu0 0
        %2468 = vmatpush1.bf16.xpose.msra.mxu0 0
        %2469 = vmatprep.subr.bf16.mxu0 0
        %2470 = vmatpush1.bf16.xpose.msra.mxu0 0
        %2471 = vmatprep.subr.bf16.mxu0 0
        %2472 = vmatpush1.bf16.xpose.msra.mxu0 0
        %2473 = vmatprep.subr.bf16.mxu0 0
        %2474 = vmatpush1.bf16.xpose.msra.mxu0 0
        %2475 = vmatprep.subr.bf16.mxu0 0
        %2476 = vmatpush1.bf16.xpose.msra.mxu0 0
        %2477 = vmatprep.subr.bf16.mxu0 0
        %2478 = vmatpush1.bf16.xpose.msra.mxu0 0
        %2479 = vmatprep.subr.bf16.mxu0 0
        %2480 = vmatpush1.bf16.xpose.msra.mxu0 0
        %2481 = vmatprep.subr.bf16.mxu0 0
        %2482 = vmatpush1.bf16.xpose.msra.mxu0 0
        %2483 = vmatprep.subr.bf16.mxu0 0
        %2484 = vmatpush1.bf16.xpose.msra.mxu0 0
        %2485 = vmatprep.subr.bf16.mxu0 0
        %2486 = vmatpush1.bf16.xpose.msra.mxu0 0
        %2487 = vmatprep.subr.bf16.mxu0 0
        %2488 = vmatpush1.bf16.xpose.msra.mxu0 0
        %2489 = vmatprep.mubr.bf16.mxu0 0
        %2490 = vmatmul.mubr.bf16.gmra.mrb[0].mxu0 %v2452
        %v2491 = vpop.f32.mrb[0].mxu0
        %v2492 = vadd.f32 %v2450, %v2491
        %v2493 = vpop.f32.mrb[0].mxu0
        %v2494 = vpop.f32.mrb[0].mxu0
        %v2495 = vpop.f32.mrb[0].mxu0
        %2496 = vdwg.mxu0
        %vm2497 = vcmask 122880
        %2498 = vst.msk [vmem:[%s887] sm:$0x1] %vm2497, %v2492
      $region116: #{forward.1} parent=107 // pred_fallthru
        _
      %p2499 = scmp.lt.s32.totalorder %s39, 1
      %s2500 = scalar_select %p2499, %s39, 1
      %s2501 = scalar_lea.vmem %s22, %s2500
      // Predicated region
      $region117: #{forward.1} parent=107 // pred_check
        %p2502 = pneg %p592
      $region118: #{forward.1} parent=107 // pred_check_branch
        %2504 = sbr.rel (%p2502) target = $region120
      $region119: #{forward.1} parent=107 // pred_region
        _
      $region120: #{forward.1} parent=107 // pred_fallthru
        _
    $region108: #{forward.1} parent=5 // pred_fallthru
      _
    %p2505 = scmp.le.s32.totalorder 2, %s30
    // Predicated region
    $region121: #{forward.1} parent=5 // pred_check
      %p2506 = pneg %p2505
    $region122: #{forward.1} parent=5 // pred_check_branch
      %2508 = sbr.rel (%p2506) target = $region124
    $region123: #{forward.1} parent=5 // pred_region
      %s2509 = ssub.s32 %s30, 2
      // Predicated region
      $region125: #{forward.1} parent=123 // pred_check
        %p2510 = pneg %p598
      $region126: #{forward.1} parent=123 // pred_check_branch
        %2512 = sbr.rel (%p2510) target = $region128
      $region127: #{forward.1} parent=123 // pred_region
        %p2513 = scmp.lt.s32.totalorder %s41, 1
        %s2514 = scalar_select %p2513, %s41, 1
        %s2515 = scalar_lea.vmem %s22, %s2514
      $region128: #{forward.1} parent=123 // pred_fallthru
        _
    $region124: #{forward.1} parent=5 // pred_fallthru
      _
  $region6: #{forward.1} parent=0 // loop_footer
    %s34 = sadd.s32 1, %s30
  $region7: #{forward.1} parent=0 // loop_footer_branch
    %29 = sbr.rel target = $region3
  $region8: #{forward.1} parent=0 // loop_exit
    _

</llo_original>
